<compile_context>
chip_gen: v5e
topology: v5e:2x2
jax: 0.10.0
libtpu: 0.0.40
codegen_flags: <defaults>
</compile_context>

<pallas_src>
import functools
import math

import jax
import jax.numpy as jnp
from jax.experimental import pallas as pl
from jax.experimental.pallas import tpu as pltpu


_VMEM_LIMIT = 48 * 1024 * 1024      # scoped-VMEM ceiling, safe on v7x (64 MiB/TC)
_TM_CAP = 512                       # MXU row-tile cap
_TN_CAP = 1024                      # output-lane tile cap
_TK_CAP = 1024                      # contraction tile cap
_ROW_CAP = 1024                     # row tile cap for BN / quat kernels
_ALIGN = 256                        # K/N (and node-row) padding alignment


def _round_up(x, m):
    return ((x + m - 1) // m) * m


def _pick_tile(dim, cap, align):
    """Largest t <= cap with t % align == 0 and dim % t == 0 (dim % align == 0)."""
    best = align
    t = align
    top = min(dim, cap)
    while t <= top:
        if dim % t == 0:
            best = t
        t += align
    return best


def _pad2d(x, rows, cols):
    pr, pc = rows - x.shape[0], cols - x.shape[1]
    if pr == 0 and pc == 0:
        return x
    return jnp.pad(x, ((0, pr), (0, pc)))


def _apply_act(x, act):
    if act == "sigmoid":
        return jax.nn.sigmoid(x)
    if act == "tanh":
        return jnp.tanh(x)
    return x


def _mm_contract(a, b, transpose_b):
    if transpose_b:
        # A (tm, tk) x B (tn, tk): contract last dims -> (tm, tn); B^T is never
        # materialized in HBM.
        return jax.lax.dot_general(a, b, (((1,), (1,)), ((), ())),
                                   preferred_element_type=jnp.float32)
    return jnp.dot(a, b, preferred_element_type=jnp.float32)


# ---------------------------------------------------------------------------
# Tiled matmul kernels (bf16 operands, f32 accumulation, fused activation)
# ---------------------------------------------------------------------------
def _mm_kernel_direct(a_ref, b_ref, o_ref, *, act, transpose_b):
    # Single K step: no accumulator at all.
    r = _mm_contract(a_ref[...], b_ref[...], transpose_b)
    o_ref[...] = _apply_act(r, act).astype(o_ref.dtype)


def _mm_kernel_out_acc(a_ref, b_ref, o_ref, *, act, transpose_b):
    # Multi-K with f32 output: accumulate directly into the resident output.
    @pl.when(pl.program_id(2) == 0)
    def _():
        o_ref[...] = jnp.zeros_like(o_ref)

    o_ref[...] += _mm_contract(a_ref[...], b_ref[...], transpose_b)

    if act != "none":
        @pl.when(pl.program_id(2) == pl.num_programs(2) - 1)
        def _():
            o_ref[...] = _apply_act(o_ref[...], act)


def _mm_kernel_scratch_acc(a_ref, b_ref, o_ref, acc_ref, *, act, transpose_b):
    # Multi-K with non-f32 output: f32 scratch accumulator, cast at the end.
    @pl.when(pl.program_id(2) == 0)
    def _():
        acc_ref[...] = jnp.zeros_like(acc_ref)

    acc_ref[...] += _mm_contract(a_ref[...], b_ref[...], transpose_b)

    @pl.when(pl.program_id(2) == pl.num_programs(2) - 1)
    def _():
        o_ref[...] = _apply_act(acc_ref[...], act).astype(o_ref.dtype)


def matmul_padded(a, b, *, act="none", transpose_b=False,
                  out_dtype=jnp.bfloat16):
    """A @ B (or A @ B^T) on pre-padded bf16 operands; returns the padded result."""
    M, K = a.shape
    if transpose_b:
        N, Kb = b.shape
    else:
        Kb, N = b.shape
    assert K == Kb
    assert M % 16 == 0 and K % 128 == 0 and N % 128 == 0

    tm = _pick_tile(M, _TM_CAP, 16)
    tn = _pick_tile(N, _TN_CAP, 128)
    tk = _pick_tile(K, _TK_CAP, 128)
    grid = (M // tm, N // tn, K // tk)

    if transpose_b:
        b_spec = pl.BlockSpec((tn, tk), lambda i, j, k: (j, k))
    else:
        b_spec = pl.BlockSpec((tk, tn), lambda i, j, k: (k, j))

    if grid[2] == 1:
        kernel = functools.partial(_mm_kernel_direct, act=act,
                                   transpose_b=transpose_b)
        scratch = []
    elif jnp.dtype(out_dtype) == jnp.dtype(jnp.float32):
        kernel = functools.partial(_mm_kernel_out_acc, act=act,
                                   transpose_b=transpose_b)
        scratch = []
    else:
        kernel = functools.partial(_mm_kernel_scratch_acc, act=act,
                                   transpose_b=transpose_b)
        scratch = [pltpu.VMEM((tm, tn), jnp.float32)]

    return pl.pallas_call(
        kernel,
        out_shape=jax.ShapeDtypeStruct((M, N), out_dtype),
        grid=grid,
        in_specs=[pl.BlockSpec((tm, tk), lambda i, j, k: (i, k)), b_spec],
        out_specs=pl.BlockSpec((tm, tn), lambda i, j, k: (i, j)),
        scratch_shapes=scratch,
        compiler_params=pltpu.CompilerParams(
            dimension_semantics=("parallel", "parallel", "arbitrary"),
            vmem_limit_bytes=_VMEM_LIMIT),
    )(a, b)


# ---------------------------------------------------------------------------
# Training-mode BatchNorm1d: row-tiled two-pass (global batch statistics)
# Padded rows are zero, so they contribute nothing to the sums; `count` is the
# true row count.
# ---------------------------------------------------------------------------
def _bn_stats_kernel(x_ref, s_ref):
    @pl.when(pl.program_id(0) == 0)
    def _():
        s_ref[...] = jnp.zeros_like(s_ref)
    x = x_ref[...].astype(jnp.float32)
    s_ref[0:1, :] += jnp.sum(x, axis=0, keepdims=True)
    s_ref[1:2, :] += jnp.sum(x * x, axis=0, keepdims=True)


def _bn_apply_kernel(x_ref, s_ref, p_ref, o_ref, *, count, eps, act):
    x = x_ref[...].astype(jnp.float32)
    inv_n = 1.0 / count
    mean = s_ref[0:1, :] * inv_n
    var = jnp.maximum(s_ref[1:2, :] * inv_n - mean * mean, 0.0)
    y = (x - mean) * jax.lax.rsqrt(var + eps) * p_ref[0:1, :] + p_ref[1:2, :]
    o_ref[...] = _apply_act(y, act).astype(o_ref.dtype)


def batchnorm_padded(x, gamma, beta, *, true_rows, act="none", eps=1e-5,
                     out_dtype=jnp.bfloat16):
    R, D = x.shape
    assert R % 16 == 0 and D % 128 == 0
    tr = _pick_tile(R, _ROW_CAP, 16)
    grid = (R // tr,)

    # gamma in sublane row 0, beta in row 1 of one dense (8, D) parameter slab.
    params = jnp.zeros((8, D), jnp.float32)
    params = params.at[0, :gamma.shape[0]].set(gamma.astype(jnp.float32))
    params = params.at[1, :beta.shape[0]].set(beta.astype(jnp.float32))

    stats = pl.pallas_call(
        _bn_stats_kernel,
        out_shape=jax.ShapeDtypeStruct((8, D), jnp.float32),
        grid=grid,
        in_specs=[pl.BlockSpec((tr, D), lambda i: (i, 0))],
        out_specs=pl.BlockSpec((8, D), lambda i: (0, 0)),
        compiler_params=pltpu.CompilerParams(
            dimension_semantics=("arbitrary",),
            vmem_limit_bytes=_VMEM_LIMIT),
    )(x)

    return pl.pallas_call(
        functools.partial(_bn_apply_kernel, count=float(true_rows), eps=eps,
                          act=act),
        out_shape=jax.ShapeDtypeStruct((R, D), out_dtype),
        grid=grid,
        in_specs=[pl.BlockSpec((tr, D), lambda i: (i, 0)),
                  pl.BlockSpec((8, D), lambda i: (0, 0)),
                  pl.BlockSpec((8, D), lambda i: (0, 0))],
        out_specs=pl.BlockSpec((tr, D), lambda i: (i, 0)),
        compiler_params=pltpu.CompilerParams(
            dimension_semantics=("parallel",),
            vmem_limit_bytes=_VMEM_LIMIT),
    )(x, stats, params)


# ---------------------------------------------------------------------------
# Fused quaternion Hamilton product + BatchNorm1d (bn1), component-major
# (4, B, S) layout, row-tiled two passes (stats + apply).  Padded rows /
# columns are zero and yield zero components (guarded rsqrt), so they do not
# pollute the statistics.
# ---------------------------------------------------------------------------
def _hamilton(h, r):
    hr_, hi, hj, hk = h[0], h[1], h[2], h[3]
    rr, ri, rj, rk = r[0], r[1], r[2], r[3]
    norm = rr * rr + ri * ri + rj * rj + rk * rk
    inv = jnp.where(norm > 0.0, jax.lax.rsqrt(norm), 0.0)
    pr, pi_, pj_, pk_ = rr * inv, ri * inv, rj * inv, rk * inv
    return (hr_ * pr - hi * pi_ - hj * pj_ - hk * pk_,
            hi * pr + hr_ * pi_ - hk * pj_ + hj * pk_,
            hj * pr + hk * pi_ + hr_ * pj_ - hi * pk_,
            hk * pr - hj * pi_ + hi * pj_ + hr_ * pk_)


def _quat_stats_kernel(h_ref, r_ref, s_ref):
    @pl.when(pl.program_id(0) == 0)
    def _():
        s_ref[...] = jnp.zeros_like(s_ref)
    comps = _hamilton(h_ref[...].astype(jnp.float32),
                      r_ref[...].astype(jnp.float32))
    for c in range(4):
        v = comps[c]
        s_ref[c:c + 1, :] += jnp.sum(v, axis=0, keepdims=True)
        s_ref[c + 4:c + 5, :] += jnp.sum(v * v, axis=0, keepdims=True)


def _quat_apply_kernel(h_ref, r_ref, s_ref, p_ref, o_ref, *, count, eps):
    comps = _hamilton(h_ref[...].astype(jnp.float32),
                      r_ref[...].astype(jnp.float32))
    inv_n = 1.0 / count
    for c in range(4):
        v = comps[c]
        mean = s_ref[c:c + 1, :] * inv_n
        var = jnp.maximum(s_ref[c + 4:c + 5, :] * inv_n - mean * mean, 0.0)
        y = (v - mean) * jax.lax.rsqrt(var + eps) * p_ref[c:c + 1, :] \
            + p_ref[c + 4:c + 5, :]
        o_ref[c] = y.astype(o_ref.dtype)


def quat_bn_padded(h4, r4, gamma, beta, *, true_rows, eps=1e-5,
                   out_dtype=jnp.bfloat16):
    C, B, S = h4.shape
    assert C == 4 and B % 16 == 0 and S % 128 == 0
    tb = _pick_tile(B, _ROW_CAP, 16)
    grid = (B // tb,)
    s_true = gamma.shape[0] // 4

    # Rows 0..3: gamma per component; rows 4..7: beta per component.
    params = jnp.zeros((8, S), jnp.float32)
    params = params.at[:4, :s_true].set(
        gamma.astype(jnp.float32).reshape(4, s_true))
    params = params.at[4:, :s_true].set(
        beta.astype(jnp.float32).reshape(4, s_true))

    in_spec3 = pl.BlockSpec((4, tb, S), lambda i: (0, i, 0))
    stat_spec = pl.BlockSpec((8, S), lambda i: (0, 0))

    stats = pl.pallas_call(
        _quat_stats_kernel,
        out_shape=jax.ShapeDtypeStruct((8, S), jnp.float32),
        grid=grid,
        in_specs=[in_spec3, in_spec3],
        out_specs=stat_spec,
        compiler_params=pltpu.CompilerParams(
            dimension_semantics=("arbitrary",),
            vmem_limit_bytes=_VMEM_LIMIT),
    )(h4, r4)

    return pl.pallas_call(
        functools.partial(_quat_apply_kernel, count=float(true_rows), eps=eps),
        out_shape=jax.ShapeDtypeStruct((4, B, S), out_dtype),
        grid=grid,
        in_specs=[in_spec3, in_spec3, stat_spec, stat_spec],
        out_specs=in_spec3,
        compiler_params=pltpu.CompilerParams(
            dimension_semantics=("parallel",),
            vmem_limit_bytes=_VMEM_LIMIT),
    )(h4, r4, stats, params)


# ---------------------------------------------------------------------------
# Model glue (parameter construction / gathers / layout plumbing in plain JAX)
# ---------------------------------------------------------------------------
def make_quaternion_mul(kernel):
    """Build the (in, out) Hamilton weight from the (in//4, out) parameter."""
    r, i, j, k = jnp.split(kernel, 4, axis=1)
    r2 = jnp.concatenate([r, -i, -j, -k], axis=0)
    i2 = jnp.concatenate([i, r, -k, j], axis=0)
    j2 = jnp.concatenate([j, k, r, -i], axis=0)
    k2 = jnp.concatenate([k, -j, i, r], axis=0)
    return jnp.concatenate([r2, i2, j2, k2], axis=1)


def noge_forward(params, e1_idx, r_idx, lst_indexes, adj, n_entities):
    X = params["emb"][lst_indexes]                      # (N_total, emb_dim)
    N_total, emb_dim = X.shape
    B = e1_idx.shape[0]

    # Pad/cast once, then keep everything in padded bf16 pipeline form.
    Rp = _round_up(N_total, _ALIGN)
    adj_p = _pad2d(adj.astype(jnp.bfloat16), Rp, Rp)
    Xp = _pad2d(X.astype(jnp.bfloat16), Rp, _round_up(emb_dim, _ALIGN))

    hid = None
    for layer in params["layers"]:
        hamilton = make_quaternion_mul(layer["weight"])  # (in_dim, hid)
        hid = hamilton.shape[1]
        Hp = _round_up(hid, _ALIGN)
        W_p = _pad2d(hamilton.astype(jnp.bfloat16), Xp.shape[1], Hp)
        support = matmul_padded(Xp, W_p)                 # (Rp, Hp) bf16
        agg = matmul_padded(adj_p, support)              # (Rp, Hp) bf16
        Xp = batchnorm_padded(agg, layer["gamma"], layer["beta"],
                              true_rows=N_total, act="tanh")

    Hp = Xp.shape[1]
    S = hid // 4
    Sp = _round_up(S, 128)
    Bp = _round_up(max(B, 16), 16)

    h = Xp[e1_idx][:, :hid]                              # (B, hid) bf16
    r = Xp[r_idx + n_entities][:, :hid]

    def to_comp(x):
        # (B, hid) -> (4, Bp, Sp): component-major, lane-dense slabs.
        x4 = x.reshape(B, 4, S).transpose(1, 0, 2)
        return jnp.pad(x4, ((0, 0), (0, Bp - B), (0, Sp - S)))

    hr4 = quat_bn_padded(to_comp(h), to_comp(r),
                         params["bn1_gamma"], params["bn1_beta"], true_rows=B)
    hr = hr4[:, :B, :S].transpose(1, 0, 2).reshape(B, hid)
    # TODO(synk): training-mode Dropout (hidden_dropout2) has no deterministic
    # equivalent; applied as identity (eval-mode dropout).

    # Scoring: hr @ T^T with fused sigmoid; T is taken directly from the
    # already-padded X (no re-pad, no HBM transpose); batch fits one M tile so
    # T streams exactly once.
    Entp = _round_up(n_entities, _ALIGN)
    T_p = Xp[:Entp]                                      # (Entp, Hp) bf16
    hr_p = _pad2d(hr, Bp, Hp)
    pred = matmul_padded(hr_p, T_p, act="sigmoid", transpose_b=True,
                         out_dtype=jnp.float32)
    return pred[:B, :n_entities]


# ---------------------------------------------------------------------------
# Deterministic parameter / input construction and a single run
# ---------------------------------------------------------------------------
if __name__ == "__main__":
    n_entities, n_relations = 24, 8
    emb_dim = hid_dim = 32
    num_layers = 1
    batch = 8
    N_total = n_entities + n_relations

    key = jax.random.PRNGKey(0)
    k_emb, k_w, k_adj, k_e, k_r = jax.random.split(key, 5)

    # Embedding: xavier_normal_ over (n_entities+n_relations, emb_dim)
    emb_std = math.sqrt(2.0 / (N_total + emb_dim))
    emb = jax.random.normal(k_emb, (N_total, emb_dim), jnp.float32) * emb_std

    # QGNN layer parameters (weight: uniform(-stdv, stdv), BN gamma/beta)
    layers = []
    in_dim = emb_dim
    for l in range(num_layers):
        stdv = math.sqrt(6.0 / (in_dim // 4 + hid_dim))
        w = jax.random.uniform(jax.random.fold_in(k_w, l),
                               (in_dim // 4, hid_dim), jnp.float32,
                               minval=-stdv, maxval=stdv)
        layers.append(dict(weight=w,
                           gamma=jnp.ones((hid_dim,), jnp.float32),
                           beta=jnp.zeros((hid_dim,), jnp.float32)))
        in_dim = hid_dim

    params = dict(emb=emb, layers=layers,
                  bn1_gamma=jnp.ones((hid_dim,), jnp.float32),
                  bn1_beta=jnp.zeros((hid_dim,), jnp.float32))

    # Symmetrically normalized dense adjacency over entity+relation nodes.
    A = (jax.random.uniform(k_adj, (N_total, N_total)) < 0.2).astype(jnp.float32)
    A = jnp.maximum(A, A.T) + jnp.eye(N_total, dtype=jnp.float32)
    d_inv_sqrt = 1.0 / jnp.sqrt(jnp.sum(A, axis=1))
    adj = A * d_inv_sqrt[:, None] * d_inv_sqrt[None, :]

    e1_idx = jax.random.randint(k_e, (batch,), 0, n_entities, jnp.int32)
    r_idx = jax.random.randint(k_r, (batch,), 0, n_relations, jnp.int32)
    lst_indexes = jnp.arange(N_total, dtype=jnp.int32)

    fwd = jax.jit(functools.partial(noge_forward, n_entities=n_entities))
    pred = fwd(params, e1_idx, r_idx, lst_indexes, adj)
    pred = jax.block_until_ready(pred)
    assert pred.shape == (batch, n_entities)
    assert bool(jnp.all(jnp.isfinite(pred)))
    print("KERNEL_OK")
</pallas_src>

<mosaic_0001>
module attributes {stable_mosaic.version = 11 : i64} {
  func.func @_mm_kernel_direct(%arg0: i32, %arg1: i32, %arg2: i32, %arg3: memref<256x256xbf16, #tpu.memory_space<vmem>>, %arg4: memref<256x256xbf16, #tpu.memory_space<vmem>>, %arg5: memref<256x256xbf16, #tpu.memory_space<vmem>>) attributes {dimension_semantics = [#tpu.dimension_semantics<parallel>, #tpu.dimension_semantics<parallel>, #tpu.dimension_semantics<arbitrary>], iteration_bounds = array<i64: 1, 1, 1>, scalar_prefetch = 0 : i64, scratch_operands = 0 : i64, tpu.core_type = #tpu.core_type<tc>, window_params = [{transform_indices = @transform_0, window_bounds = array<i64: 256, 256>}, {transform_indices = @transform_1, window_bounds = array<i64: 256, 256>}, {transform_indices = @transform_2, window_bounds = array<i64: 256, 256>}]} {
    %c0 = arith.constant 0 : index
    %c0_0 = arith.constant 0 : index
    %0 = vector.load %arg3[%c0, %c0_0] : memref<256x256xbf16, #tpu.memory_space<vmem>>, vector<256x256xbf16>
    %c0_1 = arith.constant 0 : index
    %c0_2 = arith.constant 0 : index
    %1 = vector.load %arg4[%c0_1, %c0_2] : memref<256x256xbf16, #tpu.memory_space<vmem>>, vector<256x256xbf16>
    %cst = arith.constant dense<0.000000e+00> : vector<256x256xf32>
    %2 = tpu.matmul %0, %1, %cst {dimension_numbers = #tpu.dot_dimension_numbers<[1], [0], [0], [1], [0, 0, 1, 1], [], []>} : vector<256x256xbf16>, vector<256x256xbf16>, vector<256x256xf32> -> vector<256x256xf32>
    %3 = arith.truncf %2 : vector<256x256xf32> to vector<256x256xbf16>
    %c0_3 = arith.constant 0 : index
    %c0_4 = arith.constant 0 : index
    %4 = vector.load %arg5[%c0_3, %c0_4] : memref<256x256xbf16, #tpu.memory_space<vmem>>, vector<256x256xbf16>
    tpu.vector_store %arg5[%c0_3, %c0_4], %3 {strides = array<i32>} : memref<256x256xbf16, #tpu.memory_space<vmem>>, vector<256x256xbf16>,
    return
  }
  func.func @transform_0(%arg0: i32, %arg1: i32, %arg2: i32) -> (i32, i32) {
    %c0_i32 = arith.constant 0 : i32
    return %arg0, %arg2 : i32, i32
  }
  func.func @transform_1(%arg0: i32, %arg1: i32, %arg2: i32) -> (i32, i32) {
    %c0_i32 = arith.constant 0 : i32
    return %arg2, %arg1 : i32, i32
  }
  func.func @transform_2(%arg0: i32, %arg1: i32, %arg2: i32) -> (i32, i32) {
    %c0_i32 = arith.constant 0 : i32
    return %arg0, %arg1 : i32, i32
  }
}

module attributes {stable_mosaic.version = 11 : i64} {
  func.func @_bn_stats_kernel(%arg0: i32, %arg1: memref<256x256xbf16, #tpu.memory_space<vmem>>, %arg2: memref<8x256xf32, #tpu.memory_space<vmem>>) attributes {dimension_semantics = [#tpu.dimension_semantics<arbitrary>], iteration_bounds = array<i64: 1>, scalar_prefetch = 0 : i64, scratch_operands = 0 : i64, tpu.core_type = #tpu.core_type<tc>, window_params = [{transform_indices = @transform_0, window_bounds = array<i64: 256, 256>}, {pipeline_mode = #tpu.pipeline_mode<synchronous>, transform_indices = @transform_1, window_bounds = array<i64: 8, 256>}]} {
    %c0_i32 = arith.constant 0 : i32
    %0 = arith.cmpi eq, %arg0, %c0_i32 : i32
    %1 = arith.extui %0 : i1 to i32
    %c0_i32_0 = arith.constant 0 : i32
    %2 = arith.cmpi ne, %1, %c0_i32_0 : i32
    scf.if %2 {
      %cst_10 = arith.constant 0.000000e+00 : f32
      %16 = vector.broadcast %cst_10 : f32 to vector<8x256xf32>
      %c0_11 = arith.constant 0 : index
      %c0_12 = arith.constant 0 : index
      %17 = vector.load %arg2[%c0_11, %c0_12] : memref<8x256xf32, #tpu.memory_space<vmem>>, vector<8x256xf32>
      tpu.vector_store %arg2[%c0_11, %c0_12], %16 {strides = array<i32>} : memref<8x256xf32, #tpu.memory_space<vmem>>, vector<8x256xf32>,
    } else {
    }
    %c0 = arith.constant 0 : index
    %c0_1 = arith.constant 0 : index
    %3 = vector.load %arg1[%c0, %c0_1] : memref<256x256xbf16, #tpu.memory_space<vmem>>, vector<256x256xbf16>
    %4 = arith.extf %3 : vector<256x256xbf16> to vector<256x256xf32>
    %c0_2 = arith.constant 0 : index
    %c0_3 = arith.constant 0 : index
    %5 = vector.load %arg2[%c0_2, %c0_3] : memref<8x256xf32, #tpu.memory_space<vmem>>, vector<1x256xf32>
    %cst = arith.constant dense<0.000000e+00> : vector<256xf32>
    %6 = vector.multi_reduction <add>, %4, %cst [0] : vector<256x256xf32> to vector<256xf32>
    %7 = vector.shape_cast %6 : vector<256xf32> to vector<1x256xf32>
    %8 = arith.addf %5, %7 : vector<1x256xf32>
    %c0_4 = arith.constant 0 : index
    %c0_5 = arith.constant 0 : index
    %9 = vector.load %arg2[%c0_4, %c0_5] : memref<8x256xf32, #tpu.memory_space<vmem>>, vector<1x256xf32>
    tpu.vector_store %arg2[%c0_4, %c0_5], %8 {strides = array<i32>} : memref<8x256xf32, #tpu.memory_space<vmem>>, vector<1x256xf32>,
    %c1 = arith.constant 1 : index
    %c0_6 = arith.constant 0 : index
    %10 = vector.load %arg2[%c1, %c0_6] : memref<8x256xf32, #tpu.memory_space<vmem>>, vector<1x256xf32>
    %11 = arith.mulf %4, %4 : vector<256x256xf32>
    %cst_7 = arith.constant dense<0.000000e+00> : vector<256xf32>
    %12 = vector.multi_reduction <add>, %11, %cst_7 [0] : vector<256x256xf32> to vector<256xf32>
    %13 = vector.shape_cast %12 : vector<256xf32> to vector<1x256xf32>
    %14 = arith.addf %10, %13 : vector<1x256xf32>
    %c1_8 = arith.constant 1 : index
    %c0_9 = arith.constant 0 : index
    %15 = vector.load %arg2[%c1_8, %c0_9] : memref<8x256xf32, #tpu.memory_space<vmem>>, vector<1x256xf32>
    tpu.vector_store %arg2[%c1_8, %c0_9], %14 {strides = array<i32>} : memref<8x256xf32, #tpu.memory_space<vmem>>, vector<1x256xf32>,
    return
  }
  func.func @transform_0(%arg0: i32) -> (i32, i32) {
    %c0_i32 = arith.constant 0 : i32
    %c0_i32_0 = arith.constant 0 : i32
    return %arg0, %c0_i32 : i32, i32
  }
  func.func @transform_1(%arg0: i32) -> (i32, i32) {
    %c0_i32 = arith.constant 0 : i32
    %c0_i32_0 = arith.constant 0 : i32
    %c0_i32_1 = arith.constant 0 : i32
    return %c0_i32, %c0_i32_0 : i32, i32
  }
}

module attributes {stable_mosaic.version = 11 : i64} {
  func.func @_bn_apply_kernel(%arg0: i32, %arg1: memref<256x256xbf16, #tpu.memory_space<vmem>>, %arg2: memref<8x256xf32, #tpu.memory_space<vmem>>, %arg3: memref<8x256xf32, #tpu.memory_space<vmem>>, %arg4: memref<256x256xbf16, #tpu.memory_space<vmem>>) attributes {dimension_semantics = [#tpu.dimension_semantics<parallel>], iteration_bounds = array<i64: 1>, scalar_prefetch = 0 : i64, scratch_operands = 0 : i64, tpu.core_type = #tpu.core_type<tc>, window_params = [{transform_indices = @transform_0, window_bounds = array<i64: 256, 256>}, {pipeline_mode = #tpu.pipeline_mode<synchronous>, transform_indices = @transform_1, window_bounds = array<i64: 8, 256>}, {pipeline_mode = #tpu.pipeline_mode<synchronous>, transform_indices = @transform_2, window_bounds = array<i64: 8, 256>}, {transform_indices = @transform_3, window_bounds = array<i64: 256, 256>}]} {
    %c0 = arith.constant 0 : index
    %c0_0 = arith.constant 0 : index
    %0 = vector.load %arg1[%c0, %c0_0] : memref<256x256xbf16, #tpu.memory_space<vmem>>, vector<256x256xbf16>
    %1 = arith.extf %0 : vector<256x256xbf16> to vector<256x256xf32>
    %c0_1 = arith.constant 0 : index
    %c0_2 = arith.constant 0 : index
    %2 = vector.load %arg2[%c0_1, %c0_2] : memref<8x256xf32, #tpu.memory_space<vmem>>, vector<1x256xf32>
    %cst = arith.constant 3.125000e-02 : f32
    %3 = vector.broadcast %cst : f32 to vector<1x256xf32>
    %4 = arith.mulf %2, %3 : vector<1x256xf32>
    %c1 = arith.constant 1 : index
    %c0_3 = arith.constant 0 : index
    %5 = vector.load %arg2[%c1, %c0_3] : memref<8x256xf32, #tpu.memory_space<vmem>>, vector<1x256xf32>
    %cst_4 = arith.constant 3.125000e-02 : f32
    %6 = vector.broadcast %cst_4 : f32 to vector<1x256xf32>
    %7 = arith.mulf %5, %6 : vector<1x256xf32>
    %8 = arith.mulf %4, %4 : vector<1x256xf32>
    %9 = arith.subf %7, %8 : vector<1x256xf32>
    %cst_5 = arith.constant 0.000000e+00 : f32
    %10 = vector.broadcast %cst_5 : f32 to vector<1x256xf32>
    %11 = arith.maximumf %9, %10 : vector<1x256xf32>
    %12 = vector.broadcast %4 : vector<1x256xf32> to vector<256x256xf32>
    %13 = arith.subf %1, %12 : vector<256x256xf32>
    %cst_6 = arith.constant 9.99999974E-6 : f32
    %14 = vector.broadcast %cst_6 : f32 to vector<1x256xf32>
    %15 = arith.addf %11, %14 : vector<1x256xf32>
    %16 = math.rsqrt %15 : vector<1x256xf32>
    %17 = vector.broadcast %16 : vector<1x256xf32> to vector<256x256xf32>
    %18 = arith.mulf %13, %17 : vector<256x256xf32>
    %c0_7 = arith.constant 0 : index
    %c0_8 = arith.constant 0 : index
    %19 = vector.load %arg3[%c0_7, %c0_8] : memref<8x256xf32, #tpu.memory_space<vmem>>, vector<1x256xf32>
    %20 = vector.broadcast %19 : vector<1x256xf32> to vector<256x256xf32>
    %21 = arith.mulf %18, %20 : vector<256x256xf32>
    %c1_9 = arith.constant 1 : index
    %c0_10 = arith.constant 0 : index
    %22 = vector.load %arg3[%c1_9, %c0_10] : memref<8x256xf32, #tpu.memory_space<vmem>>, vector<1x256xf32>
    %23 = vector.broadcast %22 : vector<1x256xf32> to vector<256x256xf32>
    %24 = arith.addf %21, %23 : vector<256x256xf32>
    %25 = math.tanh %24 : vector<256x256xf32>
    %26 = arith.truncf %25 : vector<256x256xf32> to vector<256x256xbf16>
    %c0_11 = arith.constant 0 : index
    %c0_12 = arith.constant 0 : index
    %27 = vector.load %arg4[%c0_11, %c0_12] : memref<256x256xbf16, #tpu.memory_space<vmem>>, vector<256x256xbf16>
    tpu.vector_store %arg4[%c0_11, %c0_12], %26 {strides = array<i32>} : memref<256x256xbf16, #tpu.memory_space<vmem>>, vector<256x256xbf16>,
    return
  }
  func.func @transform_0(%arg0: i32) -> (i32, i32) {
    %c0_i32 = arith.constant 0 : i32
    %c0_i32_0 = arith.constant 0 : i32
    return %arg0, %c0_i32 : i32, i32
  }
  func.func @transform_1(%arg0: i32) -> (i32, i32) {
    %c0_i32 = arith.constant 0 : i32
    %c0_i32_0 = arith.constant 0 : i32
    %c0_i32_1 = arith.constant 0 : i32
    return %c0_i32, %c0_i32_0 : i32, i32
  }
  func.func @transform_2(%arg0: i32) -> (i32, i32) {
    %c0_i32 = arith.constant 0 : i32
    %c0_i32_0 = arith.constant 0 : i32
    %c0_i32_1 = arith.constant 0 : i32
    return %c0_i32, %c0_i32_0 : i32, i32
  }
  func.func @transform_3(%arg0: i32) -> (i32, i32) {
    %c0_i32 = arith.constant 0 : i32
    %c0_i32_0 = arith.constant 0 : i32
    return %arg0, %c0_i32 : i32, i32
  }
}

module attributes {stable_mosaic.version = 11 : i64} {
  func.func @_quat_stats_kernel(%arg0: i32, %arg1: memref<4x16x128xbf16, #tpu.memory_space<vmem>>, %arg2: memref<4x16x128xbf16, #tpu.memory_space<vmem>>, %arg3: memref<8x128xf32, #tpu.memory_space<vmem>>) attributes {dimension_semantics = [#tpu.dimension_semantics<arbitrary>], iteration_bounds = array<i64: 1>, scalar_prefetch = 0 : i64, scratch_operands = 0 : i64, tpu.core_type = #tpu.core_type<tc>, window_params = [{transform_indices = @transform_0, window_bounds = array<i64: 4, 16, 128>}, {transform_indices = @transform_1, window_bounds = array<i64: 4, 16, 128>}, {pipeline_mode = #tpu.pipeline_mode<synchronous>, transform_indices = @transform_2, window_bounds = array<i64: 8, 128>}]} {
    %c0_i32 = arith.constant 0 : i32
    %0 = arith.cmpi eq, %arg0, %c0_i32 : i32
    %1 = arith.extui %0 : i1 to i32
    %c0_i32_0 = arith.constant 0 : i32
    %2 = arith.cmpi ne, %1, %c0_i32_0 : i32
    scf.if %2 {
      %cst_40 = arith.constant 0.000000e+00 : f32
      %111 = vector.broadcast %cst_40 : f32 to vector<8x128xf32>
      %c0_41 = arith.constant 0 : index
      %c0_42 = arith.constant 0 : index
      %112 = vector.load %arg3[%c0_41, %c0_42] : memref<8x128xf32, #tpu.memory_space<vmem>>, vector<8x128xf32>
      tpu.vector_store %arg3[%c0_41, %c0_42], %111 {strides = array<i32>} : memref<8x128xf32, #tpu.memory_space<vmem>>, vector<8x128xf32>,
    } else {
    }
    %c0 = arith.constant 0 : index
    %c0_1 = arith.constant 0 : index
    %c0_2 = arith.constant 0 : index
    %3 = vector.load %arg1[%c0, %c0_1, %c0_2] : memref<4x16x128xbf16, #tpu.memory_space<vmem>>, vector<4x16x128xbf16>
    %4 = arith.extf %3 : vector<4x16x128xbf16> to vector<4x16x128xf32>
    %c0_3 = arith.constant 0 : index
    %c0_4 = arith.constant 0 : index
    %c0_5 = arith.constant 0 : index
    %5 = vector.load %arg2[%c0_3, %c0_4, %c0_5] : memref<4x16x128xbf16, #tpu.memory_space<vmem>>, vector<4x16x128xbf16>
    %6 = arith.extf %5 : vector<4x16x128xbf16> to vector<4x16x128xf32>
    %7 = vector.extract_strided_slice %4 {offsets = [0, 0, 0], sizes = [1, 16, 128], strides = [1, 1, 1]} : vector<4x16x128xf32> to vector<1x16x128xf32>
    %8 = vector.shape_cast %7 : vector<1x16x128xf32> to vector<16x128xf32>
    %9 = vector.extract_strided_slice %4 {offsets = [1, 0, 0], sizes = [1, 16, 128], strides = [1, 1, 1]} : vector<4x16x128xf32> to vector<1x16x128xf32>
    %10 = vector.shape_cast %9 : vector<1x16x128xf32> to vector<16x128xf32>
    %11 = vector.extract_strided_slice %4 {offsets = [2, 0, 0], sizes = [1, 16, 128], strides = [1, 1, 1]} : vector<4x16x128xf32> to vector<1x16x128xf32>
    %12 = vector.shape_cast %11 : vector<1x16x128xf32> to vector<16x128xf32>
    %13 = vector.extract_strided_slice %4 {offsets = [3, 0, 0], sizes = [1, 16, 128], strides = [1, 1, 1]} : vector<4x16x128xf32> to vector<1x16x128xf32>
    %14 = vector.shape_cast %13 : vector<1x16x128xf32> to vector<16x128xf32>
    %15 = vector.extract_strided_slice %6 {offsets = [0, 0, 0], sizes = [1, 16, 128], strides = [1, 1, 1]} : vector<4x16x128xf32> to vector<1x16x128xf32>
    %16 = vector.shape_cast %15 : vector<1x16x128xf32> to vector<16x128xf32>
    %17 = vector.extract_strided_slice %6 {offsets = [1, 0, 0], sizes = [1, 16, 128], strides = [1, 1, 1]} : vector<4x16x128xf32> to vector<1x16x128xf32>
    %18 = vector.shape_cast %17 : vector<1x16x128xf32> to vector<16x128xf32>
    %19 = vector.extract_strided_slice %6 {offsets = [2, 0, 0], sizes = [1, 16, 128], strides = [1, 1, 1]} : vector<4x16x128xf32> to vector<1x16x128xf32>
    %20 = vector.shape_cast %19 : vector<1x16x128xf32> to vector<16x128xf32>
    %21 = vector.extract_strided_slice %6 {offsets = [3, 0, 0], sizes = [1, 16, 128], strides = [1, 1, 1]} : vector<4x16x128xf32> to vector<1x16x128xf32>
    %22 = vector.shape_cast %21 : vector<1x16x128xf32> to vector<16x128xf32>
    %23 = arith.mulf %16, %16 : vector<16x128xf32>
    %24 = arith.mulf %18, %18 : vector<16x128xf32>
    %25 = arith.addf %23, %24 : vector<16x128xf32>
    %26 = arith.mulf %20, %20 : vector<16x128xf32>
    %27 = arith.addf %25, %26 : vector<16x128xf32>
    %28 = arith.mulf %22, %22 : vector<16x128xf32>
    %29 = arith.addf %27, %28 : vector<16x128xf32>
    %cst = arith.constant 0.000000e+00 : f32
    %30 = vector.broadcast %cst : f32 to vector<16x128xf32>
    %31 = arith.cmpf ogt, %29, %30 : vector<16x128xf32>
    %32 = math.rsqrt %29 : vector<16x128xf32>
    %cst_6 = arith.constant 0.000000e+00 : f32
    %33 = vector.broadcast %cst_6 : f32 to vector<16x128xf32>
    %34 = arith.select %31, %32, %33 : vector<16x128xi1>, vector<16x128xf32>
    %35 = arith.mulf %16, %34 : vector<16x128xf32>
    %36 = arith.mulf %18, %34 : vector<16x128xf32>
    %37 = arith.mulf %20, %34 : vector<16x128xf32>
    %38 = arith.mulf %22, %34 : vector<16x128xf32>
    %39 = arith.mulf %8, %35 : vector<16x128xf32>
    %40 = arith.mulf %10, %36 : vector<16x128xf32>
    %41 = arith.subf %39, %40 : vector<16x128xf32>
    %42 = arith.mulf %12, %37 : vector<16x128xf32>
    %43 = arith.subf %41, %42 : vector<16x128xf32>
    %44 = arith.mulf %14, %38 : vector<16x128xf32>
    %45 = arith.subf %43, %44 : vector<16x128xf32>
    %46 = arith.mulf %10, %35 : vector<16x128xf32>
    %47 = arith.mulf %8, %36 : vector<16x128xf32>
    %48 = arith.addf %46, %47 : vector<16x128xf32>
    %49 = arith.mulf %14, %37 : vector<16x128xf32>
    %50 = arith.subf %48, %49 : vector<16x128xf32>
    %51 = arith.mulf %12, %38 : vector<16x128xf32>
    %52 = arith.addf %50, %51 : vector<16x128xf32>
    %53 = arith.mulf %12, %35 : vector<16x128xf32>
    %54 = arith.mulf %14, %36 : vector<16x128xf32>
    %55 = arith.addf %53, %54 : vector<16x128xf32>
    %56 = arith.mulf %8, %37 : vector<16x128xf32>
    %57 = arith.addf %55, %56 : vector<16x128xf32>
    %58 = arith.mulf %10, %38 : vector<16x128xf32>
    %59 = arith.subf %57, %58 : vector<16x128xf32>
    %60 = arith.mulf %14, %35 : vector<16x128xf32>
    %61 = arith.mulf %12, %36 : vector<16x128xf32>
    %62 = arith.subf %60, %61 : vector<16x128xf32>
    %63 = arith.mulf %10, %37 : vector<16x128xf32>
    %64 = arith.addf %62, %63 : vector<16x128xf32>
    %65 = arith.mulf %8, %38 : vector<16x128xf32>
    %66 = arith.addf %64, %65 : vector<16x128xf32>
    %c0_7 = arith.constant 0 : index
    %c0_8 = arith.constant 0 : index
    %67 = vector.load %arg3[%c0_7, %c0_8] : memref<8x128xf32, #tpu.memory_space<vmem>>, vector<1x128xf32>
    %cst_9 = arith.constant dense<0.000000e+00> : vector<128xf32>
    %68 = vector.multi_reduction <add>, %45, %cst_9 [0] : vector<16x128xf32> to vector<128xf32>
    %69 = vector.shape_cast %68 : vector<128xf32> to vector<1x128xf32>
    %70 = arith.addf %67, %69 : vector<1x128xf32>
    %c0_10 = arith.constant 0 : index
    %c0_11 = arith.constant 0 : index
    %71 = vector.load %arg3[%c0_10, %c0_11] : memref<8x128xf32, #tpu.memory_space<vmem>>, vector<1x128xf32>
    tpu.vector_store %arg3[%c0_10, %c0_11], %70 {strides = array<i32>} : memref<8x128xf32, #tpu.memory_space<vmem>>, vector<1x128xf32>,
    %c4 = arith.constant 4 : index
    %c0_12 = arith.constant 0 : index
    %72 = vector.load %arg3[%c4, %c0_12] : memref<8x128xf32, #tpu.memory_space<vmem>>, vector<1x128xf32>
    %73 = arith.mulf %45, %45 : vector<16x128xf32>
    %cst_13 = arith.constant dense<0.000000e+00> : vector<128xf32>
    %74 = vector.multi_reduction <add>, %73, %cst_13 [0] : vector<16x128xf32> to vector<128xf32>
    %75 = vector.shape_cast %74 : vector<128xf32> to vector<1x128xf32>
    %76 = arith.addf %72, %75 : vector<1x128xf32>
    %c4_14 = arith.constant 4 : index
    %c0_15 = arith.constant 0 : index
    %77 = vector.load %arg3[%c4_14, %c0_15] : memref<8x128xf32, #tpu.memory_space<vmem>>, vector<1x128xf32>
    tpu.vector_store %arg3[%c4_14, %c0_15], %76 {strides = array<i32>} : memref<8x128xf32, #tpu.memory_space<vmem>>, vector<1x128xf32>,
    %c1 = arith.constant 1 : index
    %c0_16 = arith.constant 0 : index
    %78 = vector.load %arg3[%c1, %c0_16] : memref<8x128xf32, #tpu.memory_space<vmem>>, vector<1x128xf32>
    %cst_17 = arith.constant dense<0.000000e+00> : vector<128xf32>
    %79 = vector.multi_reduction <add>, %52, %cst_17 [0] : vector<16x128xf32> to vector<128xf32>
    %80 = vector.shape_cast %79 : vector<128xf32> to vector<1x128xf32>
    %81 = arith.addf %78, %80 : vector<1x128xf32>
    %c1_18 = arith.constant 1 : index
    %c0_19 = arith.constant 0 : index
    %82 = vector.load %arg3[%c1_18, %c0_19] : memref<8x128xf32, #tpu.memory_space<vmem>>, vector<1x128xf32>
    tpu.vector_store %arg3[%c1_18, %c0_19], %81 {strides = array<i32>} : memref<8x128xf32, #tpu.memory_space<vmem>>, vector<1x128xf32>,
    %c5 = arith.constant 5 : index
    %c0_20 = arith.constant 0 : index
    %83 = vector.load %arg3[%c5, %c0_20] : memref<8x128xf32, #tpu.memory_space<vmem>>, vector<1x128xf32>
    %84 = arith.mulf %52, %52 : vector<16x128xf32>
    %cst_21 = arith.constant dense<0.000000e+00> : vector<128xf32>
    %85 = vector.multi_reduction <add>, %84, %cst_21 [0] : vector<16x128xf32> to vector<128xf32>
    %86 = vector.shape_cast %85 : vector<128xf32> to vector<1x128xf32>
    %87 = arith.addf %83, %86 : vector<1x128xf32>
    %c5_22 = arith.constant 5 : index
    %c0_23 = arith.constant 0 : index
    %88 = vector.load %arg3[%c5_22, %c0_23] : memref<8x128xf32, #tpu.memory_space<vmem>>, vector<1x128xf32>
    tpu.vector_store %arg3[%c5_22, %c0_23], %87 {strides = array<i32>} : memref<8x128xf32, #tpu.memory_space<vmem>>, vector<1x128xf32>,
    %c2 = arith.constant 2 : index
    %c0_24 = arith.constant 0 : index
    %89 = vector.load %arg3[%c2, %c0_24] : memref<8x128xf32, #tpu.memory_space<vmem>>, vector<1x128xf32>
    %cst_25 = arith.constant dense<0.000000e+00> : vector<128xf32>
    %90 = vector.multi_reduction <add>, %59, %cst_25 [0] : vector<16x128xf32> to vector<128xf32>
    %91 = vector.shape_cast %90 : vector<128xf32> to vector<1x128xf32>
    %92 = arith.addf %89, %91 : vector<1x128xf32>
    %c2_26 = arith.constant 2 : index
    %c0_27 = arith.constant 0 : index
    %93 = vector.load %arg3[%c2_26, %c0_27] : memref<8x128xf32, #tpu.memory_space<vmem>>, vector<1x128xf32>
    tpu.vector_store %arg3[%c2_26, %c0_27], %92 {strides = array<i32>} : memref<8x128xf32, #tpu.memory_space<vmem>>, vector<1x128xf32>,
    %c6 = arith.constant 6 : index
    %c0_28 = arith.constant 0 : index
    %94 = vector.load %arg3[%c6, %c0_28] : memref<8x128xf32, #tpu.memory_space<vmem>>, vector<1x128xf32>
    %95 = arith.mulf %59, %59 : vector<16x128xf32>
    %cst_29 = arith.constant dense<0.000000e+00> : vector<128xf32>
    %96 = vector.multi_reduction <add>, %95, %cst_29 [0] : vector<16x128xf32> to vector<128xf32>
    %97 = vector.shape_cast %96 : vector<128xf32> to vector<1x128xf32>
    %98 = arith.addf %94, %97 : vector<1x128xf32>
    %c6_30 = arith.constant 6 : index
    %c0_31 = arith.constant 0 : index
    %99 = vector.load %arg3[%c6_30, %c0_31] : memref<8x128xf32, #tpu.memory_space<vmem>>, vector<1x128xf32>
    tpu.vector_store %arg3[%c6_30, %c0_31], %98 {strides = array<i32>} : memref<8x128xf32, #tpu.memory_space<vmem>>, vector<1x128xf32>,
    %c3 = arith.constant 3 : index
    %c0_32 = arith.constant 0 : index
    %100 = vector.load %arg3[%c3, %c0_32] : memref<8x128xf32, #tpu.memory_space<vmem>>, vector<1x128xf32>
    %cst_33 = arith.constant dense<0.000000e+00> : vector<128xf32>
    %101 = vector.multi_reduction <add>, %66, %cst_33 [0] : vector<16x128xf32> to vector<128xf32>
    %102 = vector.shape_cast %101 : vector<128xf32> to vector<1x128xf32>
    %103 = arith.addf %100, %102 : vector<1x128xf32>
    %c3_34 = arith.constant 3 : index
    %c0_35 = arith.constant 0 : index
    %104 = vector.load %arg3[%c3_34, %c0_35] : memref<8x128xf32, #tpu.memory_space<vmem>>, vector<1x128xf32>
    tpu.vector_store %arg3[%c3_34, %c0_35], %103 {strides = array<i32>} : memref<8x128xf32, #tpu.memory_space<vmem>>, vector<1x128xf32>,
    %c7 = arith.constant 7 : index
    %c0_36 = arith.constant 0 : index
    %105 = vector.load %arg3[%c7, %c0_36] : memref<8x128xf32, #tpu.memory_space<vmem>>, vector<1x128xf32>
    %106 = arith.mulf %66, %66 : vector<16x128xf32>
    %cst_37 = arith.constant dense<0.000000e+00> : vector<128xf32>
    %107 = vector.multi_reduction <add>, %106, %cst_37 [0] : vector<16x128xf32> to vector<128xf32>
    %108 = vector.shape_cast %107 : vector<128xf32> to vector<1x128xf32>
    %109 = arith.addf %105, %108 : vector<1x128xf32>
    %c7_38 = arith.constant 7 : index
    %c0_39 = arith.constant 0 : index
    %110 = vector.load %arg3[%c7_38, %c0_39] : memref<8x128xf32, #tpu.memory_space<vmem>>, vector<1x128xf32>
    tpu.vector_store %arg3[%c7_38, %c0_39], %109 {strides = array<i32>} : memref<8x128xf32, #tpu.memory_space<vmem>>, vector<1x128xf32>,
    return
  }
  func.func @transform_0(%arg0: i32) -> (i32, i32, i32) {
    %c0_i32 = arith.constant 0 : i32
    %c0_i32_0 = arith.constant 0 : i32
    %c0_i32_1 = arith.constant 0 : i32
    return %c0_i32, %arg0, %c0_i32_0 : i32, i32, i32
  }
  func.func @transform_1(%arg0: i32) -> (i32, i32, i32) {
    %c0_i32 = arith.constant 0 : i32
    %c0_i32_0 = arith.constant 0 : i32
    %c0_i32_1 = arith.constant 0 : i32
    return %c0_i32, %arg0, %c0_i32_0 : i32, i32, i32
  }
  func.func @transform_2(%arg0: i32) -> (i32, i32) {
    %c0_i32 = arith.constant 0 : i32
    %c0_i32_0 = arith.constant 0 : i32
    %c0_i32_1 = arith.constant 0 : i32
    return %c0_i32, %c0_i32_0 : i32, i32
  }
}

module attributes {stable_mosaic.version = 11 : i64} {
  func.func @_quat_apply_kernel(%arg0: i32, %arg1: memref<4x16x128xbf16, #tpu.memory_space<vmem>>, %arg2: memref<4x16x128xbf16, #tpu.memory_space<vmem>>, %arg3: memref<8x128xf32, #tpu.memory_space<vmem>>, %arg4: memref<8x128xf32, #tpu.memory_space<vmem>>, %arg5: memref<4x16x128xbf16, #tpu.memory_space<vmem>>) attributes {dimension_semantics = [#tpu.dimension_semantics<parallel>], iteration_bounds = array<i64: 1>, scalar_prefetch = 0 : i64, scratch_operands = 0 : i64, tpu.core_type = #tpu.core_type<tc>, window_params = [{transform_indices = @transform_0, window_bounds = array<i64: 4, 16, 128>}, {transform_indices = @transform_1, window_bounds = array<i64: 4, 16, 128>}, {pipeline_mode = #tpu.pipeline_mode<synchronous>, transform_indices = @transform_2, window_bounds = array<i64: 8, 128>}, {pipeline_mode = #tpu.pipeline_mode<synchronous>, transform_indices = @transform_3, window_bounds = array<i64: 8, 128>}, {transform_indices = @transform_4, window_bounds = array<i64: 4, 16, 128>}]} {
    %c0 = arith.constant 0 : index
    %c0_0 = arith.constant 0 : index
    %c0_1 = arith.constant 0 : index
    %0 = vector.load %arg1[%c0, %c0_0, %c0_1] : memref<4x16x128xbf16, #tpu.memory_space<vmem>>, vector<4x16x128xbf16>
    %1 = arith.extf %0 : vector<4x16x128xbf16> to vector<4x16x128xf32>
    %c0_2 = arith.constant 0 : index
    %c0_3 = arith.constant 0 : index
    %c0_4 = arith.constant 0 : index
    %2 = vector.load %arg2[%c0_2, %c0_3, %c0_4] : memref<4x16x128xbf16, #tpu.memory_space<vmem>>, vector<4x16x128xbf16>
    %3 = arith.extf %2 : vector<4x16x128xbf16> to vector<4x16x128xf32>
    %4 = vector.extract_strided_slice %1 {offsets = [0, 0, 0], sizes = [1, 16, 128], strides = [1, 1, 1]} : vector<4x16x128xf32> to vector<1x16x128xf32>
    %5 = vector.shape_cast %4 : vector<1x16x128xf32> to vector<16x128xf32>
    %6 = vector.extract_strided_slice %1 {offsets = [1, 0, 0], sizes = [1, 16, 128], strides = [1, 1, 1]} : vector<4x16x128xf32> to vector<1x16x128xf32>
    %7 = vector.shape_cast %6 : vector<1x16x128xf32> to vector<16x128xf32>
    %8 = vector.extract_strided_slice %1 {offsets = [2, 0, 0], sizes = [1, 16, 128], strides = [1, 1, 1]} : vector<4x16x128xf32> to vector<1x16x128xf32>
    %9 = vector.shape_cast %8 : vector<1x16x128xf32> to vector<16x128xf32>
    %10 = vector.extract_strided_slice %1 {offsets = [3, 0, 0], sizes = [1, 16, 128], strides = [1, 1, 1]} : vector<4x16x128xf32> to vector<1x16x128xf32>
    %11 = vector.shape_cast %10 : vector<1x16x128xf32> to vector<16x128xf32>
    %12 = vector.extract_strided_slice %3 {offsets = [0, 0, 0], sizes = [1, 16, 128], strides = [1, 1, 1]} : vector<4x16x128xf32> to vector<1x16x128xf32>
    %13 = vector.shape_cast %12 : vector<1x16x128xf32> to vector<16x128xf32>
    %14 = vector.extract_strided_slice %3 {offsets = [1, 0, 0], sizes = [1, 16, 128], strides = [1, 1, 1]} : vector<4x16x128xf32> to vector<1x16x128xf32>
    %15 = vector.shape_cast %14 : vector<1x16x128xf32> to vector<16x128xf32>
    %16 = vector.extract_strided_slice %3 {offsets = [2, 0, 0], sizes = [1, 16, 128], strides = [1, 1, 1]} : vector<4x16x128xf32> to vector<1x16x128xf32>
    %17 = vector.shape_cast %16 : vector<1x16x128xf32> to vector<16x128xf32>
    %18 = vector.extract_strided_slice %3 {offsets = [3, 0, 0], sizes = [1, 16, 128], strides = [1, 1, 1]} : vector<4x16x128xf32> to vector<1x16x128xf32>
    %19 = vector.shape_cast %18 : vector<1x16x128xf32> to vector<16x128xf32>
    %20 = arith.mulf %13, %13 : vector<16x128xf32>
    %21 = arith.mulf %15, %15 : vector<16x128xf32>
    %22 = arith.addf %20, %21 : vector<16x128xf32>
    %23 = arith.mulf %17, %17 : vector<16x128xf32>
    %24 = arith.addf %22, %23 : vector<16x128xf32>
    %25 = arith.mulf %19, %19 : vector<16x128xf32>
    %26 = arith.addf %24, %25 : vector<16x128xf32>
    %cst = arith.constant 0.000000e+00 : f32
    %27 = vector.broadcast %cst : f32 to vector<16x128xf32>
    %28 = arith.cmpf ogt, %26, %27 : vector<16x128xf32>
    %29 = math.rsqrt %26 : vector<16x128xf32>
    %cst_5 = arith.constant 0.000000e+00 : f32
    %30 = vector.broadcast %cst_5 : f32 to vector<16x128xf32>
    %31 = arith.select %28, %29, %30 : vector<16x128xi1>, vector<16x128xf32>
    %32 = arith.mulf %13, %31 : vector<16x128xf32>
    %33 = arith.mulf %15, %31 : vector<16x128xf32>
    %34 = arith.mulf %17, %31 : vector<16x128xf32>
    %35 = arith.mulf %19, %31 : vector<16x128xf32>
    %36 = arith.mulf %5, %32 : vector<16x128xf32>
    %37 = arith.mulf %7, %33 : vector<16x128xf32>
    %38 = arith.subf %36, %37 : vector<16x128xf32>
    %39 = arith.mulf %9, %34 : vector<16x128xf32>
    %40 = arith.subf %38, %39 : vector<16x128xf32>
    %41 = arith.mulf %11, %35 : vector<16x128xf32>
    %42 = arith.subf %40, %41 : vector<16x128xf32>
    %43 = arith.mulf %7, %32 : vector<16x128xf32>
    %44 = arith.mulf %5, %33 : vector<16x128xf32>
    %45 = arith.addf %43, %44 : vector<16x128xf32>
    %46 = arith.mulf %11, %34 : vector<16x128xf32>
    %47 = arith.subf %45, %46 : vector<16x128xf32>
    %48 = arith.mulf %9, %35 : vector<16x128xf32>
    %49 = arith.addf %47, %48 : vector<16x128xf32>
    %50 = arith.mulf %9, %32 : vector<16x128xf32>
    %51 = arith.mulf %11, %33 : vector<16x128xf32>
    %52 = arith.addf %50, %51 : vector<16x128xf32>
    %53 = arith.mulf %5, %34 : vector<16x128xf32>
    %54 = arith.addf %52, %53 : vector<16x128xf32>
    %55 = arith.mulf %7, %35 : vector<16x128xf32>
    %56 = arith.subf %54, %55 : vector<16x128xf32>
    %57 = arith.mulf %11, %32 : vector<16x128xf32>
    %58 = arith.mulf %9, %33 : vector<16x128xf32>
    %59 = arith.subf %57, %58 : vector<16x128xf32>
    %60 = arith.mulf %7, %34 : vector<16x128xf32>
    %61 = arith.addf %59, %60 : vector<16x128xf32>
    %62 = arith.mulf %5, %35 : vector<16x128xf32>
    %63 = arith.addf %61, %62 : vector<16x128xf32>
    %c0_6 = arith.constant 0 : index
    %c0_7 = arith.constant 0 : index
    %64 = vector.load %arg3[%c0_6, %c0_7] : memref<8x128xf32, #tpu.memory_space<vmem>>, vector<1x128xf32>
    %cst_8 = arith.constant 1.250000e-01 : f32
    %65 = vector.broadcast %cst_8 : f32 to vector<1x128xf32>
    %66 = arith.mulf %64, %65 : vector<1x128xf32>
    %c4 = arith.constant 4 : index
    %c0_9 = arith.constant 0 : index
    %67 = vector.load %arg3[%c4, %c0_9] : memref<8x128xf32, #tpu.memory_space<vmem>>, vector<1x128xf32>
    %cst_10 = arith.constant 1.250000e-01 : f32
    %68 = vector.broadcast %cst_10 : f32 to vector<1x128xf32>
    %69 = arith.mulf %67, %68 : vector<1x128xf32>
    %70 = arith.mulf %66, %66 : vector<1x128xf32>
    %71 = arith.subf %69, %70 : vector<1x128xf32>
    %cst_11 = arith.constant 0.000000e+00 : f32
    %72 = vector.broadcast %cst_11 : f32 to vector<1x128xf32>
    %73 = arith.maximumf %71, %72 : vector<1x128xf32>
    %74 = vector.broadcast %66 : vector<1x128xf32> to vector<16x128xf32>
    %75 = arith.subf %42, %74 : vector<16x128xf32>
    %cst_12 = arith.constant 9.99999974E-6 : f32
    %76 = vector.broadcast %cst_12 : f32 to vector<1x128xf32>
    %77 = arith.addf %73, %76 : vector<1x128xf32>
    %78 = math.rsqrt %77 : vector<1x128xf32>
    %79 = vector.broadcast %78 : vector<1x128xf32> to vector<16x128xf32>
    %80 = arith.mulf %75, %79 : vector<16x128xf32>
    %c0_13 = arith.constant 0 : index
    %c0_14 = arith.constant 0 : index
    %81 = vector.load %arg4[%c0_13, %c0_14] : memref<8x128xf32, #tpu.memory_space<vmem>>, vector<1x128xf32>
    %82 = vector.broadcast %81 : vector<1x128xf32> to vector<16x128xf32>
    %83 = arith.mulf %80, %82 : vector<16x128xf32>
    %c4_15 = arith.constant 4 : index
    %c0_16 = arith.constant 0 : index
    %84 = vector.load %arg4[%c4_15, %c0_16] : memref<8x128xf32, #tpu.memory_space<vmem>>, vector<1x128xf32>
    %85 = vector.broadcast %84 : vector<1x128xf32> to vector<16x128xf32>
    %86 = arith.addf %83, %85 : vector<16x128xf32>
    %87 = arith.truncf %86 : vector<16x128xf32> to vector<16x128xbf16>
    %c0_17 = arith.constant 0 : index
    %c0_18 = arith.constant 0 : index
    %c0_19 = arith.constant 0 : index
    %88 = vector.load %arg5[%c0_17, %c0_18, %c0_19] : memref<4x16x128xbf16, #tpu.memory_space<vmem>>, vector<1x16x128xbf16>
    %89 = vector.shape_cast %88 : vector<1x16x128xbf16> to vector<16x128xbf16>
    %90 = vector.shape_cast %87 : vector<16x128xbf16> to vector<1x16x128xbf16>
    tpu.vector_store %arg5[%c0_17, %c0_18, %c0_19], %90 {strides = array<i32>} : memref<4x16x128xbf16, #tpu.memory_space<vmem>>, vector<1x16x128xbf16>,
    %c1 = arith.constant 1 : index
    %c0_20 = arith.constant 0 : index
    %91 = vector.load %arg3[%c1, %c0_20] : memref<8x128xf32, #tpu.memory_space<vmem>>, vector<1x128xf32>
    %cst_21 = arith.constant 1.250000e-01 : f32
    %92 = vector.broadcast %cst_21 : f32 to vector<1x128xf32>
    %93 = arith.mulf %91, %92 : vector<1x128xf32>
    %c5 = arith.constant 5 : index
    %c0_22 = arith.constant 0 : index
    %94 = vector.load %arg3[%c5, %c0_22] : memref<8x128xf32, #tpu.memory_space<vmem>>, vector<1x128xf32>
    %cst_23 = arith.constant 1.250000e-01 : f32
    %95 = vector.broadcast %cst_23 : f32 to vector<1x128xf32>
    %96 = arith.mulf %94, %95 : vector<1x128xf32>
    %97 = arith.mulf %93, %93 : vector<1x128xf32>
    %98 = arith.subf %96, %97 : vector<1x128xf32>
    %cst_24 = arith.constant 0.000000e+00 : f32
    %99 = vector.broadcast %cst_24 : f32 to vector<1x128xf32>
    %100 = arith.maximumf %98, %99 : vector<1x128xf32>
    %101 = vector.broadcast %93 : vector<1x128xf32> to vector<16x128xf32>
    %102 = arith.subf %49, %101 : vector<16x128xf32>
    %cst_25 = arith.constant 9.99999974E-6 : f32
    %103 = vector.broadcast %cst_25 : f32 to vector<1x128xf32>
    %104 = arith.addf %100, %103 : vector<1x128xf32>
    %105 = math.rsqrt %104 : vector<1x128xf32>
    %106 = vector.broadcast %105 : vector<1x128xf32> to vector<16x128xf32>
    %107 = arith.mulf %102, %106 : vector<16x128xf32>
    %c1_26 = arith.constant 1 : index
    %c0_27 = arith.constant 0 : index
    %108 = vector.load %arg4[%c1_26, %c0_27] : memref<8x128xf32, #tpu.memory_space<vmem>>, vector<1x128xf32>
    %109 = vector.broadcast %108 : vector<1x128xf32> to vector<16x128xf32>
    %110 = arith.mulf %107, %109 : vector<16x128xf32>
    %c5_28 = arith.constant 5 : index
    %c0_29 = arith.constant 0 : index
    %111 = vector.load %arg4[%c5_28, %c0_29] : memref<8x128xf32, #tpu.memory_space<vmem>>, vector<1x128xf32>
    %112 = vector.broadcast %111 : vector<1x128xf32> to vector<16x128xf32>
    %113 = arith.addf %110, %112 : vector<16x128xf32>
    %114 = arith.truncf %113 : vector<16x128xf32> to vector<16x128xbf16>
    %c1_30 = arith.constant 1 : index
    %c0_31 = arith.constant 0 : index
    %c0_32 = arith.constant 0 : index
    %115 = vector.load %arg5[%c1_30, %c0_31, %c0_32] : memref<4x16x128xbf16, #tpu.memory_space<vmem>>, vector<1x16x128xbf16>
    %116 = vector.shape_cast %115 : vector<1x16x128xbf16> to vector<16x128xbf16>
    %117 = vector.shape_cast %114 : vector<16x128xbf16> to vector<1x16x128xbf16>
    tpu.vector_store %arg5[%c1_30, %c0_31, %c0_32], %117 {strides = array<i32>} : memref<4x16x128xbf16, #tpu.memory_space<vmem>>, vector<1x16x128xbf16>,
    %c2 = arith.constant 2 : index
    %c0_33 = arith.constant 0 : index
    %118 = vector.load %arg3[%c2, %c0_33] : memref<8x128xf32, #tpu.memory_space<vmem>>, vector<1x128xf32>
    %cst_34 = arith.constant 1.250000e-01 : f32
    %119 = vector.broadcast %cst_34 : f32 to vector<1x128xf32>
    %120 = arith.mulf %118, %119 : vector<1x128xf32>
    %c6 = arith.constant 6 : index
    %c0_35 = arith.constant 0 : index
    %121 = vector.load %arg3[%c6, %c0_35] : memref<8x128xf32, #tpu.memory_space<vmem>>, vector<1x128xf32>
    %cst_36 = arith.constant 1.250000e-01 : f32
    %122 = vector.broadcast %cst_36 : f32 to vector<1x128xf32>
    %123 = arith.mulf %121, %122 : vector<1x128xf32>
    %124 = arith.mulf %120, %120 : vector<1x128xf32>
    %125 = arith.subf %123, %124 : vector<1x128xf32>
    %cst_37 = arith.constant 0.000000e+00 : f32
    %126 = vector.broadcast %cst_37 : f32 to vector<1x128xf32>
    %127 = arith.maximumf %125, %126 : vector<1x128xf32>
    %128 = vector.broadcast %120 : vector<1x128xf32> to vector<16x128xf32>
    %129 = arith.subf %56, %128 : vector<16x128xf32>
    %cst_38 = arith.constant 9.99999974E-6 : f32
    %130 = vector.broadcast %cst_38 : f32 to vector<1x128xf32>
    %131 = arith.addf %127, %130 : vector<1x128xf32>
    %132 = math.rsqrt %131 : vector<1x128xf32>
    %133 = vector.broadcast %132 : vector<1x128xf32> to vector<16x128xf32>
    %134 = arith.mulf %129, %133 : vector<16x128xf32>
    %c2_39 = arith.constant 2 : index
    %c0_40 = arith.constant 0 : index
    %135 = vector.load %arg4[%c2_39, %c0_40] : memref<8x128xf32, #tpu.memory_space<vmem>>, vector<1x128xf32>
    %136 = vector.broadcast %135 : vector<1x128xf32> to vector<16x128xf32>
    %137 = arith.mulf %134, %136 : vector<16x128xf32>
    %c6_41 = arith.constant 6 : index
    %c0_42 = arith.constant 0 : index
    %138 = vector.load %arg4[%c6_41, %c0_42] : memref<8x128xf32, #tpu.memory_space<vmem>>, vector<1x128xf32>
    %139 = vector.broadcast %138 : vector<1x128xf32> to vector<16x128xf32>
    %140 = arith.addf %137, %139 : vector<16x128xf32>
    %141 = arith.truncf %140 : vector<16x128xf32> to vector<16x128xbf16>
    %c2_43 = arith.constant 2 : index
    %c0_44 = arith.constant 0 : index
    %c0_45 = arith.constant 0 : index
    %142 = vector.load %arg5[%c2_43, %c0_44, %c0_45] : memref<4x16x128xbf16, #tpu.memory_space<vmem>>, vector<1x16x128xbf16>
    %143 = vector.shape_cast %142 : vector<1x16x128xbf16> to vector<16x128xbf16>
    %144 = vector.shape_cast %141 : vector<16x128xbf16> to vector<1x16x128xbf16>
    tpu.vector_store %arg5[%c2_43, %c0_44, %c0_45], %144 {strides = array<i32>} : memref<4x16x128xbf16, #tpu.memory_space<vmem>>, vector<1x16x128xbf16>,
    %c3 = arith.constant 3 : index
    %c0_46 = arith.constant 0 : index
    %145 = vector.load %arg3[%c3, %c0_46] : memref<8x128xf32, #tpu.memory_space<vmem>>, vector<1x128xf32>
    %cst_47 = arith.constant 1.250000e-01 : f32
    %146 = vector.broadcast %cst_47 : f32 to vector<1x128xf32>
    %147 = arith.mulf %145, %146 : vector<1x128xf32>
    %c7 = arith.constant 7 : index
    %c0_48 = arith.constant 0 : index
    %148 = vector.load %arg3[%c7, %c0_48] : memref<8x128xf32, #tpu.memory_space<vmem>>, vector<1x128xf32>
    %cst_49 = arith.constant 1.250000e-01 : f32
    %149 = vector.broadcast %cst_49 : f32 to vector<1x128xf32>
    %150 = arith.mulf %148, %149 : vector<1x128xf32>
    %151 = arith.mulf %147, %147 : vector<1x128xf32>
    %152 = arith.subf %150, %151 : vector<1x128xf32>
    %cst_50 = arith.constant 0.000000e+00 : f32
    %153 = vector.broadcast %cst_50 : f32 to vector<1x128xf32>
    %154 = arith.maximumf %152, %153 : vector<1x128xf32>
    %155 = vector.broadcast %147 : vector<1x128xf32> to vector<16x128xf32>
    %156 = arith.subf %63, %155 : vector<16x128xf32>
    %cst_51 = arith.constant 9.99999974E-6 : f32
    %157 = vector.broadcast %cst_51 : f32 to vector<1x128xf32>
    %158 = arith.addf %154, %157 : vector<1x128xf32>
    %159 = math.rsqrt %158 : vector<1x128xf32>
    %160 = vector.broadcast %159 : vector<1x128xf32> to vector<16x128xf32>
    %161 = arith.mulf %156, %160 : vector<16x128xf32>
    %c3_52 = arith.constant 3 : index
    %c0_53 = arith.constant 0 : index
    %162 = vector.load %arg4[%c3_52, %c0_53] : memref<8x128xf32, #tpu.memory_space<vmem>>, vector<1x128xf32>
    %163 = vector.broadcast %162 : vector<1x128xf32> to vector<16x128xf32>
    %164 = arith.mulf %161, %163 : vector<16x128xf32>
    %c7_54 = arith.constant 7 : index
    %c0_55 = arith.constant 0 : index
    %165 = vector.load %arg4[%c7_54, %c0_55] : memref<8x128xf32, #tpu.memory_space<vmem>>, vector<1x128xf32>
    %166 = vector.broadcast %165 : vector<1x128xf32> to vector<16x128xf32>
    %167 = arith.addf %164, %166 : vector<16x128xf32>
    %168 = arith.truncf %167 : vector<16x128xf32> to vector<16x128xbf16>
    %c3_56 = arith.constant 3 : index
    %c0_57 = arith.constant 0 : index
    %c0_58 = arith.constant 0 : index
    %169 = vector.load %arg5[%c3_56, %c0_57, %c0_58] : memref<4x16x128xbf16, #tpu.memory_space<vmem>>, vector<1x16x128xbf16>
    %170 = vector.shape_cast %169 : vector<1x16x128xbf16> to vector<16x128xbf16>
    %171 = vector.shape_cast %168 : vector<16x128xbf16> to vector<1x16x128xbf16>
    tpu.vector_store %arg5[%c3_56, %c0_57, %c0_58], %171 {strides = array<i32>} : memref<4x16x128xbf16, #tpu.memory_space<vmem>>, vector<1x16x128xbf16>,
    return
  }
  func.func @transform_0(%arg0: i32) -> (i32, i32, i32) {
    %c0_i32 = arith.constant 0 : i32
    %c0_i32_0 = arith.constant 0 : i32
    %c0_i32_1 = arith.constant 0 : i32
    return %c0_i32, %arg0, %c0_i32_0 : i32, i32, i32
  }
  func.func @transform_1(%arg0: i32) -> (i32, i32, i32) {
    %c0_i32 = arith.constant 0 : i32
    %c0_i32_0 = arith.constant 0 : i32
    %c0_i32_1 = arith.constant 0 : i32
    return %c0_i32, %arg0, %c0_i32_0 : i32, i32, i32
  }
  func.func @transform_2(%arg0: i32) -> (i32, i32) {
    %c0_i32 = arith.constant 0 : i32
    %c0_i32_0 = arith.constant 0 : i32
    %c0_i32_1 = arith.constant 0 : i32
    return %c0_i32, %c0_i32_0 : i32, i32
  }
  func.func @transform_3(%arg0: i32) -> (i32, i32) {
    %c0_i32 = arith.constant 0 : i32
    %c0_i32_0 = arith.constant 0 : i32
    %c0_i32_1 = arith.constant 0 : i32
    return %c0_i32, %c0_i32_0 : i32, i32
  }
  func.func @transform_4(%arg0: i32) -> (i32, i32, i32) {
    %c0_i32 = arith.constant 0 : i32
    %c0_i32_0 = arith.constant 0 : i32
    %c0_i32_1 = arith.constant 0 : i32
    return %c0_i32, %arg0, %c0_i32_0 : i32, i32, i32
  }
}

module attributes {stable_mosaic.version = 11 : i64} {
  func.func @_mm_kernel_direct(%arg0: i32, %arg1: i32, %arg2: i32, %arg3: memref<16x256xbf16, #tpu.memory_space<vmem>>, %arg4: memref<256x256xbf16, #tpu.memory_space<vmem>>, %arg5: memref<16x256xf32, #tpu.memory_space<vmem>>) attributes {dimension_semantics = [#tpu.dimension_semantics<parallel>, #tpu.dimension_semantics<parallel>, #tpu.dimension_semantics<arbitrary>], iteration_bounds = array<i64: 1, 1, 1>, scalar_prefetch = 0 : i64, scratch_operands = 0 : i64, tpu.core_type = #tpu.core_type<tc>, window_params = [{transform_indices = @transform_0, window_bounds = array<i64: 16, 256>}, {transform_indices = @transform_1, window_bounds = array<i64: 256, 256>}, {transform_indices = @transform_2, window_bounds = array<i64: 16, 256>}]} {
    %c0 = arith.constant 0 : index
    %c0_0 = arith.constant 0 : index
    %0 = vector.load %arg3[%c0, %c0_0] : memref<16x256xbf16, #tpu.memory_space<vmem>>, vector<16x256xbf16>
    %c0_1 = arith.constant 0 : index
    %c0_2 = arith.constant 0 : index
    %1 = vector.load %arg4[%c0_1, %c0_2] : memref<256x256xbf16, #tpu.memory_space<vmem>>, vector<256x256xbf16>
    %cst = arith.constant dense<0.000000e+00> : vector<16x256xf32>
    %2 = tpu.matmul %0, %1, %cst {dimension_numbers = #tpu.dot_dimension_numbers<[1], [1], [0], [0], [0, 0, 1, 0], [], []>} : vector<16x256xbf16>, vector<256x256xbf16>, vector<16x256xf32> -> vector<16x256xf32>
    %3 = arith.negf %2 : vector<16x256xf32>
    %4 = math.exp %3 : vector<16x256xf32>
    %cst_3 = arith.constant 1.000000e+00 : f32
    %5 = vector.broadcast %cst_3 : f32 to vector<16x256xf32>
    %6 = arith.addf %5, %4 : vector<16x256xf32>
    %7 = arith.divf %5, %6 : vector<16x256xf32>
    %c0_4 = arith.constant 0 : index
    %c0_5 = arith.constant 0 : index
    %8 = vector.load %arg5[%c0_4, %c0_5] : memref<16x256xf32, #tpu.memory_space<vmem>>, vector<16x256xf32>
    tpu.vector_store %arg5[%c0_4, %c0_5], %7 {strides = array<i32>} : memref<16x256xf32, #tpu.memory_space<vmem>>, vector<16x256xf32>,
    return
  }
  func.func @transform_0(%arg0: i32, %arg1: i32, %arg2: i32) -> (i32, i32) {
    %c0_i32 = arith.constant 0 : i32
    return %arg0, %arg2 : i32, i32
  }
  func.func @transform_1(%arg0: i32, %arg1: i32, %arg2: i32) -> (i32, i32) {
    %c0_i32 = arith.constant 0 : i32
    return %arg1, %arg2 : i32, i32
  }
  func.func @transform_2(%arg0: i32, %arg1: i32, %arg2: i32) -> (i32, i32) {
    %c0_i32 = arith.constant 0 : i32
    return %arg0, %arg1 : i32, i32
  }
}

</mosaic_0001>

<llo_original>
// kernel: noge_forward.9
$region0: #{noge_forward.9}
  #allocation0 [shape = 'u32[]', space=smem, size = 0x4, offset = 0x4, fixed_abs, tag = 'smem constant byte address 0x4 - core index']
  #allocation1 [shape = 'u32[72,128]{1,0:T(1,128)}', space=vmem, size = 0x9000, scoped, tag = 'internal scratch']
  %s0 = inlined_call_operand.vmem [shape: bf16[256,256], index: 0, kind: input, shape index: {}]
  %s1 = inlined_call_operand.vmem [shape: f32[8,256], index: 1, kind: output, shape index: {}]
  %s2 = sld [smem:[#allocation0]]
  $region18: #{noge_forward.9} parent=0
    _
  %s4 = ssub.s32 1, %s2
  %s5 = scalar_select 0, %s4, %s2
  // Predicated region
  $region2: #{noge_forward.9} parent=0 // pred_check
    _
  $region3: #{noge_forward.9} parent=0 // pred_check_branch
    %7 = sbr.rel (0) target = $region5
  $region4: #{noge_forward.9} parent=0 // pred_region
    _
  $region5: #{noge_forward.9} parent=0 // pred_fallthru
    _
  %p8 = scmp.eq.s32.totalorder 0, 0
  // Predicated region
  $region6: #{noge_forward.9} parent=0 // pred_check
    %p9 = pneg %p8
  $region7: #{noge_forward.9} parent=0 // pred_check_branch
    %11 = sbr.rel (%p9) target = $region9
  $region8: #{noge_forward.9} parent=0 // pred_region
    %12 = vst [vmem:[%s1] sm:$0xff] 0.0
    %13 = vst [vmem:[%s1 + $0x8] sm:$0xff] 0.0
  $region9: #{noge_forward.9} parent=0 // pred_fallthru
    _
  %v14 = vld [vmem:[%s0] sm:$0xff]
  %v15 = vld [vmem:[%s0 + $0x8] sm:$0xff]
  %v16 = vld [vmem:[%s0 + $0x10] sm:$0xff]
  %v17 = vld [vmem:[%s0 + $0x18] sm:$0xff]
  %v18 = vld [vmem:[%s0 + $0x20] sm:$0xff]
  %v19 = vld [vmem:[%s0 + $0x28] sm:$0xff]
  %v20 = vld [vmem:[%s0 + $0x30] sm:$0xff]
  %v21 = vld [vmem:[%s0 + $0x38] sm:$0xff]
  %v22 = vld [vmem:[%s0 + $0x40] sm:$0xff]
  %v23 = vld [vmem:[%s0 + $0x48] sm:$0xff]
  %v24 = vld [vmem:[%s0 + $0x50] sm:$0xff]
  %v25 = vld [vmem:[%s0 + $0x58] sm:$0xff]
  %v26 = vld [vmem:[%s0 + $0x60] sm:$0xff]
  %v27 = vld [vmem:[%s0 + $0x68] sm:$0xff]
  %v28 = vld [vmem:[%s0 + $0x70] sm:$0xff]
  %v29 = vld [vmem:[%s0 + $0x78] sm:$0xff]
  %v30 = vld [vmem:[%s0 + $0x80] sm:$0xff]
  %v31 = vld [vmem:[%s0 + $0x88] sm:$0xff]
  %v32 = vld [vmem:[%s0 + $0x90] sm:$0xff]
  %v33 = vld [vmem:[%s0 + $0x98] sm:$0xff]
  %v34 = vld [vmem:[%s0 + $0xa0] sm:$0xff]
  %v35 = vld [vmem:[%s0 + $0xa8] sm:$0xff]
  %v36 = vld [vmem:[%s0 + $0xb0] sm:$0xff]
  %v37 = vld [vmem:[%s0 + $0xb8] sm:$0xff]
  %v38 = vld [vmem:[%s0 + $0xc0] sm:$0xff]
  %v39 = vld [vmem:[%s0 + $0xc8] sm:$0xff]
  %v40 = vld [vmem:[%s0 + $0xd0] sm:$0xff]
  %v41 = vld [vmem:[%s0 + $0xd8] sm:$0xff]
  %v42 = vld [vmem:[%s0 + $0xe0] sm:$0xff]
  %v43 = vld [vmem:[%s0 + $0xe8] sm:$0xff]
  %v44 = vld [vmem:[%s0 + $0xf0] sm:$0xff]
  %v45 = vld [vmem:[%s0 + $0xf8] sm:$0xff]
  %v46 = vunpack.c.l.bf16 %v14
  %v47 = vunpack.c.h.bf16 %v14
  %v48 = vunpack.c.l.bf16 %v15
  %v49 = vunpack.c.h.bf16 %v15
  %v50 = vunpack.c.l.bf16 %v16
  %v51 = vunpack.c.h.bf16 %v16
  %v52 = vunpack.c.l.bf16 %v17
  %v53 = vunpack.c.h.bf16 %v17
  %v54 = vunpack.c.l.bf16 %v18
  %v55 = vunpack.c.h.bf16 %v18
  %v56 = vunpack.c.l.bf16 %v19
  %v57 = vunpack.c.h.bf16 %v19
  %v58 = vunpack.c.l.bf16 %v20
  %v59 = vunpack.c.h.bf16 %v20
  %v60 = vunpack.c.l.bf16 %v21
  %v61 = vunpack.c.h.bf16 %v21
  %v62 = vunpack.c.l.bf16 %v22
  %v63 = vunpack.c.h.bf16 %v22
  %v64 = vunpack.c.l.bf16 %v23
  %v65 = vunpack.c.h.bf16 %v23
  %v66 = vunpack.c.l.bf16 %v24
  %v67 = vunpack.c.h.bf16 %v24
  %v68 = vunpack.c.l.bf16 %v25
  %v69 = vunpack.c.h.bf16 %v25
  %v70 = vunpack.c.l.bf16 %v26
  %v71 = vunpack.c.h.bf16 %v26
  %v72 = vunpack.c.l.bf16 %v27
  %v73 = vunpack.c.h.bf16 %v27
  %v74 = vunpack.c.l.bf16 %v28
  %v75 = vunpack.c.h.bf16 %v28
  %v76 = vunpack.c.l.bf16 %v29
  %v77 = vunpack.c.h.bf16 %v29
  %v78 = vunpack.c.l.bf16 %v30
  %v79 = vunpack.c.h.bf16 %v30
  %v80 = vunpack.c.l.bf16 %v31
  %v81 = vunpack.c.h.bf16 %v31
  %v82 = vunpack.c.l.bf16 %v32
  %v83 = vunpack.c.h.bf16 %v32
  %v84 = vunpack.c.l.bf16 %v33
  %v85 = vunpack.c.h.bf16 %v33
  %v86 = vunpack.c.l.bf16 %v34
  %v87 = vunpack.c.h.bf16 %v34
  %v88 = vunpack.c.l.bf16 %v35
  %v89 = vunpack.c.h.bf16 %v35
  %v90 = vunpack.c.l.bf16 %v36
  %v91 = vunpack.c.h.bf16 %v36
  %v92 = vunpack.c.l.bf16 %v37
  %v93 = vunpack.c.h.bf16 %v37
  %v94 = vunpack.c.l.bf16 %v38
  %v95 = vunpack.c.h.bf16 %v38
  %v96 = vunpack.c.l.bf16 %v39
  %v97 = vunpack.c.h.bf16 %v39
  %v98 = vunpack.c.l.bf16 %v40
  %v99 = vunpack.c.h.bf16 %v40
  %v100 = vunpack.c.l.bf16 %v41
  %v101 = vunpack.c.h.bf16 %v41
  %v102 = vunpack.c.l.bf16 %v42
  %v103 = vunpack.c.h.bf16 %v42
  %v104 = vunpack.c.l.bf16 %v43
  %v105 = vunpack.c.h.bf16 %v43
  %v106 = vunpack.c.l.bf16 %v44
  %v107 = vunpack.c.h.bf16 %v44
  %v108 = vunpack.c.l.bf16 %v45
  %v109 = vunpack.c.h.bf16 %v45
  %v110 = vld [vmem:[%s1] ss:$8 sm:$0x3]
  %v111 = vadd.f32 %v46, %v48
  %v112 = vadd.f32 %v111, %v50
  %v113 = vadd.f32 %v112, %v52
  %v114 = vadd.f32 %v113, %v54
  %v115 = vadd.f32 %v114, %v56
  %v116 = vadd.f32 %v115, %v58
  %v117 = vadd.f32 %v116, %v60
  %v118 = vadd.f32 %v117, %v62
  %v119 = vadd.f32 %v118, %v64
  %v120 = vadd.f32 %v119, %v66
  %v121 = vadd.f32 %v120, %v68
  %v122 = vadd.f32 %v121, %v70
  %v123 = vadd.f32 %v122, %v72
  %v124 = vadd.f32 %v123, %v74
  %v125 = vadd.f32 %v124, %v76
  %v126 = vadd.f32 %v125, %v78
  %v127 = vadd.f32 %v126, %v80
  %v128 = vadd.f32 %v127, %v82
  %v129 = vadd.f32 %v128, %v84
  %v130 = vadd.f32 %v129, %v86
  %v131 = vadd.f32 %v130, %v88
  %v132 = vadd.f32 %v131, %v90
  %v133 = vadd.f32 %v132, %v92
  %v134 = vadd.f32 %v133, %v94
  %v135 = vadd.f32 %v134, %v96
  %v136 = vadd.f32 %v135, %v98
  %v137 = vadd.f32 %v136, %v100
  %v138 = vadd.f32 %v137, %v102
  %v139 = vadd.f32 %v138, %v104
  %v140 = vadd.f32 %v139, %v106
  %v141 = vadd.f32 %v140, %v108
  %v142 = vrot.slane %v141, 4
  %v143 = vadd.f32 %v141, %v142
  %v144 = vrot.slane %v143, 2
  %v145 = vadd.f32 %v143, %v144
  %v146 = vrot.slane %v145, 1
  %v147 = vadd.f32 %v145, %v146
  %v148 = vadd.f32 %v47, %v49
  %v149 = vadd.f32 %v148, %v51
  %v150 = vadd.f32 %v149, %v53
  %v151 = vadd.f32 %v150, %v55
  %v152 = vadd.f32 %v151, %v57
  %v153 = vadd.f32 %v152, %v59
  %v154 = vadd.f32 %v153, %v61
  %v155 = vadd.f32 %v154, %v63
  %v156 = vadd.f32 %v155, %v65
  %v157 = vadd.f32 %v156, %v67
  %v158 = vadd.f32 %v157, %v69
  %v159 = vadd.f32 %v158, %v71
  %v160 = vadd.f32 %v159, %v73
  %v161 = vadd.f32 %v160, %v75
  %v162 = vadd.f32 %v161, %v77
  %v163 = vadd.f32 %v162, %v79
  %v164 = vadd.f32 %v163, %v81
  %v165 = vadd.f32 %v164, %v83
  %v166 = vadd.f32 %v165, %v85
  %v167 = vadd.f32 %v166, %v87
  %v168 = vadd.f32 %v167, %v89
  %v169 = vadd.f32 %v168, %v91
  %v170 = vadd.f32 %v169, %v93
  %v171 = vadd.f32 %v170, %v95
  %v172 = vadd.f32 %v171, %v97
  %v173 = vadd.f32 %v172, %v99
  %v174 = vadd.f32 %v173, %v101
  %v175 = vadd.f32 %v174, %v103
  %v176 = vadd.f32 %v175, %v105
  %v177 = vadd.f32 %v176, %v107
  %v178 = vadd.f32 %v177, %v109
  %v179 = vrot.slane %v178, 4
  %v180 = vadd.f32 %v178, %v179
  %v181 = vrot.slane %v180, 2
  %v182 = vadd.f32 %v180, %v181
  %v183 = vrot.slane %v182, 1
  %v184 = vadd.f32 %v182, %v183
  %v187 = vrot.slane %v184, 7
  %vm188 = vcmask 1040384
  %v189 = vsel %vm188, %v147, %v187
  %v191 = vadd.f32 %v110, %v189
  %v192 = vlaneseq
  %vm193 = vcmp.ge.s32.totalorder %v192, 0
  %vm194 = vcmp.lt.s32.totalorder %v192, 256
  %vm195 = vmand %vm193, %vm194
  %196 = vst.msk [vmem:[%s1] ss:$8 sm:$0x3] %vm195, %v191
  %197 = vst.msk [vmem:[%s1] ss:$8 sm:$0x0] %vm195, %v191
  %s198 = scalar_lea.vmem %s1, 1
  %v199 = vld [vmem:[%s198] ss:$8 sm:$0x3]
  %v200 = vmul.f32 %v46, %v46
  %v201 = vmul.f32 %v47, %v47
  %v202 = vmul.f32 %v48, %v48
  %v203 = vmul.f32 %v49, %v49
  %v204 = vmul.f32 %v50, %v50
  %v205 = vmul.f32 %v51, %v51
  %v206 = vmul.f32 %v52, %v52
  %v207 = vmul.f32 %v53, %v53
  %v208 = vmul.f32 %v54, %v54
  %v209 = vmul.f32 %v55, %v55
  %v210 = vmul.f32 %v56, %v56
  %v211 = vmul.f32 %v57, %v57
  %v212 = vmul.f32 %v58, %v58
  %v213 = vmul.f32 %v59, %v59
  %v214 = vmul.f32 %v60, %v60
  %v215 = vmul.f32 %v61, %v61
  %v216 = vmul.f32 %v62, %v62
  %v217 = vmul.f32 %v63, %v63
  %v218 = vmul.f32 %v64, %v64
  %v219 = vmul.f32 %v65, %v65
  %v220 = vmul.f32 %v66, %v66
  %v221 = vmul.f32 %v67, %v67
  %v222 = vmul.f32 %v68, %v68
  %v223 = vmul.f32 %v69, %v69
  %v224 = vmul.f32 %v70, %v70
  %v225 = vmul.f32 %v71, %v71
  %v226 = vmul.f32 %v72, %v72
  %v227 = vmul.f32 %v73, %v73
  %v228 = vmul.f32 %v74, %v74
  %v229 = vmul.f32 %v75, %v75
  %v230 = vmul.f32 %v76, %v76
  %v231 = vmul.f32 %v77, %v77
  %v232 = vmul.f32 %v78, %v78
  %v233 = vmul.f32 %v79, %v79
  %v234 = vmul.f32 %v80, %v80
  %v235 = vmul.f32 %v81, %v81
  %v236 = vmul.f32 %v82, %v82
  %v237 = vmul.f32 %v83, %v83
  %v238 = vmul.f32 %v84, %v84
  %v239 = vmul.f32 %v85, %v85
  %v240 = vmul.f32 %v86, %v86
  %v241 = vmul.f32 %v87, %v87
  %v242 = vmul.f32 %v88, %v88
  %v243 = vmul.f32 %v89, %v89
  %v244 = vmul.f32 %v90, %v90
  %v245 = vmul.f32 %v91, %v91
  %v246 = vmul.f32 %v92, %v92
  %v247 = vmul.f32 %v93, %v93
  %v248 = vmul.f32 %v94, %v94
  %v249 = vmul.f32 %v95, %v95
  %v250 = vmul.f32 %v96, %v96
  %v251 = vmul.f32 %v97, %v97
  %v252 = vmul.f32 %v98, %v98
  %v253 = vmul.f32 %v99, %v99
  %v254 = vmul.f32 %v100, %v100
  %v255 = vmul.f32 %v101, %v101
  %v256 = vmul.f32 %v102, %v102
  %v257 = vmul.f32 %v103, %v103
  %v258 = vmul.f32 %v104, %v104
  %v259 = vmul.f32 %v105, %v105
  %v260 = vmul.f32 %v106, %v106
  %v261 = vmul.f32 %v107, %v107
  %v262 = vmul.f32 %v108, %v108
  %v263 = vmul.f32 %v109, %v109
  %v264 = vadd.f32 %v200, %v202
  %v265 = vadd.f32 %v264, %v204
  %v266 = vadd.f32 %v265, %v206
  %v267 = vadd.f32 %v266, %v208
  %v268 = vadd.f32 %v267, %v210
  %v269 = vadd.f32 %v268, %v212
  %v270 = vadd.f32 %v269, %v214
  %v271 = vadd.f32 %v270, %v216
  %v272 = vadd.f32 %v271, %v218
  %v273 = vadd.f32 %v272, %v220
  %v274 = vadd.f32 %v273, %v222
  %v275 = vadd.f32 %v274, %v224
  %v276 = vadd.f32 %v275, %v226
  %v277 = vadd.f32 %v276, %v228
  %v278 = vadd.f32 %v277, %v230
  %v279 = vadd.f32 %v278, %v232
  %v280 = vadd.f32 %v279, %v234
  %v281 = vadd.f32 %v280, %v236
  %v282 = vadd.f32 %v281, %v238
  %v283 = vadd.f32 %v282, %v240
  %v284 = vadd.f32 %v283, %v242
  %v285 = vadd.f32 %v284, %v244
  %v286 = vadd.f32 %v285, %v246
  %v287 = vadd.f32 %v286, %v248
  %v288 = vadd.f32 %v287, %v250
  %v289 = vadd.f32 %v288, %v252
  %v290 = vadd.f32 %v289, %v254
  %v291 = vadd.f32 %v290, %v256
  %v292 = vadd.f32 %v291, %v258
  %v293 = vadd.f32 %v292, %v260
  %v294 = vadd.f32 %v293, %v262
  %v295 = vrot.slane %v294, 4
  %v296 = vadd.f32 %v294, %v295
  %v297 = vrot.slane %v296, 2
  %v298 = vadd.f32 %v296, %v297
  %v299 = vrot.slane %v298, 1
  %v300 = vadd.f32 %v298, %v299
  %v301 = vadd.f32 %v201, %v203
  %v302 = vadd.f32 %v301, %v205
  %v303 = vadd.f32 %v302, %v207
  %v304 = vadd.f32 %v303, %v209
  %v305 = vadd.f32 %v304, %v211
  %v306 = vadd.f32 %v305, %v213
  %v307 = vadd.f32 %v306, %v215
  %v308 = vadd.f32 %v307, %v217
  %v309 = vadd.f32 %v308, %v219
  %v310 = vadd.f32 %v309, %v221
  %v311 = vadd.f32 %v310, %v223
  %v312 = vadd.f32 %v311, %v225
  %v313 = vadd.f32 %v312, %v227
  %v314 = vadd.f32 %v313, %v229
  %v315 = vadd.f32 %v314, %v231
  %v316 = vadd.f32 %v315, %v233
  %v317 = vadd.f32 %v316, %v235
  %v318 = vadd.f32 %v317, %v237
  %v319 = vadd.f32 %v318, %v239
  %v320 = vadd.f32 %v319, %v241
  %v321 = vadd.f32 %v320, %v243
  %v322 = vadd.f32 %v321, %v245
  %v323 = vadd.f32 %v322, %v247
  %v324 = vadd.f32 %v323, %v249
  %v325 = vadd.f32 %v324, %v251
  %v326 = vadd.f32 %v325, %v253
  %v327 = vadd.f32 %v326, %v255
  %v328 = vadd.f32 %v327, %v257
  %v329 = vadd.f32 %v328, %v259
  %v330 = vadd.f32 %v329, %v261
  %v331 = vadd.f32 %v330, %v263
  %v332 = vrot.slane %v331, 4
  %v333 = vadd.f32 %v331, %v332
  %v334 = vrot.slane %v333, 2
  %v335 = vadd.f32 %v333, %v334
  %v336 = vrot.slane %v335, 1
  %v337 = vadd.f32 %v335, %v336
  %v340 = vrot.slane %v337, 7
  %v341 = vsel %vm188, %v300, %v340
  %v343 = vadd.f32 %v199, %v341
  %344 = vst.msk [vmem:[%s198] ss:$8 sm:$0x3] %vm195, %v343
  %345 = vst.msk [vmem:[%s198] ss:$8 sm:$0x0] %vm195, %v343
  // Predicated region
  $region10: #{noge_forward.9} parent=0 // pred_check
    _
  $region11: #{noge_forward.9} parent=0 // pred_check_branch
    %347 = sbr.rel (0) target = $region13
  $region12: #{noge_forward.9} parent=0 // pred_region
    _
  $region13: #{noge_forward.9} parent=0 // pred_fallthru
    _
  // Predicated region
  $region14: #{noge_forward.9} parent=0 // pred_check
    _
  $region15: #{noge_forward.9} parent=0 // pred_check_branch
    %349 = sbr.rel (0) target = $region17
  $region16: #{noge_forward.9} parent=0 // pred_region
    _
  $region17: #{noge_forward.9} parent=0 // pred_fallthru
    _

// kernel: noge_forward.10
$region0: #{noge_forward.10}
  #allocation0 [shape = 'u32[]', space=smem, size = 0x4, offset = 0x4, fixed_abs, tag = 'smem constant byte address 0x4 - core index']
  #allocation1 [shape = 'u32[72,128]{1,0:T(1,128)}', space=vmem, size = 0x9000, scoped, tag = 'internal scratch']
  %s0 = inlined_call_operand.vmem [shape: bf16[256,256], index: 0, kind: input, shape index: {}]
  %s1 = inlined_call_operand.vmem [shape: f32[8,256], index: 1, kind: input, shape index: {}]
  %s2 = inlined_call_operand.vmem [shape: f32[8,256], index: 2, kind: input, shape index: {}]
  %s3 = inlined_call_operand.vmem [shape: bf16[256,256], index: 3, kind: output, shape index: {}]
  %s4 = sld [smem:[#allocation0]]
  $region22: #{noge_forward.10} parent=0
    _
  %s6 = ssub.s32 1, %s4
  %s7 = scalar_select 0, %s6, %s4
  // Predicated region
  $region2: #{noge_forward.10} parent=0 // pred_check
    _
  $region3: #{noge_forward.10} parent=0 // pred_check_branch
    %9 = sbr.rel (0) target = $region5
  $region4: #{noge_forward.10} parent=0 // pred_region
    _
  $region5: #{noge_forward.10} parent=0 // pred_fallthru
    _
  // Predicated region
  $region6: #{noge_forward.10} parent=0 // pred_check
    _
  $region7: #{noge_forward.10} parent=0 // pred_check_branch
    %11 = sbr.rel (0) target = $region9
  $region8: #{noge_forward.10} parent=0 // pred_region
    _
  $region9: #{noge_forward.10} parent=0 // pred_fallthru
    _
  // Predicated region
  $region10: #{noge_forward.10} parent=0 // pred_check
    _
  $region11: #{noge_forward.10} parent=0 // pred_check_branch
    %13 = sbr.rel (0) target = $region13
  $region12: #{noge_forward.10} parent=0 // pred_region
    _
  $region13: #{noge_forward.10} parent=0 // pred_fallthru
    _
  %v14 = vld [vmem:[%s0] sm:$0xff]
  %v15 = vld [vmem:[%s0 + $0x8] sm:$0xff]
  %v16 = vld [vmem:[%s0 + $0x10] sm:$0xff]
  %v17 = vld [vmem:[%s0 + $0x18] sm:$0xff]
  %v18 = vld [vmem:[%s0 + $0x20] sm:$0xff]
  %v19 = vld [vmem:[%s0 + $0x28] sm:$0xff]
  %v20 = vld [vmem:[%s0 + $0x30] sm:$0xff]
  %v21 = vld [vmem:[%s0 + $0x38] sm:$0xff]
  %v22 = vld [vmem:[%s0 + $0x40] sm:$0xff]
  %v23 = vld [vmem:[%s0 + $0x48] sm:$0xff]
  %v24 = vld [vmem:[%s0 + $0x50] sm:$0xff]
  %v25 = vld [vmem:[%s0 + $0x58] sm:$0xff]
  %v26 = vld [vmem:[%s0 + $0x60] sm:$0xff]
  %v27 = vld [vmem:[%s0 + $0x68] sm:$0xff]
  %v28 = vld [vmem:[%s0 + $0x70] sm:$0xff]
  %v29 = vld [vmem:[%s0 + $0x78] sm:$0xff]
  %v30 = vld [vmem:[%s0 + $0x80] sm:$0xff]
  %v31 = vld [vmem:[%s0 + $0x88] sm:$0xff]
  %v32 = vld [vmem:[%s0 + $0x90] sm:$0xff]
  %v33 = vld [vmem:[%s0 + $0x98] sm:$0xff]
  %v34 = vld [vmem:[%s0 + $0xa0] sm:$0xff]
  %v35 = vld [vmem:[%s0 + $0xa8] sm:$0xff]
  %v36 = vld [vmem:[%s0 + $0xb0] sm:$0xff]
  %v37 = vld [vmem:[%s0 + $0xb8] sm:$0xff]
  %v38 = vld [vmem:[%s0 + $0xc0] sm:$0xff]
  %v39 = vld [vmem:[%s0 + $0xc8] sm:$0xff]
  %v40 = vld [vmem:[%s0 + $0xd0] sm:$0xff]
  %v41 = vld [vmem:[%s0 + $0xd8] sm:$0xff]
  %v42 = vld [vmem:[%s0 + $0xe0] sm:$0xff]
  %v43 = vld [vmem:[%s0 + $0xe8] sm:$0xff]
  %v44 = vld [vmem:[%s0 + $0xf0] sm:$0xff]
  %v45 = vld [vmem:[%s0 + $0xf8] sm:$0xff]
  %v46 = vunpack.c.l.bf16 %v14
  %v47 = vunpack.c.h.bf16 %v14
  %v48 = vunpack.c.l.bf16 %v15
  %v49 = vunpack.c.h.bf16 %v15
  %v50 = vunpack.c.l.bf16 %v16
  %v51 = vunpack.c.h.bf16 %v16
  %v52 = vunpack.c.l.bf16 %v17
  %v53 = vunpack.c.h.bf16 %v17
  %v54 = vunpack.c.l.bf16 %v18
  %v55 = vunpack.c.h.bf16 %v18
  %v56 = vunpack.c.l.bf16 %v19
  %v57 = vunpack.c.h.bf16 %v19
  %v58 = vunpack.c.l.bf16 %v20
  %v59 = vunpack.c.h.bf16 %v20
  %v60 = vunpack.c.l.bf16 %v21
  %v61 = vunpack.c.h.bf16 %v21
  %v62 = vunpack.c.l.bf16 %v22
  %v63 = vunpack.c.h.bf16 %v22
  %v64 = vunpack.c.l.bf16 %v23
  %v65 = vunpack.c.h.bf16 %v23
  %v66 = vunpack.c.l.bf16 %v24
  %v67 = vunpack.c.h.bf16 %v24
  %v68 = vunpack.c.l.bf16 %v25
  %v69 = vunpack.c.h.bf16 %v25
  %v70 = vunpack.c.l.bf16 %v26
  %v71 = vunpack.c.h.bf16 %v26
  %v72 = vunpack.c.l.bf16 %v27
  %v73 = vunpack.c.h.bf16 %v27
  %v74 = vunpack.c.l.bf16 %v28
  %v75 = vunpack.c.h.bf16 %v28
  %v76 = vunpack.c.l.bf16 %v29
  %v77 = vunpack.c.h.bf16 %v29
  %v78 = vunpack.c.l.bf16 %v30
  %v79 = vunpack.c.h.bf16 %v30
  %v80 = vunpack.c.l.bf16 %v31
  %v81 = vunpack.c.h.bf16 %v31
  %v82 = vunpack.c.l.bf16 %v32
  %v83 = vunpack.c.h.bf16 %v32
  %v84 = vunpack.c.l.bf16 %v33
  %v85 = vunpack.c.h.bf16 %v33
  %v86 = vunpack.c.l.bf16 %v34
  %v87 = vunpack.c.h.bf16 %v34
  %v88 = vunpack.c.l.bf16 %v35
  %v89 = vunpack.c.h.bf16 %v35
  %v90 = vunpack.c.l.bf16 %v36
  %v91 = vunpack.c.h.bf16 %v36
  %v92 = vunpack.c.l.bf16 %v37
  %v93 = vunpack.c.h.bf16 %v37
  %v94 = vunpack.c.l.bf16 %v38
  %v95 = vunpack.c.h.bf16 %v38
  %v96 = vunpack.c.l.bf16 %v39
  %v97 = vunpack.c.h.bf16 %v39
  %v98 = vunpack.c.l.bf16 %v40
  %v99 = vunpack.c.h.bf16 %v40
  %v100 = vunpack.c.l.bf16 %v41
  %v101 = vunpack.c.h.bf16 %v41
  %v102 = vunpack.c.l.bf16 %v42
  %v103 = vunpack.c.h.bf16 %v42
  %v104 = vunpack.c.l.bf16 %v43
  %v105 = vunpack.c.h.bf16 %v43
  %v106 = vunpack.c.l.bf16 %v44
  %v107 = vunpack.c.h.bf16 %v44
  %v108 = vunpack.c.l.bf16 %v45
  %v109 = vunpack.c.h.bf16 %v45
  %v110 = vld [vmem:[%s1] ss:$8 sm:$0x3]
  %v111 = vmul.f32 %v110, 0.03125
  %s112 = scalar_lea.vmem %s1, 1
  %v113 = vld [vmem:[%s112] ss:$8 sm:$0x3]
  %v114 = vmul.f32 %v113, 0.03125
  %v115 = vmul.f32 %v111, %v111
  %v116 = vsub.f32 %v114, %v115
  %v117 = vmax.f32 %v116, 0.0
  %v119 = vperm.slane %v111, 0
  %v120 = vperm.slane %v111, 1
  %v123 = vsub.f32 %v46, %v119
  %v124 = vsub.f32 %v47, %v120
  %v125 = vsub.f32 %v48, %v119
  %v126 = vsub.f32 %v49, %v120
  %v127 = vsub.f32 %v50, %v119
  %v128 = vsub.f32 %v51, %v120
  %v129 = vsub.f32 %v52, %v119
  %v130 = vsub.f32 %v53, %v120
  %v131 = vsub.f32 %v54, %v119
  %v132 = vsub.f32 %v55, %v120
  %v133 = vsub.f32 %v56, %v119
  %v134 = vsub.f32 %v57, %v120
  %v135 = vsub.f32 %v58, %v119
  %v136 = vsub.f32 %v59, %v120
  %v137 = vsub.f32 %v60, %v119
  %v138 = vsub.f32 %v61, %v120
  %v139 = vsub.f32 %v62, %v119
  %v140 = vsub.f32 %v63, %v120
  %v141 = vsub.f32 %v64, %v119
  %v142 = vsub.f32 %v65, %v120
  %v143 = vsub.f32 %v66, %v119
  %v144 = vsub.f32 %v67, %v120
  %v145 = vsub.f32 %v68, %v119
  %v146 = vsub.f32 %v69, %v120
  %v147 = vsub.f32 %v70, %v119
  %v148 = vsub.f32 %v71, %v120
  %v149 = vsub.f32 %v72, %v119
  %v150 = vsub.f32 %v73, %v120
  %v151 = vsub.f32 %v74, %v119
  %v152 = vsub.f32 %v75, %v120
  %v153 = vsub.f32 %v76, %v119
  %v154 = vsub.f32 %v77, %v120
  %v155 = vsub.f32 %v78, %v119
  %v156 = vsub.f32 %v79, %v120
  %v157 = vsub.f32 %v80, %v119
  %v158 = vsub.f32 %v81, %v120
  %v159 = vsub.f32 %v82, %v119
  %v160 = vsub.f32 %v83, %v120
  %v161 = vsub.f32 %v84, %v119
  %v162 = vsub.f32 %v85, %v120
  %v163 = vsub.f32 %v86, %v119
  %v164 = vsub.f32 %v87, %v120
  %v165 = vsub.f32 %v88, %v119
  %v166 = vsub.f32 %v89, %v120
  %v167 = vsub.f32 %v90, %v119
  %v168 = vsub.f32 %v91, %v120
  %v169 = vsub.f32 %v92, %v119
  %v170 = vsub.f32 %v93, %v120
  %v171 = vsub.f32 %v94, %v119
  %v172 = vsub.f32 %v95, %v120
  %v173 = vsub.f32 %v96, %v119
  %v174 = vsub.f32 %v97, %v120
  %v175 = vsub.f32 %v98, %v119
  %v176 = vsub.f32 %v99, %v120
  %v177 = vsub.f32 %v100, %v119
  %v178 = vsub.f32 %v101, %v120
  %v179 = vsub.f32 %v102, %v119
  %v180 = vsub.f32 %v103, %v120
  %v181 = vsub.f32 %v104, %v119
  %v182 = vsub.f32 %v105, %v120
  %v183 = vsub.f32 %v106, %v119
  %v184 = vsub.f32 %v107, %v120
  %v185 = vsub.f32 %v108, %v119
  %v186 = vsub.f32 %v109, %v120
  %v187 = vadd.f32 %v117, 1e-05
  %v188 = vrsqrt.pop %v187
  %v189 = vmul.f32 %v188, %v187
  %v190 = vmul.f32 %v189, %v188
  %v191 = vmul.f32 0.5, %v190
  %v192 = vsub.f32 1.5, %v191
  %v193 = vmul.f32 %v188, %v192
  %vm194 = vweird.f32 %v187
  %vm195 = vweird.f32 %v188
  %vm196 = vmor %vm194, %vm195
  %v197 = vsel %vm196, %v188, %v193
  %v199 = vperm.slane %v197, 0
  %v200 = vperm.slane %v197, 1
  %v203 = vmul.f32 %v123, %v199
  %v204 = vmul.f32 %v124, %v200
  %v205 = vmul.f32 %v125, %v199
  %v206 = vmul.f32 %v126, %v200
  %v207 = vmul.f32 %v127, %v199
  %v208 = vmul.f32 %v128, %v200
  %v209 = vmul.f32 %v129, %v199
  %v210 = vmul.f32 %v130, %v200
  %v211 = vmul.f32 %v131, %v199
  %v212 = vmul.f32 %v132, %v200
  %v213 = vmul.f32 %v133, %v199
  %v214 = vmul.f32 %v134, %v200
  %v215 = vmul.f32 %v135, %v199
  %v216 = vmul.f32 %v136, %v200
  %v217 = vmul.f32 %v137, %v199
  %v218 = vmul.f32 %v138, %v200
  %v219 = vmul.f32 %v139, %v199
  %v220 = vmul.f32 %v140, %v200
  %v221 = vmul.f32 %v141, %v199
  %v222 = vmul.f32 %v142, %v200
  %v223 = vmul.f32 %v143, %v199
  %v224 = vmul.f32 %v144, %v200
  %v225 = vmul.f32 %v145, %v199
  %v226 = vmul.f32 %v146, %v200
  %v227 = vmul.f32 %v147, %v199
  %v228 = vmul.f32 %v148, %v200
  %v229 = vmul.f32 %v149, %v199
  %v230 = vmul.f32 %v150, %v200
  %v231 = vmul.f32 %v151, %v199
  %v232 = vmul.f32 %v152, %v200
  %v233 = vmul.f32 %v153, %v199
  %v234 = vmul.f32 %v154, %v200
  %v235 = vmul.f32 %v155, %v199
  %v236 = vmul.f32 %v156, %v200
  %v237 = vmul.f32 %v157, %v199
  %v238 = vmul.f32 %v158, %v200
  %v239 = vmul.f32 %v159, %v199
  %v240 = vmul.f32 %v160, %v200
  %v241 = vmul.f32 %v161, %v199
  %v242 = vmul.f32 %v162, %v200
  %v243 = vmul.f32 %v163, %v199
  %v244 = vmul.f32 %v164, %v200
  %v245 = vmul.f32 %v165, %v199
  %v246 = vmul.f32 %v166, %v200
  %v247 = vmul.f32 %v167, %v199
  %v248 = vmul.f32 %v168, %v200
  %v249 = vmul.f32 %v169, %v199
  %v250 = vmul.f32 %v170, %v200
  %v251 = vmul.f32 %v171, %v199
  %v252 = vmul.f32 %v172, %v200
  %v253 = vmul.f32 %v173, %v199
  %v254 = vmul.f32 %v174, %v200
  %v255 = vmul.f32 %v175, %v199
  %v256 = vmul.f32 %v176, %v200
  %v257 = vmul.f32 %v177, %v199
  %v258 = vmul.f32 %v178, %v200
  %v259 = vmul.f32 %v179, %v199
  %v260 = vmul.f32 %v180, %v200
  %v261 = vmul.f32 %v181, %v199
  %v262 = vmul.f32 %v182, %v200
  %v263 = vmul.f32 %v183, %v199
  %v264 = vmul.f32 %v184, %v200
  %v265 = vmul.f32 %v185, %v199
  %v266 = vmul.f32 %v186, %v200
  %v267 = vld [vmem:[%s2] ss:$8 sm:$0x3]
  %v269 = vperm.slane %v267, 0
  %v270 = vperm.slane %v267, 1
  %v273 = vmul.f32 %v203, %v269
  %v274 = vmul.f32 %v204, %v270
  %v275 = vmul.f32 %v205, %v269
  %v276 = vmul.f32 %v206, %v270
  %v277 = vmul.f32 %v207, %v269
  %v278 = vmul.f32 %v208, %v270
  %v279 = vmul.f32 %v209, %v269
  %v280 = vmul.f32 %v210, %v270
  %v281 = vmul.f32 %v211, %v269
  %v282 = vmul.f32 %v212, %v270
  %v283 = vmul.f32 %v213, %v269
  %v284 = vmul.f32 %v214, %v270
  %v285 = vmul.f32 %v215, %v269
  %v286 = vmul.f32 %v216, %v270
  %v287 = vmul.f32 %v217, %v269
  %v288 = vmul.f32 %v218, %v270
  %v289 = vmul.f32 %v219, %v269
  %v290 = vmul.f32 %v220, %v270
  %v291 = vmul.f32 %v221, %v269
  %v292 = vmul.f32 %v222, %v270
  %v293 = vmul.f32 %v223, %v269
  %v294 = vmul.f32 %v224, %v270
  %v295 = vmul.f32 %v225, %v269
  %v296 = vmul.f32 %v226, %v270
  %v297 = vmul.f32 %v227, %v269
  %v298 = vmul.f32 %v228, %v270
  %v299 = vmul.f32 %v229, %v269
  %v300 = vmul.f32 %v230, %v270
  %v301 = vmul.f32 %v231, %v269
  %v302 = vmul.f32 %v232, %v270
  %v303 = vmul.f32 %v233, %v269
  %v304 = vmul.f32 %v234, %v270
  %v305 = vmul.f32 %v235, %v269
  %v306 = vmul.f32 %v236, %v270
  %v307 = vmul.f32 %v237, %v269
  %v308 = vmul.f32 %v238, %v270
  %v309 = vmul.f32 %v239, %v269
  %v310 = vmul.f32 %v240, %v270
  %v311 = vmul.f32 %v241, %v269
  %v312 = vmul.f32 %v242, %v270
  %v313 = vmul.f32 %v243, %v269
  %v314 = vmul.f32 %v244, %v270
  %v315 = vmul.f32 %v245, %v269
  %v316 = vmul.f32 %v246, %v270
  %v317 = vmul.f32 %v247, %v269
  %v318 = vmul.f32 %v248, %v270
  %v319 = vmul.f32 %v249, %v269
  %v320 = vmul.f32 %v250, %v270
  %v321 = vmul.f32 %v251, %v269
  %v322 = vmul.f32 %v252, %v270
  %v323 = vmul.f32 %v253, %v269
  %v324 = vmul.f32 %v254, %v270
  %v325 = vmul.f32 %v255, %v269
  %v326 = vmul.f32 %v256, %v270
  %v327 = vmul.f32 %v257, %v269
  %v328 = vmul.f32 %v258, %v270
  %v329 = vmul.f32 %v259, %v269
  %v330 = vmul.f32 %v260, %v270
  %v331 = vmul.f32 %v261, %v269
  %v332 = vmul.f32 %v262, %v270
  %v333 = vmul.f32 %v263, %v269
  %v334 = vmul.f32 %v264, %v270
  %v335 = vmul.f32 %v265, %v269
  %v336 = vmul.f32 %v266, %v270
  %s337 = scalar_lea.vmem %s2, 1
  %v338 = vld [vmem:[%s337] ss:$8 sm:$0x3]
  %v340 = vperm.slane %v338, 0
  %v341 = vperm.slane %v338, 1
  %v344 = vadd.f32 %v273, %v340
  %v345 = vadd.f32 %v274, %v341
  %v346 = vadd.f32 %v275, %v340
  %v347 = vadd.f32 %v276, %v341
  %v348 = vadd.f32 %v277, %v340
  %v349 = vadd.f32 %v278, %v341
  %v350 = vadd.f32 %v279, %v340
  %v351 = vadd.f32 %v280, %v341
  %v352 = vadd.f32 %v281, %v340
  %v353 = vadd.f32 %v282, %v341
  %v354 = vadd.f32 %v283, %v340
  %v355 = vadd.f32 %v284, %v341
  %v356 = vadd.f32 %v285, %v340
  %v357 = vadd.f32 %v286, %v341
  %v358 = vadd.f32 %v287, %v340
  %v359 = vadd.f32 %v288, %v341
  %v360 = vadd.f32 %v289, %v340
  %v361 = vadd.f32 %v290, %v341
  %v362 = vadd.f32 %v291, %v340
  %v363 = vadd.f32 %v292, %v341
  %v364 = vadd.f32 %v293, %v340
  %v365 = vadd.f32 %v294, %v341
  %v366 = vadd.f32 %v295, %v340
  %v367 = vadd.f32 %v296, %v341
  %v368 = vadd.f32 %v297, %v340
  %v369 = vadd.f32 %v298, %v341
  %v370 = vadd.f32 %v299, %v340
  %v371 = vadd.f32 %v300, %v341
  %v372 = vadd.f32 %v301, %v340
  %v373 = vadd.f32 %v302, %v341
  %v374 = vadd.f32 %v303, %v340
  %v375 = vadd.f32 %v304, %v341
  %v376 = vadd.f32 %v305, %v340
  %v377 = vadd.f32 %v306, %v341
  %v378 = vadd.f32 %v307, %v340
  %v379 = vadd.f32 %v308, %v341
  %v380 = vadd.f32 %v309, %v340
  %v381 = vadd.f32 %v310, %v341
  %v382 = vadd.f32 %v311, %v340
  %v383 = vadd.f32 %v312, %v341
  %v384 = vadd.f32 %v313, %v340
  %v385 = vadd.f32 %v314, %v341
  %v386 = vadd.f32 %v315, %v340
  %v387 = vadd.f32 %v316, %v341
  %v388 = vadd.f32 %v317, %v340
  %v389 = vadd.f32 %v318, %v341
  %v390 = vadd.f32 %v319, %v340
  %v391 = vadd.f32 %v320, %v341
  %v392 = vadd.f32 %v321, %v340
  %v393 = vadd.f32 %v322, %v341
  %v394 = vadd.f32 %v323, %v340
  %v395 = vadd.f32 %v324, %v341
  %v396 = vadd.f32 %v325, %v340
  %v397 = vadd.f32 %v326, %v341
  %v398 = vadd.f32 %v327, %v340
  %v399 = vadd.f32 %v328, %v341
  %v400 = vadd.f32 %v329, %v340
  %v401 = vadd.f32 %v330, %v341
  %v402 = vadd.f32 %v331, %v340
  %v403 = vadd.f32 %v332, %v341
  %v404 = vadd.f32 %v333, %v340
  %v405 = vadd.f32 %v334, %v341
  %v406 = vadd.f32 %v335, %v340
  %v407 = vadd.f32 %v336, %v341
  %v408 = vtanh.pop %v344
  %v409 = vtanh.pop %v345
  %v410 = vtanh.pop %v346
  %v411 = vtanh.pop %v347
  %v412 = vtanh.pop %v348
  %v413 = vtanh.pop %v349
  %v414 = vtanh.pop %v350
  %v415 = vtanh.pop %v351
  %v416 = vtanh.pop %v352
  %v417 = vtanh.pop %v353
  %v418 = vtanh.pop %v354
  %v419 = vtanh.pop %v355
  %v420 = vtanh.pop %v356
  %v421 = vtanh.pop %v357
  %v422 = vtanh.pop %v358
  %v423 = vtanh.pop %v359
  %v424 = vtanh.pop %v360
  %v425 = vtanh.pop %v361
  %v426 = vtanh.pop %v362
  %v427 = vtanh.pop %v363
  %v428 = vtanh.pop %v364
  %v429 = vtanh.pop %v365
  %v430 = vtanh.pop %v366
  %v431 = vtanh.pop %v367
  %v432 = vtanh.pop %v368
  %v433 = vtanh.pop %v369
  %v434 = vtanh.pop %v370
  %v435 = vtanh.pop %v371
  %v436 = vtanh.pop %v372
  %v437 = vtanh.pop %v373
  %v438 = vtanh.pop %v374
  %v439 = vtanh.pop %v375
  %v440 = vtanh.pop %v376
  %v441 = vtanh.pop %v377
  %v442 = vtanh.pop %v378
  %v443 = vtanh.pop %v379
  %v444 = vtanh.pop %v380
  %v445 = vtanh.pop %v381
  %v446 = vtanh.pop %v382
  %v447 = vtanh.pop %v383
  %v448 = vtanh.pop %v384
  %v449 = vtanh.pop %v385
  %v450 = vtanh.pop %v386
  %v451 = vtanh.pop %v387
  %v452 = vtanh.pop %v388
  %v453 = vtanh.pop %v389
  %v454 = vtanh.pop %v390
  %v455 = vtanh.pop %v391
  %v456 = vtanh.pop %v392
  %v457 = vtanh.pop %v393
  %v458 = vtanh.pop %v394
  %v459 = vtanh.pop %v395
  %v460 = vtanh.pop %v396
  %v461 = vtanh.pop %v397
  %v462 = vtanh.pop %v398
  %v463 = vtanh.pop %v399
  %v464 = vtanh.pop %v400
  %v465 = vtanh.pop %v401
  %v466 = vtanh.pop %v402
  %v467 = vtanh.pop %v403
  %v468 = vtanh.pop %v404
  %v469 = vtanh.pop %v405
  %v470 = vtanh.pop %v406
  %v471 = vtanh.pop %v407
  %v472 = vpack.c.bf16 %v409, %v408
  %v473 = vpack.c.bf16 %v411, %v410
  %v474 = vpack.c.bf16 %v413, %v412
  %v475 = vpack.c.bf16 %v415, %v414
  %v476 = vpack.c.bf16 %v417, %v416
  %v477 = vpack.c.bf16 %v419, %v418
  %v478 = vpack.c.bf16 %v421, %v420
  %v479 = vpack.c.bf16 %v423, %v422
  %v480 = vpack.c.bf16 %v425, %v424
  %v481 = vpack.c.bf16 %v427, %v426
  %v482 = vpack.c.bf16 %v429, %v428
  %v483 = vpack.c.bf16 %v431, %v430
  %v484 = vpack.c.bf16 %v433, %v432
  %v485 = vpack.c.bf16 %v435, %v434
  %v486 = vpack.c.bf16 %v437, %v436
  %v487 = vpack.c.bf16 %v439, %v438
  %v488 = vpack.c.bf16 %v441, %v440
  %v489 = vpack.c.bf16 %v443, %v442
  %v490 = vpack.c.bf16 %v445, %v444
  %v491 = vpack.c.bf16 %v447, %v446
  %v492 = vpack.c.bf16 %v449, %v448
  %v493 = vpack.c.bf16 %v451, %v450
  %v494 = vpack.c.bf16 %v453, %v452
  %v495 = vpack.c.bf16 %v455, %v454
  %v496 = vpack.c.bf16 %v457, %v456
  %v497 = vpack.c.bf16 %v459, %v458
  %v498 = vpack.c.bf16 %v461, %v460
  %v499 = vpack.c.bf16 %v463, %v462
  %v500 = vpack.c.bf16 %v465, %v464
  %v501 = vpack.c.bf16 %v467, %v466
  %v502 = vpack.c.bf16 %v469, %v468
  %v503 = vpack.c.bf16 %v471, %v470
  %504 = vst [vmem:[%s3] sm:$0xff] %v472
  %505 = vst [vmem:[%s3 + $0x8] sm:$0xff] %v473
  %506 = vst [vmem:[%s3 + $0x10] sm:$0xff] %v474
  %507 = vst [vmem:[%s3 + $0x18] sm:$0xff] %v475
  %508 = vst [vmem:[%s3 + $0x20] sm:$0xff] %v476
  %509 = vst [vmem:[%s3 + $0x28] sm:$0xff] %v477
  %510 = vst [vmem:[%s3 + $0x30] sm:$0xff] %v478
  %511 = vst [vmem:[%s3 + $0x38] sm:$0xff] %v479
  %512 = vst [vmem:[%s3 + $0x40] sm:$0xff] %v480
  %513 = vst [vmem:[%s3 + $0x48] sm:$0xff] %v481
  %514 = vst [vmem:[%s3 + $0x50] sm:$0xff] %v482
  %515 = vst [vmem:[%s3 + $0x58] sm:$0xff] %v483
  %516 = vst [vmem:[%s3 + $0x60] sm:$0xff] %v484
  %517 = vst [vmem:[%s3 + $0x68] sm:$0xff] %v485
  %518 = vst [vmem:[%s3 + $0x70] sm:$0xff] %v486
  %519 = vst [vmem:[%s3 + $0x78] sm:$0xff] %v487
  %520 = vst [vmem:[%s3 + $0x80] sm:$0xff] %v488
  %521 = vst [vmem:[%s3 + $0x88] sm:$0xff] %v489
  %522 = vst [vmem:[%s3 + $0x90] sm:$0xff] %v490
  %523 = vst [vmem:[%s3 + $0x98] sm:$0xff] %v491
  %524 = vst [vmem:[%s3 + $0xa0] sm:$0xff] %v492
  %525 = vst [vmem:[%s3 + $0xa8] sm:$0xff] %v493
  %526 = vst [vmem:[%s3 + $0xb0] sm:$0xff] %v494
  %527 = vst [vmem:[%s3 + $0xb8] sm:$0xff] %v495
  %528 = vst [vmem:[%s3 + $0xc0] sm:$0xff] %v496
  %529 = vst [vmem:[%s3 + $0xc8] sm:$0xff] %v497
  %530 = vst [vmem:[%s3 + $0xd0] sm:$0xff] %v498
  %531 = vst [vmem:[%s3 + $0xd8] sm:$0xff] %v499
  %532 = vst [vmem:[%s3 + $0xe0] sm:$0xff] %v500
  %533 = vst [vmem:[%s3 + $0xe8] sm:$0xff] %v501
  %534 = vst [vmem:[%s3 + $0xf0] sm:$0xff] %v502
  %535 = vst [vmem:[%s3 + $0xf8] sm:$0xff] %v503
  // Predicated region
  $region14: #{noge_forward.10} parent=0 // pred_check
    _
  $region15: #{noge_forward.10} parent=0 // pred_check_branch
    %537 = sbr.rel (0) target = $region17
  $region16: #{noge_forward.10} parent=0 // pred_region
    _
  $region17: #{noge_forward.10} parent=0 // pred_fallthru
    _
  // Predicated region
  $region18: #{noge_forward.10} parent=0 // pred_check
    _
  $region19: #{noge_forward.10} parent=0 // pred_check_branch
    %539 = sbr.rel (0) target = $region21
  $region20: #{noge_forward.10} parent=0 // pred_region
    _
  $region21: #{noge_forward.10} parent=0 // pred_fallthru
    _

// kernel: noge_forward.7
$region0: #{noge_forward.7}
  #allocation0 [shape = 'u32[]', space=smem, size = 0x4, offset = 0x4, fixed_abs, tag = 'smem constant byte address 0x4 - core index']
  #allocation1 [shape = 'u32[72,128]{1,0:T(1,128)}', space=vmem, size = 0x9000, scoped, tag = 'internal scratch']
  %s0 = inlined_call_operand.vmem [shape: bf16[256,256], index: 0, kind: input, shape index: {}]
  %s1 = inlined_call_operand.vmem [shape: bf16[256,256], index: 1, kind: input, shape index: {}]
  %s2 = inlined_call_operand.vmem [shape: bf16[256,256], index: 2, kind: output, shape index: {}]
  %s3 = sld [smem:[#allocation0]]
  $region18: #{noge_forward.7} parent=0
    _
  %s5 = ssub.s32 1, %s3
  %s6 = scalar_select 0, %s5, %s3
  // Predicated region
  $region2: #{noge_forward.7} parent=0 // pred_check
    _
  $region3: #{noge_forward.7} parent=0 // pred_check_branch
    %8 = sbr.rel (0) target = $region5
  $region4: #{noge_forward.7} parent=0 // pred_region
    _
  $region5: #{noge_forward.7} parent=0 // pred_fallthru
    _
  // Predicated region
  $region6: #{noge_forward.7} parent=0 // pred_check
    _
  $region7: #{noge_forward.7} parent=0 // pred_check_branch
    %10 = sbr.rel (0) target = $region9
  $region8: #{noge_forward.7} parent=0 // pred_region
    _
  $region9: #{noge_forward.7} parent=0 // pred_fallthru
    _
  %v11 = vld [vmem:[%s0] sm:$0xff]
  %v12 = vld [vmem:[%s0 + $0x8] sm:$0xff]
  %v13 = vld [vmem:[%s0 + $0x10] sm:$0xff]
  %v14 = vld [vmem:[%s0 + $0x18] sm:$0xff]
  %v15 = vld [vmem:[%s0 + $0x20] sm:$0xff]
  %v16 = vld [vmem:[%s0 + $0x28] sm:$0xff]
  %v17 = vld [vmem:[%s0 + $0x30] sm:$0xff]
  %v18 = vld [vmem:[%s0 + $0x38] sm:$0xff]
  %v19 = vld [vmem:[%s0 + $0x40] sm:$0xff]
  %v20 = vld [vmem:[%s0 + $0x48] sm:$0xff]
  %v21 = vld [vmem:[%s0 + $0x50] sm:$0xff]
  %v22 = vld [vmem:[%s0 + $0x58] sm:$0xff]
  %v23 = vld [vmem:[%s0 + $0x60] sm:$0xff]
  %v24 = vld [vmem:[%s0 + $0x68] sm:$0xff]
  %v25 = vld [vmem:[%s0 + $0x70] sm:$0xff]
  %v26 = vld [vmem:[%s0 + $0x78] sm:$0xff]
  %v27 = vld [vmem:[%s0 + $0x80] sm:$0xff]
  %v28 = vld [vmem:[%s0 + $0x88] sm:$0xff]
  %v29 = vld [vmem:[%s0 + $0x90] sm:$0xff]
  %v30 = vld [vmem:[%s0 + $0x98] sm:$0xff]
  %v31 = vld [vmem:[%s0 + $0xa0] sm:$0xff]
  %v32 = vld [vmem:[%s0 + $0xa8] sm:$0xff]
  %v33 = vld [vmem:[%s0 + $0xb0] sm:$0xff]
  %v34 = vld [vmem:[%s0 + $0xb8] sm:$0xff]
  %v35 = vld [vmem:[%s0 + $0xc0] sm:$0xff]
  %v36 = vld [vmem:[%s0 + $0xc8] sm:$0xff]
  %v37 = vld [vmem:[%s0 + $0xd0] sm:$0xff]
  %v38 = vld [vmem:[%s0 + $0xd8] sm:$0xff]
  %v39 = vld [vmem:[%s0 + $0xe0] sm:$0xff]
  %v40 = vld [vmem:[%s0 + $0xe8] sm:$0xff]
  %v41 = vld [vmem:[%s0 + $0xf0] sm:$0xff]
  %v42 = vld [vmem:[%s0 + $0xf8] sm:$0xff]
  %v43 = vld [vmem:[%s1] sm:$0xff]
  %v44 = vld [vmem:[%s1 + $0x8] sm:$0xff]
  %v45 = vld [vmem:[%s1 + $0x10] sm:$0xff]
  %v46 = vld [vmem:[%s1 + $0x18] sm:$0xff]
  %v47 = vld [vmem:[%s1 + $0x20] sm:$0xff]
  %v48 = vld [vmem:[%s1 + $0x28] sm:$0xff]
  %v49 = vld [vmem:[%s1 + $0x30] sm:$0xff]
  %v50 = vld [vmem:[%s1 + $0x38] sm:$0xff]
  %v51 = vld [vmem:[%s1 + $0x40] sm:$0xff]
  %v52 = vld [vmem:[%s1 + $0x48] sm:$0xff]
  %v53 = vld [vmem:[%s1 + $0x50] sm:$0xff]
  %v54 = vld [vmem:[%s1 + $0x58] sm:$0xff]
  %v55 = vld [vmem:[%s1 + $0x60] sm:$0xff]
  %v56 = vld [vmem:[%s1 + $0x68] sm:$0xff]
  %v57 = vld [vmem:[%s1 + $0x70] sm:$0xff]
  %v58 = vld [vmem:[%s1 + $0x78] sm:$0xff]
  %v59 = vld [vmem:[%s1 + $0x80] sm:$0xff]
  %v60 = vld [vmem:[%s1 + $0x88] sm:$0xff]
  %v61 = vld [vmem:[%s1 + $0x90] sm:$0xff]
  %v62 = vld [vmem:[%s1 + $0x98] sm:$0xff]
  %v63 = vld [vmem:[%s1 + $0xa0] sm:$0xff]
  %v64 = vld [vmem:[%s1 + $0xa8] sm:$0xff]
  %v65 = vld [vmem:[%s1 + $0xb0] sm:$0xff]
  %v66 = vld [vmem:[%s1 + $0xb8] sm:$0xff]
  %v67 = vld [vmem:[%s1 + $0xc0] sm:$0xff]
  %v68 = vld [vmem:[%s1 + $0xc8] sm:$0xff]
  %v69 = vld [vmem:[%s1 + $0xd0] sm:$0xff]
  %v70 = vld [vmem:[%s1 + $0xd8] sm:$0xff]
  %v71 = vld [vmem:[%s1 + $0xe0] sm:$0xff]
  %v72 = vld [vmem:[%s1 + $0xe8] sm:$0xff]
  %v73 = vld [vmem:[%s1 + $0xf0] sm:$0xff]
  %v74 = vld [vmem:[%s1 + $0xf8] sm:$0xff]
  %v107 = vunpack.c.l.b16 %v11
  %v108 = vunpack.c.h.b16 %v11
  %v109 = vunpack.c.l.b16 %v12
  %v110 = vunpack.c.h.b16 %v12
  %v111 = vunpack.c.l.b16 %v13
  %v112 = vunpack.c.h.b16 %v13
  %v113 = vunpack.c.l.b16 %v14
  %v114 = vunpack.c.h.b16 %v14
  %v115 = vunpack.c.l.b16 %v15
  %v116 = vunpack.c.h.b16 %v15
  %v117 = vunpack.c.l.b16 %v16
  %v118 = vunpack.c.h.b16 %v16
  %v119 = vunpack.c.l.b16 %v17
  %v120 = vunpack.c.h.b16 %v17
  %v121 = vunpack.c.l.b16 %v18
  %v122 = vunpack.c.h.b16 %v18
  %v123 = vunpack.c.l.b16 %v19
  %v124 = vunpack.c.h.b16 %v19
  %v125 = vunpack.c.l.b16 %v20
  %v126 = vunpack.c.h.b16 %v20
  %v127 = vunpack.c.l.b16 %v21
  %v128 = vunpack.c.h.b16 %v21
  %v129 = vunpack.c.l.b16 %v22
  %v130 = vunpack.c.h.b16 %v22
  %v131 = vunpack.c.l.b16 %v23
  %v132 = vunpack.c.h.b16 %v23
  %v133 = vunpack.c.l.b16 %v24
  %v134 = vunpack.c.h.b16 %v24
  %v135 = vunpack.c.l.b16 %v25
  %v136 = vunpack.c.h.b16 %v25
  %v137 = vunpack.c.l.b16 %v26
  %v138 = vunpack.c.h.b16 %v26
  %v139 = vunpack.c.l.b16 %v27
  %v140 = vunpack.c.h.b16 %v27
  %v141 = vunpack.c.l.b16 %v28
  %v142 = vunpack.c.h.b16 %v28
  %v143 = vunpack.c.l.b16 %v29
  %v144 = vunpack.c.h.b16 %v29
  %v145 = vunpack.c.l.b16 %v30
  %v146 = vunpack.c.h.b16 %v30
  %v147 = vunpack.c.l.b16 %v31
  %v148 = vunpack.c.h.b16 %v31
  %v149 = vunpack.c.l.b16 %v32
  %v150 = vunpack.c.h.b16 %v32
  %v151 = vunpack.c.l.b16 %v33
  %v152 = vunpack.c.h.b16 %v33
  %v153 = vunpack.c.l.b16 %v34
  %v154 = vunpack.c.h.b16 %v34
  %v155 = vunpack.c.l.b16 %v35
  %v156 = vunpack.c.h.b16 %v35
  %v157 = vunpack.c.l.b16 %v36
  %v158 = vunpack.c.h.b16 %v36
  %v159 = vunpack.c.l.b16 %v37
  %v160 = vunpack.c.h.b16 %v37
  %v161 = vunpack.c.l.b16 %v38
  %v162 = vunpack.c.h.b16 %v38
  %v163 = vunpack.c.l.b16 %v39
  %v164 = vunpack.c.h.b16 %v39
  %v165 = vunpack.c.l.b16 %v40
  %v166 = vunpack.c.h.b16 %v40
  %v167 = vunpack.c.l.b16 %v41
  %v168 = vunpack.c.h.b16 %v41
  %v169 = vunpack.c.l.b16 %v42
  %v170 = vunpack.c.h.b16 %v42
  %v171 = vpack.c.b16 %v109, %v107
  %v172 = vpack.c.b16 %v110, %v108
  %v173 = vpack.c.b16 %v113, %v111
  %v174 = vpack.c.b16 %v114, %v112
  %v175 = vpack.c.b16 %v117, %v115
  %v176 = vpack.c.b16 %v118, %v116
  %v177 = vpack.c.b16 %v121, %v119
  %v178 = vpack.c.b16 %v122, %v120
  %v179 = vpack.c.b16 %v125, %v123
  %v180 = vpack.c.b16 %v126, %v124
  %v181 = vpack.c.b16 %v129, %v127
  %v182 = vpack.c.b16 %v130, %v128
  %v183 = vpack.c.b16 %v133, %v131
  %v184 = vpack.c.b16 %v134, %v132
  %v185 = vpack.c.b16 %v137, %v135
  %v186 = vpack.c.b16 %v138, %v136
  %v187 = vpack.c.b16 %v141, %v139
  %v188 = vpack.c.b16 %v142, %v140
  %v189 = vpack.c.b16 %v145, %v143
  %v190 = vpack.c.b16 %v146, %v144
  %v191 = vpack.c.b16 %v149, %v147
  %v192 = vpack.c.b16 %v150, %v148
  %v193 = vpack.c.b16 %v153, %v151
  %v194 = vpack.c.b16 %v154, %v152
  %v195 = vpack.c.b16 %v157, %v155
  %v196 = vpack.c.b16 %v158, %v156
  %v197 = vpack.c.b16 %v161, %v159
  %v198 = vpack.c.b16 %v162, %v160
  %v199 = vpack.c.b16 %v165, %v163
  %v200 = vpack.c.b16 %v166, %v164
  %v201 = vpack.c.b16 %v169, %v167
  %v202 = vpack.c.b16 %v170, %v168
  %v267 = vunpack.c.l.b16 %v43
  %v268 = vunpack.c.h.b16 %v43
  %v269 = vunpack.c.l.b16 %v44
  %v270 = vunpack.c.h.b16 %v44
  %v271 = vunpack.c.l.b16 %v45
  %v272 = vunpack.c.h.b16 %v45
  %v273 = vunpack.c.l.b16 %v46
  %v274 = vunpack.c.h.b16 %v46
  %v275 = vunpack.c.l.b16 %v47
  %v276 = vunpack.c.h.b16 %v47
  %v277 = vunpack.c.l.b16 %v48
  %v278 = vunpack.c.h.b16 %v48
  %v279 = vunpack.c.l.b16 %v49
  %v280 = vunpack.c.h.b16 %v49
  %v281 = vunpack.c.l.b16 %v50
  %v282 = vunpack.c.h.b16 %v50
  %v283 = vunpack.c.l.b16 %v51
  %v284 = vunpack.c.h.b16 %v51
  %v285 = vunpack.c.l.b16 %v52
  %v286 = vunpack.c.h.b16 %v52
  %v287 = vunpack.c.l.b16 %v53
  %v288 = vunpack.c.h.b16 %v53
  %v289 = vunpack.c.l.b16 %v54
  %v290 = vunpack.c.h.b16 %v54
  %v291 = vunpack.c.l.b16 %v55
  %v292 = vunpack.c.h.b16 %v55
  %v293 = vunpack.c.l.b16 %v56
  %v294 = vunpack.c.h.b16 %v56
  %v295 = vunpack.c.l.b16 %v57
  %v296 = vunpack.c.h.b16 %v57
  %v297 = vunpack.c.l.b16 %v58
  %v298 = vunpack.c.h.b16 %v58
  %v299 = vunpack.c.l.b16 %v59
  %v300 = vunpack.c.h.b16 %v59
  %v301 = vunpack.c.l.b16 %v60
  %v302 = vunpack.c.h.b16 %v60
  %v303 = vunpack.c.l.b16 %v61
  %v304 = vunpack.c.h.b16 %v61
  %v305 = vunpack.c.l.b16 %v62
  %v306 = vunpack.c.h.b16 %v62
  %v307 = vunpack.c.l.b16 %v63
  %v308 = vunpack.c.h.b16 %v63
  %v309 = vunpack.c.l.b16 %v64
  %v310 = vunpack.c.h.b16 %v64
  %v311 = vunpack.c.l.b16 %v65
  %v312 = vunpack.c.h.b16 %v65
  %v313 = vunpack.c.l.b16 %v66
  %v314 = vunpack.c.h.b16 %v66
  %v315 = vunpack.c.l.b16 %v67
  %v316 = vunpack.c.h.b16 %v67
  %v317 = vunpack.c.l.b16 %v68
  %v318 = vunpack.c.h.b16 %v68
  %v319 = vunpack.c.l.b16 %v69
  %v320 = vunpack.c.h.b16 %v69
  %v321 = vunpack.c.l.b16 %v70
  %v322 = vunpack.c.h.b16 %v70
  %v323 = vunpack.c.l.b16 %v71
  %v324 = vunpack.c.h.b16 %v71
  %v325 = vunpack.c.l.b16 %v72
  %v326 = vunpack.c.h.b16 %v72
  %v327 = vunpack.c.l.b16 %v73
  %v328 = vunpack.c.h.b16 %v73
  %v329 = vunpack.c.l.b16 %v74
  %v330 = vunpack.c.h.b16 %v74
  %v331 = vpack.c.b16 %v269, %v267
  %v332 = vpack.c.b16 %v270, %v268
  %v333 = vpack.c.b16 %v273, %v271
  %v334 = vpack.c.b16 %v274, %v272
  %v335 = vpack.c.b16 %v277, %v275
  %v336 = vpack.c.b16 %v278, %v276
  %v337 = vpack.c.b16 %v281, %v279
  %v338 = vpack.c.b16 %v282, %v280
  %v339 = vpack.c.b16 %v285, %v283
  %v340 = vpack.c.b16 %v286, %v284
  %v341 = vpack.c.b16 %v289, %v287
  %v342 = vpack.c.b16 %v290, %v288
  %v343 = vpack.c.b16 %v293, %v291
  %v344 = vpack.c.b16 %v294, %v292
  %v345 = vpack.c.b16 %v297, %v295
  %v346 = vpack.c.b16 %v298, %v296
  %v347 = vpack.c.b16 %v301, %v299
  %v348 = vpack.c.b16 %v302, %v300
  %v349 = vpack.c.b16 %v305, %v303
  %v350 = vpack.c.b16 %v306, %v304
  %v351 = vpack.c.b16 %v309, %v307
  %v352 = vpack.c.b16 %v310, %v308
  %v353 = vpack.c.b16 %v313, %v311
  %v354 = vpack.c.b16 %v314, %v312
  %v355 = vpack.c.b16 %v317, %v315
  %v356 = vpack.c.b16 %v318, %v316
  %v357 = vpack.c.b16 %v321, %v319
  %v358 = vpack.c.b16 %v322, %v320
  %v359 = vpack.c.b16 %v325, %v323
  %v360 = vpack.c.b16 %v326, %v324
  %v361 = vpack.c.b16 %v329, %v327
  %v362 = vpack.c.b16 %v330, %v328
  %395 = vmatpush.bf16.msra.mxu0 %v345
  %396 = vmatpush.bf16.msra.mxu0 %v343
  %397 = vmatpush.bf16.msra.mxu0 %v341
  %398 = vmatpush.bf16.msra.mxu0 %v339
  %399 = vmatpush.bf16.msra.mxu0 %v337
  %400 = vmatpush.bf16.msra.mxu0 %v335
  %401 = vmatpush.bf16.msra.mxu0 %v333
  %402 = vmatpush.bf16.msra.mxu0 %v331
  %403 = vmatmul.bf16.gmra.mxu0 %v171
  %v404 = vpop.f32.mrf.mxu0
  %v405 = vadd.f32 0.0, %v404
  %v406 = vpop.f32.mrf.mxu0
  %v407 = vadd.f32 0.0, %v406
  %408 = vmatmul.bf16.gmra.mxu0 %v173
  %v409 = vpop.f32.mrf.mxu0
  %v410 = vadd.f32 0.0, %v409
  %v411 = vpop.f32.mrf.mxu0
  %v412 = vadd.f32 0.0, %v411
  %413 = vmatmul.bf16.gmra.mxu0 %v175
  %v414 = vpop.f32.mrf.mxu0
  %v415 = vadd.f32 0.0, %v414
  %v416 = vpop.f32.mrf.mxu0
  %v417 = vadd.f32 0.0, %v416
  %418 = vmatmul.bf16.gmra.mxu0 %v177
  %v419 = vpop.f32.mrf.mxu0
  %v420 = vadd.f32 0.0, %v419
  %v421 = vpop.f32.mrf.mxu0
  %v422 = vadd.f32 0.0, %v421
  %423 = vmatmul.bf16.gmra.mxu0 %v179
  %v424 = vpop.f32.mrf.mxu0
  %v425 = vadd.f32 0.0, %v424
  %v426 = vpop.f32.mrf.mxu0
  %v427 = vadd.f32 0.0, %v426
  %428 = vmatmul.bf16.gmra.mxu0 %v181
  %v429 = vpop.f32.mrf.mxu0
  %v430 = vadd.f32 0.0, %v429
  %v431 = vpop.f32.mrf.mxu0
  %v432 = vadd.f32 0.0, %v431
  %433 = vmatmul.bf16.gmra.mxu0 %v183
  %v434 = vpop.f32.mrf.mxu0
  %v435 = vadd.f32 0.0, %v434
  %v436 = vpop.f32.mrf.mxu0
  %v437 = vadd.f32 0.0, %v436
  %438 = vmatmul.bf16.gmra.mxu0 %v185
  %v439 = vpop.f32.mrf.mxu0
  %v440 = vadd.f32 0.0, %v439
  %v441 = vpop.f32.mrf.mxu0
  %v442 = vadd.f32 0.0, %v441
  %443 = vmatmul.bf16.gmra.mxu0 %v187
  %v444 = vpop.f32.mrf.mxu0
  %v445 = vadd.f32 0.0, %v444
  %v446 = vpop.f32.mrf.mxu0
  %v447 = vadd.f32 0.0, %v446
  %448 = vmatmul.bf16.gmra.mxu0 %v189
  %v449 = vpop.f32.mrf.mxu0
  %v450 = vadd.f32 0.0, %v449
  %v451 = vpop.f32.mrf.mxu0
  %v452 = vadd.f32 0.0, %v451
  %453 = vmatmul.bf16.gmra.mxu0 %v191
  %v454 = vpop.f32.mrf.mxu0
  %v455 = vadd.f32 0.0, %v454
  %v456 = vpop.f32.mrf.mxu0
  %v457 = vadd.f32 0.0, %v456
  %458 = vmatmul.bf16.gmra.mxu0 %v193
  %v459 = vpop.f32.mrf.mxu0
  %v460 = vadd.f32 0.0, %v459
  %v461 = vpop.f32.mrf.mxu0
  %v462 = vadd.f32 0.0, %v461
  %463 = vmatmul.bf16.gmra.mxu0 %v195
  %v464 = vpop.f32.mrf.mxu0
  %v465 = vadd.f32 0.0, %v464
  %v466 = vpop.f32.mrf.mxu0
  %v467 = vadd.f32 0.0, %v466
  %468 = vmatmul.bf16.gmra.mxu0 %v197
  %v469 = vpop.f32.mrf.mxu0
  %v470 = vadd.f32 0.0, %v469
  %v471 = vpop.f32.mrf.mxu0
  %v472 = vadd.f32 0.0, %v471
  %473 = vmatmul.bf16.gmra.mxu0 %v199
  %v474 = vpop.f32.mrf.mxu0
  %v475 = vadd.f32 0.0, %v474
  %v476 = vpop.f32.mrf.mxu0
  %v477 = vadd.f32 0.0, %v476
  %478 = vmatmul.bf16.gmra.mxu0 %v201
  %v479 = vpop.f32.mrf.mxu0
  %v480 = vadd.f32 0.0, %v479
  %v481 = vpop.f32.mrf.mxu0
  %v482 = vadd.f32 0.0, %v481
  %483 = vdwg.mxu0
  %484 = vmatpush.bf16.msra.mxu0 %v361
  %485 = vmatpush.bf16.msra.mxu0 %v359
  %486 = vmatpush.bf16.msra.mxu0 %v357
  %487 = vmatpush.bf16.msra.mxu0 %v355
  %488 = vmatpush.bf16.msra.mxu0 %v353
  %489 = vmatpush.bf16.msra.mxu0 %v351
  %490 = vmatpush.bf16.msra.mxu0 %v349
  %491 = vmatpush.bf16.msra.mxu0 %v347
  %492 = vmatmul.bf16.gmra.mxu0 %v172
  %v493 = vpop.f32.mrf.mxu0
  %v494 = vadd.f32 %v405, %v493
  %v495 = vpop.f32.mrf.mxu0
  %v496 = vadd.f32 %v407, %v495
  %497 = vmatmul.bf16.gmra.mxu0 %v174
  %v498 = vpop.f32.mrf.mxu0
  %v499 = vadd.f32 %v410, %v498
  %v500 = vpop.f32.mrf.mxu0
  %v501 = vadd.f32 %v412, %v500
  %502 = vmatmul.bf16.gmra.mxu0 %v176
  %v503 = vpop.f32.mrf.mxu0
  %v504 = vadd.f32 %v415, %v503
  %v505 = vpop.f32.mrf.mxu0
  %v506 = vadd.f32 %v417, %v505
  %507 = vmatmul.bf16.gmra.mxu0 %v178
  %v508 = vpop.f32.mrf.mxu0
  %v509 = vadd.f32 %v420, %v508
  %v510 = vpop.f32.mrf.mxu0
  %v511 = vadd.f32 %v422, %v510
  %512 = vmatmul.bf16.gmra.mxu0 %v180
  %v513 = vpop.f32.mrf.mxu0
  %v514 = vadd.f32 %v425, %v513
  %v515 = vpop.f32.mrf.mxu0
  %v516 = vadd.f32 %v427, %v515
  %517 = vmatmul.bf16.gmra.mxu0 %v182
  %v518 = vpop.f32.mrf.mxu0
  %v519 = vadd.f32 %v430, %v518
  %v520 = vpop.f32.mrf.mxu0
  %v521 = vadd.f32 %v432, %v520
  %522 = vmatmul.bf16.gmra.mxu0 %v184
  %v523 = vpop.f32.mrf.mxu0
  %v524 = vadd.f32 %v435, %v523
  %v525 = vpop.f32.mrf.mxu0
  %v526 = vadd.f32 %v437, %v525
  %527 = vmatmul.bf16.gmra.mxu0 %v186
  %v528 = vpop.f32.mrf.mxu0
  %v529 = vadd.f32 %v440, %v528
  %v530 = vpop.f32.mrf.mxu0
  %v531 = vadd.f32 %v442, %v530
  %532 = vmatmul.bf16.gmra.mxu0 %v188
  %v533 = vpop.f32.mrf.mxu0
  %v534 = vadd.f32 %v445, %v533
  %v535 = vpop.f32.mrf.mxu0
  %v536 = vadd.f32 %v447, %v535
  %537 = vmatmul.bf16.gmra.mxu0 %v190
  %v538 = vpop.f32.mrf.mxu0
  %v539 = vadd.f32 %v450, %v538
  %v540 = vpop.f32.mrf.mxu0
  %v541 = vadd.f32 %v452, %v540
  %542 = vmatmul.bf16.gmra.mxu0 %v192
  %v543 = vpop.f32.mrf.mxu0
  %v544 = vadd.f32 %v455, %v543
  %v545 = vpop.f32.mrf.mxu0
  %v546 = vadd.f32 %v457, %v545
  %547 = vmatmul.bf16.gmra.mxu0 %v194
  %v548 = vpop.f32.mrf.mxu0
  %v549 = vadd.f32 %v460, %v548
  %v550 = vpop.f32.mrf.mxu0
  %v551 = vadd.f32 %v462, %v550
  %552 = vmatmul.bf16.gmra.mxu0 %v196
  %v553 = vpop.f32.mrf.mxu0
  %v554 = vadd.f32 %v465, %v553
  %v555 = vpop.f32.mrf.mxu0
  %v556 = vadd.f32 %v467, %v555
  %557 = vmatmul.bf16.gmra.mxu0 %v198
  %v558 = vpop.f32.mrf.mxu0
  %v559 = vadd.f32 %v470, %v558
  %v560 = vpop.f32.mrf.mxu0
  %v561 = vadd.f32 %v472, %v560
  %562 = vmatmul.bf16.gmra.mxu0 %v200
  %v563 = vpop.f32.mrf.mxu0
  %v564 = vadd.f32 %v475, %v563
  %v565 = vpop.f32.mrf.mxu0
  %v566 = vadd.f32 %v477, %v565
  %567 = vmatmul.bf16.gmra.mxu0 %v202
  %v568 = vpop.f32.mrf.mxu0
  %v569 = vadd.f32 %v480, %v568
  %v570 = vpop.f32.mrf.mxu0
  %v571 = vadd.f32 %v482, %v570
  %572 = vdwg.mxu0
  %573 = vmatpush.bf16.msra.mxu0 %v346
  %574 = vmatpush.bf16.msra.mxu0 %v344
  %575 = vmatpush.bf16.msra.mxu0 %v342
  %576 = vmatpush.bf16.msra.mxu0 %v340
  %577 = vmatpush.bf16.msra.mxu0 %v338
  %578 = vmatpush.bf16.msra.mxu0 %v336
  %579 = vmatpush.bf16.msra.mxu0 %v334
  %580 = vmatpush.bf16.msra.mxu0 %v332
  %581 = vmatmul.bf16.gmra.mxu0 %v171
  %v582 = vpop.f32.mrf.mxu0
  %v583 = vadd.f32 0.0, %v582
  %v584 = vpop.f32.mrf.mxu0
  %v585 = vadd.f32 0.0, %v584
  %586 = vmatmul.bf16.gmra.mxu0 %v173
  %v587 = vpop.f32.mrf.mxu0
  %v588 = vadd.f32 0.0, %v587
  %v589 = vpop.f32.mrf.mxu0
  %v590 = vadd.f32 0.0, %v589
  %591 = vmatmul.bf16.gmra.mxu0 %v175
  %v592 = vpop.f32.mrf.mxu0
  %v593 = vadd.f32 0.0, %v592
  %v594 = vpop.f32.mrf.mxu0
  %v595 = vadd.f32 0.0, %v594
  %596 = vmatmul.bf16.gmra.mxu0 %v177
  %v597 = vpop.f32.mrf.mxu0
  %v598 = vadd.f32 0.0, %v597
  %v599 = vpop.f32.mrf.mxu0
  %v600 = vadd.f32 0.0, %v599
  %601 = vmatmul.bf16.gmra.mxu0 %v179
  %v602 = vpop.f32.mrf.mxu0
  %v603 = vadd.f32 0.0, %v602
  %v604 = vpop.f32.mrf.mxu0
  %v605 = vadd.f32 0.0, %v604
  %606 = vmatmul.bf16.gmra.mxu0 %v181
  %v607 = vpop.f32.mrf.mxu0
  %v608 = vadd.f32 0.0, %v607
  %v609 = vpop.f32.mrf.mxu0
  %v610 = vadd.f32 0.0, %v609
  %611 = vmatmul.bf16.gmra.mxu0 %v183
  %v612 = vpop.f32.mrf.mxu0
  %v613 = vadd.f32 0.0, %v612
  %v614 = vpop.f32.mrf.mxu0
  %v615 = vadd.f32 0.0, %v614
  %616 = vmatmul.bf16.gmra.mxu0 %v185
  %v617 = vpop.f32.mrf.mxu0
  %v618 = vadd.f32 0.0, %v617
  %v619 = vpop.f32.mrf.mxu0
  %v620 = vadd.f32 0.0, %v619
  %621 = vmatmul.bf16.gmra.mxu0 %v187
  %v622 = vpop.f32.mrf.mxu0
  %v623 = vadd.f32 0.0, %v622
  %v624 = vpop.f32.mrf.mxu0
  %v625 = vadd.f32 0.0, %v624
  %626 = vmatmul.bf16.gmra.mxu0 %v189
  %v627 = vpop.f32.mrf.mxu0
  %v628 = vadd.f32 0.0, %v627
  %v629 = vpop.f32.mrf.mxu0
  %v630 = vadd.f32 0.0, %v629
  %631 = vmatmul.bf16.gmra.mxu0 %v191
  %v632 = vpop.f32.mrf.mxu0
  %v633 = vadd.f32 0.0, %v632
  %v634 = vpop.f32.mrf.mxu0
  %v635 = vadd.f32 0.0, %v634
  %636 = vmatmul.bf16.gmra.mxu0 %v193
  %v637 = vpop.f32.mrf.mxu0
  %v638 = vadd.f32 0.0, %v637
  %v639 = vpop.f32.mrf.mxu0
  %v640 = vadd.f32 0.0, %v639
  %641 = vmatmul.bf16.gmra.mxu0 %v195
  %v642 = vpop.f32.mrf.mxu0
  %v643 = vadd.f32 0.0, %v642
  %v644 = vpop.f32.mrf.mxu0
  %v645 = vadd.f32 0.0, %v644
  %646 = vmatmul.bf16.gmra.mxu0 %v197
  %v647 = vpop.f32.mrf.mxu0
  %v648 = vadd.f32 0.0, %v647
  %v649 = vpop.f32.mrf.mxu0
  %v650 = vadd.f32 0.0, %v649
  %651 = vmatmul.bf16.gmra.mxu0 %v199
  %v652 = vpop.f32.mrf.mxu0
  %v653 = vadd.f32 0.0, %v652
  %v654 = vpop.f32.mrf.mxu0
  %v655 = vadd.f32 0.0, %v654
  %656 = vmatmul.bf16.gmra.mxu0 %v201
  %v657 = vpop.f32.mrf.mxu0
  %v658 = vadd.f32 0.0, %v657
  %v659 = vpop.f32.mrf.mxu0
  %v660 = vadd.f32 0.0, %v659
  %661 = vdwg.mxu0
  %662 = vmatpush.bf16.msra.mxu0 %v362
  %663 = vmatpush.bf16.msra.mxu0 %v360
  %664 = vmatpush.bf16.msra.mxu0 %v358
  %665 = vmatpush.bf16.msra.mxu0 %v356
  %666 = vmatpush.bf16.msra.mxu0 %v354
  %667 = vmatpush.bf16.msra.mxu0 %v352
  %668 = vmatpush.bf16.msra.mxu0 %v350
  %669 = vmatpush.bf16.msra.mxu0 %v348
  %670 = vmatmul.bf16.gmra.mxu0 %v172
  %v671 = vpop.f32.mrf.mxu0
  %v672 = vadd.f32 %v583, %v671
  %v673 = vpop.f32.mrf.mxu0
  %v674 = vadd.f32 %v585, %v673
  %675 = vmatmul.bf16.gmra.mxu0 %v174
  %v676 = vpop.f32.mrf.mxu0
  %v677 = vadd.f32 %v588, %v676
  %v678 = vpop.f32.mrf.mxu0
  %v679 = vadd.f32 %v590, %v678
  %680 = vmatmul.bf16.gmra.mxu0 %v176
  %v681 = vpop.f32.mrf.mxu0
  %v682 = vadd.f32 %v593, %v681
  %v683 = vpop.f32.mrf.mxu0
  %v684 = vadd.f32 %v595, %v683
  %685 = vmatmul.bf16.gmra.mxu0 %v178
  %v686 = vpop.f32.mrf.mxu0
  %v687 = vadd.f32 %v598, %v686
  %v688 = vpop.f32.mrf.mxu0
  %v689 = vadd.f32 %v600, %v688
  %690 = vmatmul.bf16.gmra.mxu0 %v180
  %v691 = vpop.f32.mrf.mxu0
  %v692 = vadd.f32 %v603, %v691
  %v693 = vpop.f32.mrf.mxu0
  %v694 = vadd.f32 %v605, %v693
  %695 = vmatmul.bf16.gmra.mxu0 %v182
  %v696 = vpop.f32.mrf.mxu0
  %v697 = vadd.f32 %v608, %v696
  %v698 = vpop.f32.mrf.mxu0
  %v699 = vadd.f32 %v610, %v698
  %700 = vmatmul.bf16.gmra.mxu0 %v184
  %v701 = vpop.f32.mrf.mxu0
  %v702 = vadd.f32 %v613, %v701
  %v703 = vpop.f32.mrf.mxu0
  %v704 = vadd.f32 %v615, %v703
  %705 = vmatmul.bf16.gmra.mxu0 %v186
  %v706 = vpop.f32.mrf.mxu0
  %v707 = vadd.f32 %v618, %v706
  %v708 = vpop.f32.mrf.mxu0
  %v709 = vadd.f32 %v620, %v708
  %710 = vmatmul.bf16.gmra.mxu0 %v188
  %v711 = vpop.f32.mrf.mxu0
  %v712 = vadd.f32 %v623, %v711
  %v713 = vpop.f32.mrf.mxu0
  %v714 = vadd.f32 %v625, %v713
  %715 = vmatmul.bf16.gmra.mxu0 %v190
  %v716 = vpop.f32.mrf.mxu0
  %v717 = vadd.f32 %v628, %v716
  %v718 = vpop.f32.mrf.mxu0
  %v719 = vadd.f32 %v630, %v718
  %720 = vmatmul.bf16.gmra.mxu0 %v192
  %v721 = vpop.f32.mrf.mxu0
  %v722 = vadd.f32 %v633, %v721
  %v723 = vpop.f32.mrf.mxu0
  %v724 = vadd.f32 %v635, %v723
  %725 = vmatmul.bf16.gmra.mxu0 %v194
  %v726 = vpop.f32.mrf.mxu0
  %v727 = vadd.f32 %v638, %v726
  %v728 = vpop.f32.mrf.mxu0
  %v729 = vadd.f32 %v640, %v728
  %730 = vmatmul.bf16.gmra.mxu0 %v196
  %v731 = vpop.f32.mrf.mxu0
  %v732 = vadd.f32 %v643, %v731
  %v733 = vpop.f32.mrf.mxu0
  %v734 = vadd.f32 %v645, %v733
  %735 = vmatmul.bf16.gmra.mxu0 %v198
  %v736 = vpop.f32.mrf.mxu0
  %v737 = vadd.f32 %v648, %v736
  %v738 = vpop.f32.mrf.mxu0
  %v739 = vadd.f32 %v650, %v738
  %740 = vmatmul.bf16.gmra.mxu0 %v200
  %v741 = vpop.f32.mrf.mxu0
  %v742 = vadd.f32 %v653, %v741
  %v743 = vpop.f32.mrf.mxu0
  %v744 = vadd.f32 %v655, %v743
  %745 = vmatmul.bf16.gmra.mxu0 %v202
  %v746 = vpop.f32.mrf.mxu0
  %v747 = vadd.f32 %v658, %v746
  %v748 = vpop.f32.mrf.mxu0
  %v749 = vadd.f32 %v660, %v748
  %750 = vdwg.mxu0
  %v751 = vpack.c.bf16 %v672, %v494
  %v752 = vpack.c.bf16 %v674, %v496
  %v753 = vpack.c.bf16 %v677, %v499
  %v754 = vpack.c.bf16 %v679, %v501
  %v755 = vpack.c.bf16 %v682, %v504
  %v756 = vpack.c.bf16 %v684, %v506
  %v757 = vpack.c.bf16 %v687, %v509
  %v758 = vpack.c.bf16 %v689, %v511
  %v759 = vpack.c.bf16 %v692, %v514
  %v760 = vpack.c.bf16 %v694, %v516
  %v761 = vpack.c.bf16 %v697, %v519
  %v762 = vpack.c.bf16 %v699, %v521
  %v763 = vpack.c.bf16 %v702, %v524
  %v764 = vpack.c.bf16 %v704, %v526
  %v765 = vpack.c.bf16 %v707, %v529
  %v766 = vpack.c.bf16 %v709, %v531
  %v767 = vpack.c.bf16 %v712, %v534
  %v768 = vpack.c.bf16 %v714, %v536
  %v769 = vpack.c.bf16 %v717, %v539
  %v770 = vpack.c.bf16 %v719, %v541
  %v771 = vpack.c.bf16 %v722, %v544
  %v772 = vpack.c.bf16 %v724, %v546
  %v773 = vpack.c.bf16 %v727, %v549
  %v774 = vpack.c.bf16 %v729, %v551
  %v775 = vpack.c.bf16 %v732, %v554
  %v776 = vpack.c.bf16 %v734, %v556
  %v777 = vpack.c.bf16 %v737, %v559
  %v778 = vpack.c.bf16 %v739, %v561
  %v779 = vpack.c.bf16 %v742, %v564
  %v780 = vpack.c.bf16 %v744, %v566
  %v781 = vpack.c.bf16 %v747, %v569
  %v782 = vpack.c.bf16 %v749, %v571
  %783 = vst [vmem:[%s2] sm:$0xff] %v751
  %784 = vst [vmem:[%s2 + $0x8] sm:$0xff] %v752
  %785 = vst [vmem:[%s2 + $0x10] sm:$0xff] %v753
  %786 = vst [vmem:[%s2 + $0x18] sm:$0xff] %v754
  %787 = vst [vmem:[%s2 + $0x20] sm:$0xff] %v755
  %788 = vst [vmem:[%s2 + $0x28] sm:$0xff] %v756
  %789 = vst [vmem:[%s2 + $0x30] sm:$0xff] %v757
  %790 = vst [vmem:[%s2 + $0x38] sm:$0xff] %v758
  %791 = vst [vmem:[%s2 + $0x40] sm:$0xff] %v759
  %792 = vst [vmem:[%s2 + $0x48] sm:$0xff] %v760
  %793 = vst [vmem:[%s2 + $0x50] sm:$0xff] %v761
  %794 = vst [vmem:[%s2 + $0x58] sm:$0xff] %v762
  %795 = vst [vmem:[%s2 + $0x60] sm:$0xff] %v763
  %796 = vst [vmem:[%s2 + $0x68] sm:$0xff] %v764
  %797 = vst [vmem:[%s2 + $0x70] sm:$0xff] %v765
  %798 = vst [vmem:[%s2 + $0x78] sm:$0xff] %v766
  %799 = vst [vmem:[%s2 + $0x80] sm:$0xff] %v767
  %800 = vst [vmem:[%s2 + $0x88] sm:$0xff] %v768
  %801 = vst [vmem:[%s2 + $0x90] sm:$0xff] %v769
  %802 = vst [vmem:[%s2 + $0x98] sm:$0xff] %v770
  %803 = vst [vmem:[%s2 + $0xa0] sm:$0xff] %v771
  %804 = vst [vmem:[%s2 + $0xa8] sm:$0xff] %v772
  %805 = vst [vmem:[%s2 + $0xb0] sm:$0xff] %v773
  %806 = vst [vmem:[%s2 + $0xb8] sm:$0xff] %v774
  %807 = vst [vmem:[%s2 + $0xc0] sm:$0xff] %v775
  %808 = vst [vmem:[%s2 + $0xc8] sm:$0xff] %v776
  %809 = vst [vmem:[%s2 + $0xd0] sm:$0xff] %v777
  %810 = vst [vmem:[%s2 + $0xd8] sm:$0xff] %v778
  %811 = vst [vmem:[%s2 + $0xe0] sm:$0xff] %v779
  %812 = vst [vmem:[%s2 + $0xe8] sm:$0xff] %v780
  %813 = vst [vmem:[%s2 + $0xf0] sm:$0xff] %v781
  %814 = vst [vmem:[%s2 + $0xf8] sm:$0xff] %v782
  // Predicated region
  $region10: #{noge_forward.7} parent=0 // pred_check
    _
  $region11: #{noge_forward.7} parent=0 // pred_check_branch
    %816 = sbr.rel (0) target = $region13
  $region12: #{noge_forward.7} parent=0 // pred_region
    _
  $region13: #{noge_forward.7} parent=0 // pred_fallthru
    _
  // Predicated region
  $region14: #{noge_forward.7} parent=0 // pred_check
    _
  $region15: #{noge_forward.7} parent=0 // pred_check_branch
    %818 = sbr.rel (0) target = $region17
  $region16: #{noge_forward.7} parent=0 // pred_region
    _
  $region17: #{noge_forward.7} parent=0 // pred_fallthru
    _

// kernel: noge_forward.11
$region0: #{noge_forward.11}
  #allocation0 [shape = 'u32[]', space=smem, size = 0x4, offset = 0x4, fixed_abs, tag = 'smem constant byte address 0x4 - core index']
  #allocation1 [shape = 'u32[72,128]{1,0:T(1,128)}', space=vmem, size = 0x9000, scoped, tag = 'internal scratch']
  %s0 = inlined_call_operand.vmem [shape: bf16[4,16,128], index: 0, kind: input, shape index: {}]
  %s1 = inlined_call_operand.vmem [shape: bf16[4,16,128], index: 1, kind: input, shape index: {}]
  %s2 = inlined_call_operand.vmem [shape: f32[8,128], index: 2, kind: output, shape index: {}]
  %s3 = sld [smem:[#allocation0]]
  $region22: #{noge_forward.11} parent=0
    _
  %s5 = ssub.s32 1, %s3
  %s6 = scalar_select 0, %s5, %s3
  // Predicated region
  $region2: #{noge_forward.11} parent=0 // pred_check
    _
  $region3: #{noge_forward.11} parent=0 // pred_check_branch
    %8 = sbr.rel (0) target = $region5
  $region4: #{noge_forward.11} parent=0 // pred_region
    _
  $region5: #{noge_forward.11} parent=0 // pred_fallthru
    _
  // Predicated region
  $region6: #{noge_forward.11} parent=0 // pred_check
    _
  $region7: #{noge_forward.11} parent=0 // pred_check_branch
    %10 = sbr.rel (0) target = $region9
  $region8: #{noge_forward.11} parent=0 // pred_region
    _
  $region9: #{noge_forward.11} parent=0 // pred_fallthru
    _
  %p11 = scmp.eq.s32.totalorder 0, 0
  // Predicated region
  $region10: #{noge_forward.11} parent=0 // pred_check
    %p12 = pneg %p11
  $region11: #{noge_forward.11} parent=0 // pred_check_branch
    %14 = sbr.rel (%p12) target = $region13
  $region12: #{noge_forward.11} parent=0 // pred_region
    %15 = vst [vmem:[%s2] sm:$0xff] 0.0
  $region13: #{noge_forward.11} parent=0 // pred_fallthru
    _
  %v16 = vld [vmem:[%s0] sm:$0xf]
  %v17 = vld [vmem:[%s0 + $0x4] sm:$0xf]
  %v18 = vld [vmem:[%s0 + $0x8] sm:$0xf]
  %v19 = vld [vmem:[%s0 + $0xc] sm:$0xf]
  %v20 = vld [vmem:[%s0 + $0x10] sm:$0xf]
  %v21 = vld [vmem:[%s0 + $0x14] sm:$0xf]
  %v22 = vld [vmem:[%s0 + $0x18] sm:$0xf]
  %v23 = vld [vmem:[%s0 + $0x1c] sm:$0xf]
  %v24 = vunpack.c.l.bf16 %v16
  %v25 = vunpack.c.l.bf16 %v17
  %v26 = vunpack.c.l.bf16 %v18
  %v27 = vunpack.c.l.bf16 %v19
  %v28 = vunpack.c.l.bf16 %v20
  %v29 = vunpack.c.l.bf16 %v21
  %v30 = vunpack.c.l.bf16 %v22
  %v31 = vunpack.c.l.bf16 %v23
  %v32 = vld [vmem:[%s1] sm:$0xf]
  %v33 = vld [vmem:[%s1 + $0x4] sm:$0xf]
  %v34 = vld [vmem:[%s1 + $0x8] sm:$0xf]
  %v35 = vld [vmem:[%s1 + $0xc] sm:$0xf]
  %v36 = vld [vmem:[%s1 + $0x10] sm:$0xf]
  %v37 = vld [vmem:[%s1 + $0x14] sm:$0xf]
  %v38 = vld [vmem:[%s1 + $0x18] sm:$0xf]
  %v39 = vld [vmem:[%s1 + $0x1c] sm:$0xf]
  %v40 = vunpack.c.l.bf16 %v32
  %v41 = vunpack.c.l.bf16 %v33
  %v42 = vunpack.c.l.bf16 %v34
  %v43 = vunpack.c.l.bf16 %v35
  %v44 = vunpack.c.l.bf16 %v36
  %v45 = vunpack.c.l.bf16 %v37
  %v46 = vunpack.c.l.bf16 %v38
  %v47 = vunpack.c.l.bf16 %v39
  %v48 = vmul.f32 %v40, %v40
  %v49 = vmul.f32 %v41, %v41
  %v50 = vmul.f32 %v42, %v42
  %v51 = vmul.f32 %v43, %v43
  %v52 = vadd.f32 %v48, %v50
  %v53 = vadd.f32 %v49, %v51
  %v54 = vmul.f32 %v44, %v44
  %v55 = vmul.f32 %v45, %v45
  %v56 = vadd.f32 %v52, %v54
  %v57 = vadd.f32 %v53, %v55
  %v58 = vmul.f32 %v46, %v46
  %v59 = vmul.f32 %v47, %v47
  %v60 = vadd.f32 %v56, %v58
  %v61 = vadd.f32 %v57, %v59
  %vm62 = vcmp.gt.f32.partialorder %v60, 0.0
  %vm63 = vcmp.gt.f32.partialorder %v61, 0.0
  %v64 = vrsqrt.pop %v60
  %v65 = vmul.f32 %v64, %v60
  %v66 = vmul.f32 %v65, %v64
  %v67 = vmul.f32 0.5, %v66
  %v68 = vsub.f32 1.5, %v67
  %v69 = vmul.f32 %v64, %v68
  %vm70 = vweird.f32 %v60
  %vm71 = vweird.f32 %v64
  %vm72 = vmor %vm70, %vm71
  %v73 = vsel %vm72, %v64, %v69
  %v74 = vrsqrt.pop %v61
  %v75 = vmul.f32 %v74, %v61
  %v76 = vmul.f32 %v75, %v74
  %v77 = vmul.f32 0.5, %v76
  %v78 = vsub.f32 1.5, %v77
  %v79 = vmul.f32 %v74, %v78
  %vm80 = vweird.f32 %v61
  %vm81 = vweird.f32 %v74
  %vm82 = vmor %vm80, %vm81
  %v83 = vsel %vm82, %v74, %v79
  %v84 = vsel %vm62, %v73, 0.0
  %v85 = vsel %vm63, %v83, 0.0
  %v86 = vmul.f32 %v40, %v84
  %v87 = vmul.f32 %v41, %v85
  %v88 = vmul.f32 %v42, %v84
  %v89 = vmul.f32 %v43, %v85
  %v90 = vmul.f32 %v44, %v84
  %v91 = vmul.f32 %v45, %v85
  %v92 = vmul.f32 %v46, %v84
  %v93 = vmul.f32 %v47, %v85
  %v94 = vmul.f32 %v24, %v86
  %v95 = vmul.f32 %v25, %v87
  %v96 = vmul.f32 %v26, %v88
  %v97 = vmul.f32 %v27, %v89
  %v98 = vsub.f32 %v94, %v96
  %v99 = vsub.f32 %v95, %v97
  %v100 = vmul.f32 %v28, %v90
  %v101 = vmul.f32 %v29, %v91
  %v102 = vsub.f32 %v98, %v100
  %v103 = vsub.f32 %v99, %v101
  %v104 = vmul.f32 %v30, %v92
  %v105 = vmul.f32 %v31, %v93
  %v106 = vsub.f32 %v102, %v104
  %v107 = vsub.f32 %v103, %v105
  %v108 = vmul.f32 %v26, %v86
  %v109 = vmul.f32 %v27, %v87
  %v110 = vmul.f32 %v24, %v88
  %v111 = vmul.f32 %v25, %v89
  %v112 = vadd.f32 %v108, %v110
  %v113 = vadd.f32 %v109, %v111
  %v114 = vmul.f32 %v30, %v90
  %v115 = vmul.f32 %v31, %v91
  %v116 = vsub.f32 %v112, %v114
  %v117 = vsub.f32 %v113, %v115
  %v118 = vmul.f32 %v28, %v92
  %v119 = vmul.f32 %v29, %v93
  %v120 = vadd.f32 %v116, %v118
  %v121 = vadd.f32 %v117, %v119
  %v122 = vmul.f32 %v28, %v86
  %v123 = vmul.f32 %v29, %v87
  %v124 = vmul.f32 %v30, %v88
  %v125 = vmul.f32 %v31, %v89
  %v126 = vadd.f32 %v122, %v124
  %v127 = vadd.f32 %v123, %v125
  %v128 = vmul.f32 %v24, %v90
  %v129 = vmul.f32 %v25, %v91
  %v130 = vadd.f32 %v126, %v128
  %v131 = vadd.f32 %v127, %v129
  %v132 = vmul.f32 %v26, %v92
  %v133 = vmul.f32 %v27, %v93
  %v134 = vsub.f32 %v130, %v132
  %v135 = vsub.f32 %v131, %v133
  %v136 = vmul.f32 %v30, %v86
  %v137 = vmul.f32 %v31, %v87
  %v138 = vmul.f32 %v28, %v88
  %v139 = vmul.f32 %v29, %v89
  %v140 = vsub.f32 %v136, %v138
  %v141 = vsub.f32 %v137, %v139
  %v142 = vmul.f32 %v26, %v90
  %v143 = vmul.f32 %v27, %v91
  %v144 = vadd.f32 %v140, %v142
  %v145 = vadd.f32 %v141, %v143
  %v146 = vmul.f32 %v24, %v92
  %v147 = vmul.f32 %v25, %v93
  %v148 = vadd.f32 %v144, %v146
  %v149 = vadd.f32 %v145, %v147
  %v150 = vld [vmem:[%s2] sm:$0x1]
  %v151 = vadd.f32 %v106, %v107
  %v152 = vrot.slane %v151, 4
  %v153 = vadd.f32 %v151, %v152
  %v154 = vrot.slane %v153, 2
  %v155 = vadd.f32 %v153, %v154
  %v156 = vrot.slane %v155, 1
  %v157 = vadd.f32 %v155, %v156
  %v158 = vadd.f32 %v150, %v157
  %159 = vst [vmem:[%s2] sm:$0x1] %v158
  %v160 = vld [vmem:[%s2 + $0x4] sm:$0x1]
  %v161 = vmul.f32 %v106, %v106
  %v162 = vmul.f32 %v107, %v107
  %v163 = vadd.f32 %v161, %v162
  %v164 = vrot.slane %v163, 4
  %v165 = vadd.f32 %v163, %v164
  %v166 = vrot.slane %v165, 2
  %v167 = vadd.f32 %v165, %v166
  %v168 = vrot.slane %v167, 1
  %v169 = vadd.f32 %v167, %v168
  %v170 = vadd.f32 %v160, %v169
  %171 = vst [vmem:[%s2 + $0x4] sm:$0x1] %v170
  %v172 = vld [vmem:[%s2 + $0x1] sm:$0x1]
  %v173 = vadd.f32 %v120, %v121
  %v174 = vrot.slane %v173, 4
  %v175 = vadd.f32 %v173, %v174
  %v176 = vrot.slane %v175, 2
  %v177 = vadd.f32 %v175, %v176
  %v178 = vrot.slane %v177, 1
  %v179 = vadd.f32 %v177, %v178
  %v180 = vadd.f32 %v172, %v179
  %181 = vst [vmem:[%s2 + $0x1] sm:$0x1] %v180
  %v182 = vld [vmem:[%s2 + $0x5] sm:$0x1]
  %v183 = vmul.f32 %v120, %v120
  %v184 = vmul.f32 %v121, %v121
  %v185 = vadd.f32 %v183, %v184
  %v186 = vrot.slane %v185, 4
  %v187 = vadd.f32 %v185, %v186
  %v188 = vrot.slane %v187, 2
  %v189 = vadd.f32 %v187, %v188
  %v190 = vrot.slane %v189, 1
  %v191 = vadd.f32 %v189, %v190
  %v192 = vadd.f32 %v182, %v191
  %193 = vst [vmem:[%s2 + $0x5] sm:$0x1] %v192
  %v194 = vld [vmem:[%s2 + $0x2] sm:$0x1]
  %v195 = vadd.f32 %v134, %v135
  %v196 = vrot.slane %v195, 4
  %v197 = vadd.f32 %v195, %v196
  %v198 = vrot.slane %v197, 2
  %v199 = vadd.f32 %v197, %v198
  %v200 = vrot.slane %v199, 1
  %v201 = vadd.f32 %v199, %v200
  %v202 = vadd.f32 %v194, %v201
  %203 = vst [vmem:[%s2 + $0x2] sm:$0x1] %v202
  %v204 = vld [vmem:[%s2 + $0x6] sm:$0x1]
  %v205 = vmul.f32 %v134, %v134
  %v206 = vmul.f32 %v135, %v135
  %v207 = vadd.f32 %v205, %v206
  %v208 = vrot.slane %v207, 4
  %v209 = vadd.f32 %v207, %v208
  %v210 = vrot.slane %v209, 2
  %v211 = vadd.f32 %v209, %v210
  %v212 = vrot.slane %v211, 1
  %v213 = vadd.f32 %v211, %v212
  %v214 = vadd.f32 %v204, %v213
  %215 = vst [vmem:[%s2 + $0x6] sm:$0x1] %v214
  %v216 = vld [vmem:[%s2 + $0x3] sm:$0x1]
  %v217 = vadd.f32 %v148, %v149
  %v218 = vrot.slane %v217, 4
  %v219 = vadd.f32 %v217, %v218
  %v220 = vrot.slane %v219, 2
  %v221 = vadd.f32 %v219, %v220
  %v222 = vrot.slane %v221, 1
  %v223 = vadd.f32 %v221, %v222
  %v224 = vadd.f32 %v216, %v223
  %225 = vst [vmem:[%s2 + $0x3] sm:$0x1] %v224
  %v226 = vld [vmem:[%s2 + $0x7] sm:$0x1]
  %v227 = vmul.f32 %v148, %v148
  %v228 = vmul.f32 %v149, %v149
  %v229 = vadd.f32 %v227, %v228
  %v230 = vrot.slane %v229, 4
  %v231 = vadd.f32 %v229, %v230
  %v232 = vrot.slane %v231, 2
  %v233 = vadd.f32 %v231, %v232
  %v234 = vrot.slane %v233, 1
  %v235 = vadd.f32 %v233, %v234
  %v236 = vadd.f32 %v226, %v235
  %237 = vst [vmem:[%s2 + $0x7] sm:$0x1] %v236
  // Predicated region
  $region14: #{noge_forward.11} parent=0 // pred_check
    _
  $region15: #{noge_forward.11} parent=0 // pred_check_branch
    %239 = sbr.rel (0) target = $region17
  $region16: #{noge_forward.11} parent=0 // pred_region
    _
  $region17: #{noge_forward.11} parent=0 // pred_fallthru
    _
  // Predicated region
  $region18: #{noge_forward.11} parent=0 // pred_check
    _
  $region19: #{noge_forward.11} parent=0 // pred_check_branch
    %241 = sbr.rel (0) target = $region21
  $region20: #{noge_forward.11} parent=0 // pred_region
    _
  $region21: #{noge_forward.11} parent=0 // pred_fallthru
    _

// kernel: noge_forward.12
$region0: #{noge_forward.12}
  #allocation0 [shape = 'u32[]', space=smem, size = 0x4, offset = 0x4, fixed_abs, tag = 'smem constant byte address 0x4 - core index']
  #allocation1 [shape = 'u32[72,128]{1,0:T(1,128)}', space=vmem, size = 0x9000, scoped, tag = 'internal scratch']
  %s0 = inlined_call_operand.vmem [shape: bf16[4,16,128], index: 0, kind: input, shape index: {}]
  %s1 = inlined_call_operand.vmem [shape: bf16[4,16,128], index: 1, kind: input, shape index: {}]
  %s2 = inlined_call_operand.vmem [shape: f32[8,128], index: 2, kind: input, shape index: {}]
  %s3 = inlined_call_operand.vmem [shape: f32[8,128], index: 3, kind: input, shape index: {}]
  %s4 = inlined_call_operand.vmem [shape: bf16[4,16,128], index: 4, kind: output, shape index: {}]
  %s5 = sld [smem:[#allocation0]]
  $region26: #{noge_forward.12} parent=0
    _
  %s7 = ssub.s32 1, %s5
  %s8 = scalar_select 0, %s7, %s5
  // Predicated region
  $region2: #{noge_forward.12} parent=0 // pred_check
    _
  $region3: #{noge_forward.12} parent=0 // pred_check_branch
    %10 = sbr.rel (0) target = $region5
  $region4: #{noge_forward.12} parent=0 // pred_region
    _
  $region5: #{noge_forward.12} parent=0 // pred_fallthru
    _
  // Predicated region
  $region6: #{noge_forward.12} parent=0 // pred_check
    _
  $region7: #{noge_forward.12} parent=0 // pred_check_branch
    %12 = sbr.rel (0) target = $region9
  $region8: #{noge_forward.12} parent=0 // pred_region
    _
  $region9: #{noge_forward.12} parent=0 // pred_fallthru
    _
  // Predicated region
  $region10: #{noge_forward.12} parent=0 // pred_check
    _
  $region11: #{noge_forward.12} parent=0 // pred_check_branch
    %14 = sbr.rel (0) target = $region13
  $region12: #{noge_forward.12} parent=0 // pred_region
    _
  $region13: #{noge_forward.12} parent=0 // pred_fallthru
    _
  // Predicated region
  $region14: #{noge_forward.12} parent=0 // pred_check
    _
  $region15: #{noge_forward.12} parent=0 // pred_check_branch
    %16 = sbr.rel (0) target = $region17
  $region16: #{noge_forward.12} parent=0 // pred_region
    _
  $region17: #{noge_forward.12} parent=0 // pred_fallthru
    _
  %v17 = vld [vmem:[%s0] sm:$0xf]
  %v18 = vld [vmem:[%s0 + $0x4] sm:$0xf]
  %v19 = vld [vmem:[%s0 + $0x8] sm:$0xf]
  %v20 = vld [vmem:[%s0 + $0xc] sm:$0xf]
  %v21 = vld [vmem:[%s0 + $0x10] sm:$0xf]
  %v22 = vld [vmem:[%s0 + $0x14] sm:$0xf]
  %v23 = vld [vmem:[%s0 + $0x18] sm:$0xf]
  %v24 = vld [vmem:[%s0 + $0x1c] sm:$0xf]
  %v25 = vunpack.c.l.bf16 %v17
  %v26 = vunpack.c.l.bf16 %v18
  %v27 = vunpack.c.l.bf16 %v19
  %v28 = vunpack.c.l.bf16 %v20
  %v29 = vunpack.c.l.bf16 %v21
  %v30 = vunpack.c.l.bf16 %v22
  %v31 = vunpack.c.l.bf16 %v23
  %v32 = vunpack.c.l.bf16 %v24
  %v33 = vld [vmem:[%s1] sm:$0xf]
  %v34 = vld [vmem:[%s1 + $0x4] sm:$0xf]
  %v35 = vld [vmem:[%s1 + $0x8] sm:$0xf]
  %v36 = vld [vmem:[%s1 + $0xc] sm:$0xf]
  %v37 = vld [vmem:[%s1 + $0x10] sm:$0xf]
  %v38 = vld [vmem:[%s1 + $0x14] sm:$0xf]
  %v39 = vld [vmem:[%s1 + $0x18] sm:$0xf]
  %v40 = vld [vmem:[%s1 + $0x1c] sm:$0xf]
  %v41 = vunpack.c.l.bf16 %v33
  %v42 = vunpack.c.l.bf16 %v34
  %v43 = vunpack.c.l.bf16 %v35
  %v44 = vunpack.c.l.bf16 %v36
  %v45 = vunpack.c.l.bf16 %v37
  %v46 = vunpack.c.l.bf16 %v38
  %v47 = vunpack.c.l.bf16 %v39
  %v48 = vunpack.c.l.bf16 %v40
  %v49 = vmul.f32 %v41, %v41
  %v50 = vmul.f32 %v42, %v42
  %v51 = vmul.f32 %v43, %v43
  %v52 = vmul.f32 %v44, %v44
  %v53 = vadd.f32 %v49, %v51
  %v54 = vadd.f32 %v50, %v52
  %v55 = vmul.f32 %v45, %v45
  %v56 = vmul.f32 %v46, %v46
  %v57 = vadd.f32 %v53, %v55
  %v58 = vadd.f32 %v54, %v56
  %v59 = vmul.f32 %v47, %v47
  %v60 = vmul.f32 %v48, %v48
  %v61 = vadd.f32 %v57, %v59
  %v62 = vadd.f32 %v58, %v60
  %vm63 = vcmp.gt.f32.partialorder %v61, 0.0
  %vm64 = vcmp.gt.f32.partialorder %v62, 0.0
  %v65 = vrsqrt.pop %v61
  %v66 = vmul.f32 %v65, %v61
  %v67 = vmul.f32 %v66, %v65
  %v68 = vmul.f32 0.5, %v67
  %v69 = vsub.f32 1.5, %v68
  %v70 = vmul.f32 %v65, %v69
  %vm71 = vweird.f32 %v61
  %vm72 = vweird.f32 %v65
  %vm73 = vmor %vm71, %vm72
  %v74 = vsel %vm73, %v65, %v70
  %v75 = vrsqrt.pop %v62
  %v76 = vmul.f32 %v75, %v62
  %v77 = vmul.f32 %v76, %v75
  %v78 = vmul.f32 0.5, %v77
  %v79 = vsub.f32 1.5, %v78
  %v80 = vmul.f32 %v75, %v79
  %vm81 = vweird.f32 %v62
  %vm82 = vweird.f32 %v75
  %vm83 = vmor %vm81, %vm82
  %v84 = vsel %vm83, %v75, %v80
  %v85 = vsel %vm63, %v74, 0.0
  %v86 = vsel %vm64, %v84, 0.0
  %v87 = vmul.f32 %v41, %v85
  %v88 = vmul.f32 %v42, %v86
  %v89 = vmul.f32 %v43, %v85
  %v90 = vmul.f32 %v44, %v86
  %v91 = vmul.f32 %v45, %v85
  %v92 = vmul.f32 %v46, %v86
  %v93 = vmul.f32 %v47, %v85
  %v94 = vmul.f32 %v48, %v86
  %v95 = vmul.f32 %v25, %v87
  %v96 = vmul.f32 %v26, %v88
  %v97 = vmul.f32 %v27, %v89
  %v98 = vmul.f32 %v28, %v90
  %v99 = vsub.f32 %v95, %v97
  %v100 = vsub.f32 %v96, %v98
  %v101 = vmul.f32 %v29, %v91
  %v102 = vmul.f32 %v30, %v92
  %v103 = vsub.f32 %v99, %v101
  %v104 = vsub.f32 %v100, %v102
  %v105 = vmul.f32 %v31, %v93
  %v106 = vmul.f32 %v32, %v94
  %v107 = vsub.f32 %v103, %v105
  %v108 = vsub.f32 %v104, %v106
  %v109 = vmul.f32 %v27, %v87
  %v110 = vmul.f32 %v28, %v88
  %v111 = vmul.f32 %v25, %v89
  %v112 = vmul.f32 %v26, %v90
  %v113 = vadd.f32 %v109, %v111
  %v114 = vadd.f32 %v110, %v112
  %v115 = vmul.f32 %v31, %v91
  %v116 = vmul.f32 %v32, %v92
  %v117 = vsub.f32 %v113, %v115
  %v118 = vsub.f32 %v114, %v116
  %v119 = vmul.f32 %v29, %v93
  %v120 = vmul.f32 %v30, %v94
  %v121 = vadd.f32 %v117, %v119
  %v122 = vadd.f32 %v118, %v120
  %v123 = vmul.f32 %v29, %v87
  %v124 = vmul.f32 %v30, %v88
  %v125 = vmul.f32 %v31, %v89
  %v126 = vmul.f32 %v32, %v90
  %v127 = vadd.f32 %v123, %v125
  %v128 = vadd.f32 %v124, %v126
  %v129 = vmul.f32 %v25, %v91
  %v130 = vmul.f32 %v26, %v92
  %v131 = vadd.f32 %v127, %v129
  %v132 = vadd.f32 %v128, %v130
  %v133 = vmul.f32 %v27, %v93
  %v134 = vmul.f32 %v28, %v94
  %v135 = vsub.f32 %v131, %v133
  %v136 = vsub.f32 %v132, %v134
  %v137 = vmul.f32 %v31, %v87
  %v138 = vmul.f32 %v32, %v88
  %v139 = vmul.f32 %v29, %v89
  %v140 = vmul.f32 %v30, %v90
  %v141 = vsub.f32 %v137, %v139
  %v142 = vsub.f32 %v138, %v140
  %v143 = vmul.f32 %v27, %v91
  %v144 = vmul.f32 %v28, %v92
  %v145 = vadd.f32 %v141, %v143
  %v146 = vadd.f32 %v142, %v144
  %v147 = vmul.f32 %v25, %v93
  %v148 = vmul.f32 %v26, %v94
  %v149 = vadd.f32 %v145, %v147
  %v150 = vadd.f32 %v146, %v148
  %v151 = vld [vmem:[%s2] sm:$0x1]
  %v152 = vmul.f32 %v151, 0.125
  %v153 = vld [vmem:[%s2 + $0x4] sm:$0x1]
  %v154 = vmul.f32 %v153, 0.125
  %v155 = vmul.f32 %v152, %v152
  %v156 = vsub.f32 %v154, %v155
  %v157 = vmax.f32 %v156, 0.0
  %v158 = vperm.slane %v152, 0
  %v159 = vsub.f32 %v107, %v158
  %v160 = vsub.f32 %v108, %v158
  %v161 = vadd.f32 %v157, 1e-05
  %v162 = vrsqrt.pop %v161
  %v163 = vmul.f32 %v162, %v161
  %v164 = vmul.f32 %v163, %v162
  %v165 = vmul.f32 0.5, %v164
  %v166 = vsub.f32 1.5, %v165
  %v167 = vmul.f32 %v162, %v166
  %vm168 = vweird.f32 %v161
  %vm169 = vweird.f32 %v162
  %vm170 = vmor %vm168, %vm169
  %v171 = vsel %vm170, %v162, %v167
  %v172 = vperm.slane %v171, 0
  %v173 = vmul.f32 %v159, %v172
  %v174 = vmul.f32 %v160, %v172
  %v175 = vld [vmem:[%s3] sm:$0x1]
  %v176 = vperm.slane %v175, 0
  %v177 = vmul.f32 %v173, %v176
  %v178 = vmul.f32 %v174, %v176
  %v179 = vld [vmem:[%s3 + $0x4] sm:$0x1]
  %v180 = vperm.slane %v179, 0
  %v181 = vadd.f32 %v177, %v180
  %v182 = vadd.f32 %v178, %v180
  %v183 = vpack.c.bf16 %v181, %v181
  %v184 = vpack.c.bf16 %v182, %v182
  %185 = vst [vmem:[%s4] sm:$0xf] %v183
  %186 = vst [vmem:[%s4 + $0x4] sm:$0xf] %v184
  %v187 = vld [vmem:[%s2 + $0x1] sm:$0x1]
  %v188 = vmul.f32 %v187, 0.125
  %v189 = vld [vmem:[%s2 + $0x5] sm:$0x1]
  %v190 = vmul.f32 %v189, 0.125
  %v191 = vmul.f32 %v188, %v188
  %v192 = vsub.f32 %v190, %v191
  %v193 = vmax.f32 %v192, 0.0
  %v194 = vperm.slane %v188, 0
  %v195 = vsub.f32 %v121, %v194
  %v196 = vsub.f32 %v122, %v194
  %v197 = vadd.f32 %v193, 1e-05
  %v198 = vrsqrt.pop %v197
  %v199 = vmul.f32 %v198, %v197
  %v200 = vmul.f32 %v199, %v198
  %v201 = vmul.f32 0.5, %v200
  %v202 = vsub.f32 1.5, %v201
  %v203 = vmul.f32 %v198, %v202
  %vm204 = vweird.f32 %v197
  %vm205 = vweird.f32 %v198
  %vm206 = vmor %vm204, %vm205
  %v207 = vsel %vm206, %v198, %v203
  %v208 = vperm.slane %v207, 0
  %v209 = vmul.f32 %v195, %v208
  %v210 = vmul.f32 %v196, %v208
  %v211 = vld [vmem:[%s3 + $0x1] sm:$0x1]
  %v212 = vperm.slane %v211, 0
  %v213 = vmul.f32 %v209, %v212
  %v214 = vmul.f32 %v210, %v212
  %v215 = vld [vmem:[%s3 + $0x5] sm:$0x1]
  %v216 = vperm.slane %v215, 0
  %v217 = vadd.f32 %v213, %v216
  %v218 = vadd.f32 %v214, %v216
  %v219 = vpack.c.bf16 %v217, %v217
  %v220 = vpack.c.bf16 %v218, %v218
  %s221 = scalar_lea.vmem %s4, 8
  %222 = vst [vmem:[%s221] sm:$0xf] %v219
  %223 = vst [vmem:[%s221 + $0x4] sm:$0xf] %v220
  %v224 = vld [vmem:[%s2 + $0x2] sm:$0x1]
  %v225 = vmul.f32 %v224, 0.125
  %v226 = vld [vmem:[%s2 + $0x6] sm:$0x1]
  %v227 = vmul.f32 %v226, 0.125
  %v228 = vmul.f32 %v225, %v225
  %v229 = vsub.f32 %v227, %v228
  %v230 = vmax.f32 %v229, 0.0
  %v231 = vperm.slane %v225, 0
  %v232 = vsub.f32 %v135, %v231
  %v233 = vsub.f32 %v136, %v231
  %v234 = vadd.f32 %v230, 1e-05
  %v235 = vrsqrt.pop %v234
  %v236 = vmul.f32 %v235, %v234
  %v237 = vmul.f32 %v236, %v235
  %v238 = vmul.f32 0.5, %v237
  %v239 = vsub.f32 1.5, %v238
  %v240 = vmul.f32 %v235, %v239
  %vm241 = vweird.f32 %v234
  %vm242 = vweird.f32 %v235
  %vm243 = vmor %vm241, %vm242
  %v244 = vsel %vm243, %v235, %v240
  %v245 = vperm.slane %v244, 0
  %v246 = vmul.f32 %v232, %v245
  %v247 = vmul.f32 %v233, %v245
  %v248 = vld [vmem:[%s3 + $0x2] sm:$0x1]
  %v249 = vperm.slane %v248, 0
  %v250 = vmul.f32 %v246, %v249
  %v251 = vmul.f32 %v247, %v249
  %v252 = vld [vmem:[%s3 + $0x6] sm:$0x1]
  %v253 = vperm.slane %v252, 0
  %v254 = vadd.f32 %v250, %v253
  %v255 = vadd.f32 %v251, %v253
  %v256 = vpack.c.bf16 %v254, %v254
  %v257 = vpack.c.bf16 %v255, %v255
  %s258 = scalar_lea.vmem %s4, 16
  %259 = vst [vmem:[%s258] sm:$0xf] %v256
  %260 = vst [vmem:[%s258 + $0x4] sm:$0xf] %v257
  %v261 = vld [vmem:[%s2 + $0x3] sm:$0x1]
  %v262 = vmul.f32 %v261, 0.125
  %v263 = vld [vmem:[%s2 + $0x7] sm:$0x1]
  %v264 = vmul.f32 %v263, 0.125
  %v265 = vmul.f32 %v262, %v262
  %v266 = vsub.f32 %v264, %v265
  %v267 = vmax.f32 %v266, 0.0
  %v268 = vperm.slane %v262, 0
  %v269 = vsub.f32 %v149, %v268
  %v270 = vsub.f32 %v150, %v268
  %v271 = vadd.f32 %v267, 1e-05
  %v272 = vrsqrt.pop %v271
  %v273 = vmul.f32 %v272, %v271
  %v274 = vmul.f32 %v273, %v272
  %v275 = vmul.f32 0.5, %v274
  %v276 = vsub.f32 1.5, %v275
  %v277 = vmul.f32 %v272, %v276
  %vm278 = vweird.f32 %v271
  %vm279 = vweird.f32 %v272
  %vm280 = vmor %vm278, %vm279
  %v281 = vsel %vm280, %v272, %v277
  %v282 = vperm.slane %v281, 0
  %v283 = vmul.f32 %v269, %v282
  %v284 = vmul.f32 %v270, %v282
  %v285 = vld [vmem:[%s3 + $0x3] sm:$0x1]
  %v286 = vperm.slane %v285, 0
  %v287 = vmul.f32 %v283, %v286
  %v288 = vmul.f32 %v284, %v286
  %v289 = vld [vmem:[%s3 + $0x7] sm:$0x1]
  %v290 = vperm.slane %v289, 0
  %v291 = vadd.f32 %v287, %v290
  %v292 = vadd.f32 %v288, %v290
  %v293 = vpack.c.bf16 %v291, %v291
  %v294 = vpack.c.bf16 %v292, %v292
  %s295 = scalar_lea.vmem %s4, 24
  %296 = vst [vmem:[%s295] sm:$0xf] %v293
  %297 = vst [vmem:[%s295 + $0x4] sm:$0xf] %v294
  // Predicated region
  $region18: #{noge_forward.12} parent=0 // pred_check
    _
  $region19: #{noge_forward.12} parent=0 // pred_check_branch
    %299 = sbr.rel (0) target = $region21
  $region20: #{noge_forward.12} parent=0 // pred_region
    _
  $region21: #{noge_forward.12} parent=0 // pred_fallthru
    _
  // Predicated region
  $region22: #{noge_forward.12} parent=0 // pred_check
    _
  $region23: #{noge_forward.12} parent=0 // pred_check_branch
    %301 = sbr.rel (0) target = $region25
  $region24: #{noge_forward.12} parent=0 // pred_region
    _
  $region25: #{noge_forward.12} parent=0 // pred_fallthru
    _

// kernel: noge_forward.13
$region0: #{noge_forward.13}
  #allocation0 [shape = 'u32[]', space=smem, size = 0x4, offset = 0x4, fixed_abs, tag = 'smem constant byte address 0x4 - core index']
  #allocation1 [shape = 'u32[72,128]{1,0:T(1,128)}', space=vmem, size = 0x9000, scoped, tag = 'internal scratch']
  %s0 = inlined_call_operand.vmem [shape: bf16[16,256], index: 0, kind: input, shape index: {}]
  %s1 = inlined_call_operand.vmem [shape: bf16[256,256], index: 1, kind: input, shape index: {}]
  %s2 = inlined_call_operand.vmem [shape: f32[16,256], index: 2, kind: output, shape index: {}]
  %s3 = sld [smem:[#allocation0]]
  $region18: #{noge_forward.13} parent=0
    _
  %s5 = ssub.s32 1, %s3
  %s6 = scalar_select 0, %s5, %s3
  // Predicated region
  $region2: #{noge_forward.13} parent=0 // pred_check
    _
  $region3: #{noge_forward.13} parent=0 // pred_check_branch
    %8 = sbr.rel (0) target = $region5
  $region4: #{noge_forward.13} parent=0 // pred_region
    _
  $region5: #{noge_forward.13} parent=0 // pred_fallthru
    _
  // Predicated region
  $region6: #{noge_forward.13} parent=0 // pred_check
    _
  $region7: #{noge_forward.13} parent=0 // pred_check_branch
    %10 = sbr.rel (0) target = $region9
  $region8: #{noge_forward.13} parent=0 // pred_region
    _
  $region9: #{noge_forward.13} parent=0 // pred_fallthru
    _
  %v11 = vld [vmem:[%s0] sm:$0xff]
  %v12 = vld [vmem:[%s0 + $0x8] sm:$0xff]
  %v13 = vld [vmem:[%s1] sm:$0xff]
  %v14 = vld [vmem:[%s1 + $0x8] sm:$0xff]
  %v15 = vld [vmem:[%s1 + $0x10] sm:$0xff]
  %v16 = vld [vmem:[%s1 + $0x18] sm:$0xff]
  %v17 = vld [vmem:[%s1 + $0x20] sm:$0xff]
  %v18 = vld [vmem:[%s1 + $0x28] sm:$0xff]
  %v19 = vld [vmem:[%s1 + $0x30] sm:$0xff]
  %v20 = vld [vmem:[%s1 + $0x38] sm:$0xff]
  %v21 = vld [vmem:[%s1 + $0x40] sm:$0xff]
  %v22 = vld [vmem:[%s1 + $0x48] sm:$0xff]
  %v23 = vld [vmem:[%s1 + $0x50] sm:$0xff]
  %v24 = vld [vmem:[%s1 + $0x58] sm:$0xff]
  %v25 = vld [vmem:[%s1 + $0x60] sm:$0xff]
  %v26 = vld [vmem:[%s1 + $0x68] sm:$0xff]
  %v27 = vld [vmem:[%s1 + $0x70] sm:$0xff]
  %v28 = vld [vmem:[%s1 + $0x78] sm:$0xff]
  %v29 = vld [vmem:[%s1 + $0x80] sm:$0xff]
  %v30 = vld [vmem:[%s1 + $0x88] sm:$0xff]
  %v31 = vld [vmem:[%s1 + $0x90] sm:$0xff]
  %v32 = vld [vmem:[%s1 + $0x98] sm:$0xff]
  %v33 = vld [vmem:[%s1 + $0xa0] sm:$0xff]
  %v34 = vld [vmem:[%s1 + $0xa8] sm:$0xff]
  %v35 = vld [vmem:[%s1 + $0xb0] sm:$0xff]
  %v36 = vld [vmem:[%s1 + $0xb8] sm:$0xff]
  %v37 = vld [vmem:[%s1 + $0xc0] sm:$0xff]
  %v38 = vld [vmem:[%s1 + $0xc8] sm:$0xff]
  %v39 = vld [vmem:[%s1 + $0xd0] sm:$0xff]
  %v40 = vld [vmem:[%s1 + $0xd8] sm:$0xff]
  %v41 = vld [vmem:[%s1 + $0xe0] sm:$0xff]
  %v42 = vld [vmem:[%s1 + $0xe8] sm:$0xff]
  %v43 = vld [vmem:[%s1 + $0xf0] sm:$0xff]
  %v44 = vld [vmem:[%s1 + $0xf8] sm:$0xff]
  %v47 = vunpack.c.l.b16 %v11
  %v48 = vunpack.c.h.b16 %v11
  %v49 = vunpack.c.l.b16 %v12
  %v50 = vunpack.c.h.b16 %v12
  %v51 = vpack.c.b16 %v49, %v47
  %v52 = vpack.c.b16 %v50, %v48
  %v87 = vunpack.c.l.b16 %v13
  %v88 = vunpack.c.h.b16 %v13
  %v89 = vunpack.c.l.b16 %v14
  %v90 = vunpack.c.h.b16 %v14
  %v91 = vunpack.c.l.b16 %v15
  %v92 = vunpack.c.h.b16 %v15
  %v93 = vunpack.c.l.b16 %v16
  %v94 = vunpack.c.h.b16 %v16
  %v95 = vunpack.c.l.b16 %v17
  %v96 = vunpack.c.h.b16 %v17
  %v97 = vunpack.c.l.b16 %v18
  %v98 = vunpack.c.h.b16 %v18
  %v99 = vunpack.c.l.b16 %v19
  %v100 = vunpack.c.h.b16 %v19
  %v101 = vunpack.c.l.b16 %v20
  %v102 = vunpack.c.h.b16 %v20
  %v103 = vunpack.c.l.b16 %v21
  %v104 = vunpack.c.h.b16 %v21
  %v105 = vunpack.c.l.b16 %v22
  %v106 = vunpack.c.h.b16 %v22
  %v107 = vunpack.c.l.b16 %v23
  %v108 = vunpack.c.h.b16 %v23
  %v109 = vunpack.c.l.b16 %v24
  %v110 = vunpack.c.h.b16 %v24
  %v111 = vunpack.c.l.b16 %v25
  %v112 = vunpack.c.h.b16 %v25
  %v113 = vunpack.c.l.b16 %v26
  %v114 = vunpack.c.h.b16 %v26
  %v115 = vunpack.c.l.b16 %v27
  %v116 = vunpack.c.h.b16 %v27
  %v117 = vunpack.c.l.b16 %v28
  %v118 = vunpack.c.h.b16 %v28
  %v119 = vunpack.c.l.b16 %v29
  %v120 = vunpack.c.h.b16 %v29
  %v121 = vunpack.c.l.b16 %v30
  %v122 = vunpack.c.h.b16 %v30
  %v123 = vunpack.c.l.b16 %v31
  %v124 = vunpack.c.h.b16 %v31
  %v125 = vunpack.c.l.b16 %v32
  %v126 = vunpack.c.h.b16 %v32
  %v127 = vunpack.c.l.b16 %v33
  %v128 = vunpack.c.h.b16 %v33
  %v129 = vunpack.c.l.b16 %v34
  %v130 = vunpack.c.h.b16 %v34
  %v131 = vunpack.c.l.b16 %v35
  %v132 = vunpack.c.h.b16 %v35
  %v133 = vunpack.c.l.b16 %v36
  %v134 = vunpack.c.h.b16 %v36
  %v135 = vunpack.c.l.b16 %v37
  %v136 = vunpack.c.h.b16 %v37
  %v137 = vunpack.c.l.b16 %v38
  %v138 = vunpack.c.h.b16 %v38
  %v139 = vunpack.c.l.b16 %v39
  %v140 = vunpack.c.h.b16 %v39
  %v141 = vunpack.c.l.b16 %v40
  %v142 = vunpack.c.h.b16 %v40
  %v143 = vunpack.c.l.b16 %v41
  %v144 = vunpack.c.h.b16 %v41
  %v145 = vunpack.c.l.b16 %v42
  %v146 = vunpack.c.h.b16 %v42
  %v147 = vunpack.c.l.b16 %v43
  %v148 = vunpack.c.h.b16 %v43
  %v149 = vunpack.c.l.b16 %v44
  %v150 = vunpack.c.h.b16 %v44
  %v151 = vpack.c.b16 %v89, %v87
  %v152 = vpack.c.b16 %v90, %v88
  %v153 = vpack.c.b16 %v93, %v91
  %v154 = vpack.c.b16 %v94, %v92
  %v155 = vpack.c.b16 %v97, %v95
  %v156 = vpack.c.b16 %v98, %v96
  %v157 = vpack.c.b16 %v101, %v99
  %v158 = vpack.c.b16 %v102, %v100
  %v159 = vpack.c.b16 %v105, %v103
  %v160 = vpack.c.b16 %v106, %v104
  %v161 = vpack.c.b16 %v109, %v107
  %v162 = vpack.c.b16 %v110, %v108
  %v163 = vpack.c.b16 %v113, %v111
  %v164 = vpack.c.b16 %v114, %v112
  %v165 = vpack.c.b16 %v117, %v115
  %v166 = vpack.c.b16 %v118, %v116
  %v167 = vpack.c.b16 %v121, %v119
  %v168 = vpack.c.b16 %v122, %v120
  %v169 = vpack.c.b16 %v125, %v123
  %v170 = vpack.c.b16 %v126, %v124
  %v171 = vpack.c.b16 %v129, %v127
  %v172 = vpack.c.b16 %v130, %v128
  %v173 = vpack.c.b16 %v133, %v131
  %v174 = vpack.c.b16 %v134, %v132
  %v175 = vpack.c.b16 %v137, %v135
  %v176 = vpack.c.b16 %v138, %v136
  %v177 = vpack.c.b16 %v141, %v139
  %v178 = vpack.c.b16 %v142, %v140
  %v179 = vpack.c.b16 %v145, %v143
  %v180 = vpack.c.b16 %v146, %v144
  %v181 = vpack.c.b16 %v149, %v147
  %v182 = vpack.c.b16 %v150, %v148
  %215 = vmatpush.bf16.xpose.msra.mxu0 %v165
  %216 = vmatpush.bf16.xpose.msra.mxu0 %v163
  %217 = vmatpush.bf16.xpose.msra.mxu0 %v161
  %218 = vmatpush.bf16.xpose.msra.mxu0 %v159
  %219 = vmatpush.bf16.xpose.msra.mxu0 %v157
  %220 = vmatpush.bf16.xpose.msra.mxu0 %v155
  %221 = vmatpush.bf16.xpose.msra.mxu0 %v153
  %222 = vmatpush.bf16.xpose.msra.mxu0 %v151
  %223 = vmatmul.bf16.gmra.mxu0 %v51
  %v224 = vpop.f32.mrf.mxu0
  %v225 = vadd.f32 0.0, %v224
  %v226 = vpop.f32.mrf.mxu0
  %v227 = vadd.f32 0.0, %v226
  %228 = vdwg.mxu0
  %229 = vmatpush.bf16.xpose.msra.mxu0 %v166
  %230 = vmatpush.bf16.xpose.msra.mxu0 %v164
  %231 = vmatpush.bf16.xpose.msra.mxu0 %v162
  %232 = vmatpush.bf16.xpose.msra.mxu0 %v160
  %233 = vmatpush.bf16.xpose.msra.mxu0 %v158
  %234 = vmatpush.bf16.xpose.msra.mxu0 %v156
  %235 = vmatpush.bf16.xpose.msra.mxu0 %v154
  %236 = vmatpush.bf16.xpose.msra.mxu0 %v152
  %237 = vmatmul.bf16.gmra.mxu0 %v52
  %v238 = vpop.f32.mrf.mxu0
  %v239 = vadd.f32 %v225, %v238
  %v240 = vpop.f32.mrf.mxu0
  %v241 = vadd.f32 %v227, %v240
  %242 = vdwg.mxu0
  %243 = vmatpush.bf16.xpose.msra.mxu0 %v181
  %244 = vmatpush.bf16.xpose.msra.mxu0 %v179
  %245 = vmatpush.bf16.xpose.msra.mxu0 %v177
  %246 = vmatpush.bf16.xpose.msra.mxu0 %v175
  %247 = vmatpush.bf16.xpose.msra.mxu0 %v173
  %248 = vmatpush.bf16.xpose.msra.mxu0 %v171
  %249 = vmatpush.bf16.xpose.msra.mxu0 %v169
  %250 = vmatpush.bf16.xpose.msra.mxu0 %v167
  %251 = vmatmul.bf16.gmra.mxu0 %v51
  %v252 = vpop.f32.mrf.mxu0
  %v253 = vadd.f32 0.0, %v252
  %v254 = vpop.f32.mrf.mxu0
  %v255 = vadd.f32 0.0, %v254
  %256 = vdwg.mxu0
  %257 = vmatpush.bf16.xpose.msra.mxu0 %v182
  %258 = vmatpush.bf16.xpose.msra.mxu0 %v180
  %259 = vmatpush.bf16.xpose.msra.mxu0 %v178
  %260 = vmatpush.bf16.xpose.msra.mxu0 %v176
  %261 = vmatpush.bf16.xpose.msra.mxu0 %v174
  %262 = vmatpush.bf16.xpose.msra.mxu0 %v172
  %263 = vmatpush.bf16.xpose.msra.mxu0 %v170
  %264 = vmatpush.bf16.xpose.msra.mxu0 %v168
  %265 = vmatmul.bf16.gmra.mxu0 %v52
  %v266 = vpop.f32.mrf.mxu0
  %v267 = vadd.f32 %v253, %v266
  %v268 = vpop.f32.mrf.mxu0
  %v269 = vadd.f32 %v255, %v268
  %270 = vdwg.mxu0
  %v271 = vxor.u32 %v239, 2147483648
  %v272 = vxor.u32 %v267, 2147483648
  %v273 = vxor.u32 %v241, 2147483648
  %v274 = vxor.u32 %v269, 2147483648
  %v275 = vmul.f32 %v271, 1.442695
  %v276 = vpow.pop %v275
  %v277 = vmul.f32 %v272, 1.442695
  %v278 = vpow.pop %v277
  %v279 = vmul.f32 %v273, 1.442695
  %v280 = vpow.pop %v279
  %v281 = vmul.f32 %v274, 1.442695
  %v282 = vpow.pop %v281
  %v283 = vadd.f32 %v276, 1.0
  %v284 = vadd.f32 %v278, 1.0
  %v285 = vadd.f32 %v280, 1.0
  %v286 = vadd.f32 %v282, 1.0
  %v287 = vrcp.pop %v283
  %v288 = vmul.f32 %v283, %v287
  %v289 = vsub.f32 1.0, %v288
  %v290 = vmul.f32 %v287, %v289
  %v291 = vadd.f32 %v287, %v290
  %vm292 = vweird.f32 %v283
  %vm293 = vweird.f32 %v287
  %vm294 = vmor %vm292, %vm293
  %v295 = vsel %vm294, %v287, %v291
  %v296 = vand.u32 2147483647, %v283
  %vm297 = vcmp.eq.f32.partialorder %v296, 8.507059e+37
  %v298 = vand.u32 %v283, 2147483648
  %v299 = vor.u32 1.1754944e-38, %v298
  %v300 = vsel %vm297, %v299, %v295
  %v301 = vmul.f32 1.0, %v300
  %v302 = vrcp.pop %v284
  %v303 = vmul.f32 %v284, %v302
  %v304 = vsub.f32 1.0, %v303
  %v305 = vmul.f32 %v302, %v304
  %v306 = vadd.f32 %v302, %v305
  %vm307 = vweird.f32 %v284
  %vm308 = vweird.f32 %v302
  %vm309 = vmor %vm307, %vm308
  %v310 = vsel %vm309, %v302, %v306
  %v311 = vand.u32 2147483647, %v284
  %vm312 = vcmp.eq.f32.partialorder %v311, 8.507059e+37
  %v313 = vand.u32 %v284, 2147483648
  %v314 = vor.u32 1.1754944e-38, %v313
  %v315 = vsel %vm312, %v314, %v310
  %v316 = vmul.f32 1.0, %v315
  %v317 = vrcp.pop %v285
  %v318 = vmul.f32 %v285, %v317
  %v319 = vsub.f32 1.0, %v318
  %v320 = vmul.f32 %v317, %v319
  %v321 = vadd.f32 %v317, %v320
  %vm322 = vweird.f32 %v285
  %vm323 = vweird.f32 %v317
  %vm324 = vmor %vm322, %vm323
  %v325 = vsel %vm324, %v317, %v321
  %v326 = vand.u32 2147483647, %v285
  %vm327 = vcmp.eq.f32.partialorder %v326, 8.507059e+37
  %v328 = vand.u32 %v285, 2147483648
  %v329 = vor.u32 1.1754944e-38, %v328
  %v330 = vsel %vm327, %v329, %v325
  %v331 = vmul.f32 1.0, %v330
  %v332 = vrcp.pop %v286
  %v333 = vmul.f32 %v286, %v332
  %v334 = vsub.f32 1.0, %v333
  %v335 = vmul.f32 %v332, %v334
  %v336 = vadd.f32 %v332, %v335
  %vm337 = vweird.f32 %v286
  %vm338 = vweird.f32 %v332
  %vm339 = vmor %vm337, %vm338
  %v340 = vsel %vm339, %v332, %v336
  %v341 = vand.u32 2147483647, %v286
  %vm342 = vcmp.eq.f32.partialorder %v341, 8.507059e+37
  %v343 = vand.u32 %v286, 2147483648
  %v344 = vor.u32 1.1754944e-38, %v343
  %v345 = vsel %vm342, %v344, %v340
  %v346 = vmul.f32 1.0, %v345
  %347 = vst [vmem:[%s2] sm:$0xff] %v301
  %348 = vst [vmem:[%s2 + $0x8] sm:$0xff] %v316
  %349 = vst [vmem:[%s2 + $0x10] sm:$0xff] %v331
  %350 = vst [vmem:[%s2 + $0x18] sm:$0xff] %v346
  // Predicated region
  $region10: #{noge_forward.13} parent=0 // pred_check
    _
  $region11: #{noge_forward.13} parent=0 // pred_check_branch
    %352 = sbr.rel (0) target = $region13
  $region12: #{noge_forward.13} parent=0 // pred_region
    _
  $region13: #{noge_forward.13} parent=0 // pred_fallthru
    _
  // Predicated region
  $region14: #{noge_forward.13} parent=0 // pred_check
    _
  $region15: #{noge_forward.13} parent=0 // pred_check_branch
    %354 = sbr.rel (0) target = $region17
  $region16: #{noge_forward.13} parent=0 // pred_region
    _
  $region17: #{noge_forward.13} parent=0 // pred_fallthru
    _

</llo_original>
